<compile_context>
chip_gen: v5e
topology: v5e:2x2
jax: 0.10.0
libtpu: 0.0.40
codegen_flags: <defaults>
</compile_context>

<pallas_src>
import functools

import jax
import jax.numpy as jnp
from jax import lax
from jax.experimental import pallas as pl
from jax.experimental.pallas import tpu as pltpu


# --------------------------------------------------------------------------------------
# Helpers
# --------------------------------------------------------------------------------------
def _gelu_tanh(x):
    c = 0.7978845608028654  # sqrt(2/pi)
    return 0.5 * x * (1.0 + jnp.tanh(c * (x + 0.044715 * x * x * x)))


def _bn_fold(bn, eps=1e-5):
    gamma, beta, mean, var = bn
    scale = gamma / jnp.sqrt(var + eps)
    shift = beta - mean * scale
    return scale, shift


def _pad_last(a, target, value=0.0):
    c = a.shape[-1]
    if c >= target:
        return a
    widths = [(0, 0)] * (a.ndim - 1) + [(0, target - c)]
    return jnp.pad(a, widths, constant_values=value)


def _pad_axis(a, axis, target, value=0.0):
    c = a.shape[axis]
    if c >= target:
        return a
    widths = [(0, 0)] * a.ndim
    widths[axis] = (0, target - c)
    return jnp.pad(a, widths, constant_values=value)


# --------------------------------------------------------------------------------------
# One-time weight preparation (hoisted out of the forward path).
# --------------------------------------------------------------------------------------
def prepare_params(p, eps=1e-5):
    """Fold / pad / permute all weights once. Returns (prepped dict, n_head_cols)."""
    CP = 128
    Cin = p["w_b1"].shape[1]
    d_model = p["w_b1"].shape[2]
    bf16 = jnp.bfloat16

    # --- LITE block: fuse the 3 branches into one 7-tap conv (out channels concatenated,
    #     smaller kernels centered inside the 7 taps), pad out channels to 128.
    w_lite = jnp.zeros((7, Cin, CP), jnp.float32)
    w_lite = w_lite.at[2:5, :, 0 * d_model:1 * d_model].set(p["w_b1"])   # k=3
    w_lite = w_lite.at[1:6, :, 1 * d_model:2 * d_model].set(p["w_b2"])   # k=5
    w_lite = w_lite.at[0:7, :, 2 * d_model:3 * d_model].set(p["w_b3"])   # k=7
    b_lite = _pad_last(jnp.concatenate([p["b_b1"], p["b_b2"], p["b_b3"]]), CP)
    sl, tl = _bn_fold(p["bn_lite"], eps)
    sl = _pad_last(sl, CP, 1.0)
    tl = _pad_last(tl, CP)

    # --- conv1: pad in 96->128 and out 64->128, fold bias into BN shift.
    s1, t1 = _bn_fold(p["bn1"], eps)
    t1 = t1 + p["b_c1"] * s1
    w_c1 = _pad_axis(_pad_axis(p["w_c1"], 1, CP), 2, CP)
    s1 = _pad_last(s1, CP, 1.0)
    t1 = _pad_last(t1, CP)

    # --- conv2: pad in 64->128 (out already 128), fold bias into BN shift.
    s2, t2 = _bn_fold(p["bn2"], eps)
    t2 = t2 + p["b_c2"] * s2
    w_c2 = _pad_axis(p["w_c2"], 1, CP)

    # --- fc1: fold the PyTorch channel-major flatten permutation into the rows of w_fc1
    #     so the kernel consumes the conv output in (l, c) order; fold the BN scale into
    #     the columns and bias+shift into a single additive vector.
    K1, H1 = p["w_fc1"].shape          # (128 * reduced_size, 256), torch row order c*R + l
    R = K1 // CP
    sf1, tf1 = _bn_fold(p["bn_fc1"], eps)
    w_fc1 = p["w_fc1"].reshape(CP, R, H1).transpose(1, 0, 2).reshape(K1, H1) * sf1
    t_fc1 = p["b_fc1"] * sf1 + tf1

    # --- fc2: fold BN scale into columns, bias+shift into additive vector.
    sf2, tf2 = _bn_fold(p["bn_fc2"], eps)
    w_fc2 = p["w_fc2"] * sf2
    t_fc2 = p["b_fc2"] * sf2 + tf2

    # --- heads: fuse the 5 linear heads into one matmul, pad output columns to 128 so the
    #     final store / activation masking is lane-dense.
    wh = jnp.concatenate([p["w_check"], p["w_type"], p["w_size_cls"],
                          p["w_type_size"], p["w_size_reg"]], axis=1)
    bh = jnp.concatenate([p["b_check"], p["b_type"], p["b_size_cls"],
                          p["b_type_size"], p["b_size_reg"]])
    n_heads = wh.shape[1]
    wh = _pad_last(wh, CP)
    bh = _pad_last(bh, CP)

    pp = {
        "w_lite": w_lite.astype(bf16), "b_lite": b_lite.reshape(1, CP),
        "s_lite": sl.reshape(1, CP), "t_lite": tl.reshape(1, CP),
        "w_c1": w_c1.astype(bf16), "s_c1": s1.reshape(1, CP), "t_c1": t1.reshape(1, CP),
        "w_c2": w_c2.astype(bf16), "s_c2": s2.reshape(1, CP), "t_c2": t2.reshape(1, CP),
        "w_fc1": w_fc1.astype(bf16), "t_fc1": t_fc1.reshape(1, -1),
        "w_fc2": w_fc2.astype(bf16), "t_fc2": t_fc2.reshape(1, -1),
        "w_heads": wh.astype(bf16), "b_heads": bh.reshape(1, CP),
    }
    return pp, n_heads


# --------------------------------------------------------------------------------------
# Fused conv chain kernel: LITE(7-tap) -> BN  ->  conv1 -> BN -> relu -> pool
#                                         ->  conv2 -> BN -> relu -> pool
# All intermediates stay in VMEM scratch; halo padding is done in-kernel.
#   x_ref   : (bt, L, Cin)  f32
#   weights : bf16, affine vectors f32 (bias for conv1/conv2 pre-folded into t*)
#   o_ref   : (bt, L//4, 128) bf16
# --------------------------------------------------------------------------------------
def _conv_chain_kernel(x_ref, wl_ref, bl_ref, sl_ref, tl_ref,
                       w1_ref, s1_ref, t1_ref,
                       w2_ref, s2_ref, t2_ref,
                       o_ref, xpad, h1pad, h2pad, tmp, *, bt):
    L = x_ref.shape[1]
    Cin = x_ref.shape[2]
    L2, L4 = L // 2, L // 4
    CP = w1_ref.shape[2]
    bf16 = jnp.bfloat16

    # Zero the halo rows of the padded scratch buffers. Scratch is uninitialized; redo it
    # every grid step (cheap) so it is correct even when the grid is split across
    # TensorCores (program_id==0 may never run on this core).
    xpad[0:3, :] = jnp.zeros((3, Cin), xpad.dtype)
    xpad[3 + L:6 + L, :] = jnp.zeros((3, Cin), xpad.dtype)
    h1pad[0:1, :] = jnp.zeros((1, CP), h1pad.dtype)
    h1pad[1 + L:2 + L, :] = jnp.zeros((1, CP), h1pad.dtype)
    h2pad[0:1, :] = jnp.zeros((1, CP), h2pad.dtype)
    h2pad[1 + L2:2 + L2, :] = jnp.zeros((1, CP), h2pad.dtype)

    for bi in range(bt):  # static unroll over the batch sub-tile (bt is small)
        # ---- LITE block: 3 branches fused into one 7-tap conv, bias, relu, folded BN ----
        xpad[3:3 + L, :] = x_ref[bi]
        acc = jnp.dot(xpad[0:L, :].astype(bf16), wl_ref[0],
                      preferred_element_type=jnp.float32)
        for j in range(1, 7):
            acc = acc + jnp.dot(xpad[j:j + L, :].astype(bf16), wl_ref[j],
                                preferred_element_type=jnp.float32)
        acc = jnp.maximum(acc + bl_ref[...], 0.0)      # relu before BN (per module)
        acc = acc * sl_ref[...] + tl_ref[...]
        h1pad[1:1 + L, :] = acc                        # channels 96..127 are exactly zero

        # ---- conv1 -> BN -> relu -> maxpool(2)  (bias folded into t1) ----
        acc = jnp.dot(h1pad[0:L, :].astype(bf16), w1_ref[0],
                      preferred_element_type=jnp.float32)
        for j in range(1, 3):
            acc = acc + jnp.dot(h1pad[j:j + L, :].astype(bf16), w1_ref[j],
                                preferred_element_type=jnp.float32)
        acc = jnp.maximum(acc * s1_ref[...] + t1_ref[...], 0.0)
        tmp[0:L, :] = acc
        pooled = jnp.maximum(tmp[pl.ds(0, L2, stride=2), :],
                             tmp[pl.ds(1, L2, stride=2), :])
        h2pad[1:1 + L2, :] = pooled                    # channels 64..127 are zero

        # ---- conv2 -> BN -> relu -> maxpool(2)  (bias folded into t2) ----
        acc = jnp.dot(h2pad[0:L2, :].astype(bf16), w2_ref[0],
                      preferred_element_type=jnp.float32)
        for j in range(1, 3):
            acc = acc + jnp.dot(h2pad[j:j + L2, :].astype(bf16), w2_ref[j],
                                preferred_element_type=jnp.float32)
        acc = jnp.maximum(acc * s2_ref[...] + t2_ref[...], 0.0)
        tmp[0:L2, :] = acc
        pooled = jnp.maximum(tmp[pl.ds(0, L4, stride=2), :],
                             tmp[pl.ds(1, L4, stride=2), :])
        o_ref[bi, :, :] = pooled.astype(o_ref.dtype)


def conv_chain(x_cl, pp, *, bt=1):
    """x_cl: (B, L, Cin) channels-last f32. Returns (B, L//4, 128) bf16.

    bt = batch elements per grid step. bt=1 keeps the grid length = B so v7x can shard the
    batch across its 2 TensorCores; raise bt on v6e for large B to amortize per-step
    overhead (keep B // bt a multiple of 2 on v7x, and re-check per-step VMEM there).
    """
    B, L, Cin = x_cl.shape
    assert L % 4 == 0 and B % bt == 0
    CP = 128
    L4 = L // 4
    kern = functools.partial(_conv_chain_kernel, bt=bt)

    return pl.pallas_call(
        kern,
        out_shape=jax.ShapeDtypeStruct((B, L4, CP), jnp.bfloat16),
        grid=(B // bt,),
        in_specs=[
            pl.BlockSpec((bt, L, Cin), lambda b: (b, 0, 0)),   # x (per-batch slab)
            pl.BlockSpec((7, Cin, CP), lambda b: (0, 0, 0)),   # fused LITE weights
            pl.BlockSpec((1, CP), lambda b: (0, 0)),           # LITE bias
            pl.BlockSpec((1, CP), lambda b: (0, 0)),           # LITE BN scale
            pl.BlockSpec((1, CP), lambda b: (0, 0)),           # LITE BN shift
            pl.BlockSpec((3, CP, CP), lambda b: (0, 0, 0)),    # conv1 weights
            pl.BlockSpec((1, CP), lambda b: (0, 0)),           # conv1 BN scale
            pl.BlockSpec((1, CP), lambda b: (0, 0)),           # conv1 BN shift (+bias)
            pl.BlockSpec((3, CP, CP), lambda b: (0, 0, 0)),    # conv2 weights
            pl.BlockSpec((1, CP), lambda b: (0, 0)),           # conv2 BN scale
            pl.BlockSpec((1, CP), lambda b: (0, 0)),           # conv2 BN shift (+bias)
        ],
        out_specs=pl.BlockSpec((bt, L4, CP), lambda b: (b, 0, 0)),
        scratch_shapes=[
            pltpu.VMEM((L + 6, Cin), jnp.float32),       # padded input (halo = 3)
            pltpu.VMEM((L + 2, CP), jnp.float32),        # padded LITE output (halo = 1)
            pltpu.VMEM((L // 2 + 2, CP), jnp.float32),   # padded conv1+pool output
            pltpu.VMEM((L, CP), jnp.float32),            # pre-pool staging buffer
        ],
        compiler_params=pltpu.CompilerParams(
            dimension_semantics=("parallel",)),          # v7x: shard batch over 2 TCs
    )(x_cl, pp["w_lite"], pp["b_lite"], pp["s_lite"], pp["t_lite"],
      pp["w_c1"], pp["s_c1"], pp["t_c1"],
      pp["w_c2"], pp["s_c2"], pp["t_c2"])


# --------------------------------------------------------------------------------------
# Fused FC stack + heads kernel:
#   gelu(x @ W1' + t1) -> gelu(h @ W2' + t2) -> h @ Wheads + bheads   (BN folded into W/t)
#   column 0 -> sigmoid, column (n_heads-1) -> softplus; output padded to 128 lanes.
# --------------------------------------------------------------------------------------
def _fc_head_kernel(x_ref, w1_ref, t1_ref, w2_ref, t2_ref, wh_ref, bh_ref, o_ref,
                    *, last_col):
    bf16 = jnp.bfloat16
    h = jnp.dot(x_ref[...], w1_ref[...], preferred_element_type=jnp.float32)
    h = _gelu_tanh(h + t1_ref[...])            # dropout: identity at inference
    h = jnp.dot(h.astype(bf16), w2_ref[...], preferred_element_type=jnp.float32)
    h = _gelu_tanh(h + t2_ref[...])
    y = jnp.dot(h.astype(bf16), wh_ref[...], preferred_element_type=jnp.float32)
    y = y + bh_ref[...]

    # Per-column activations: col 0 is fc_check (sigmoid), col last_col is fc_size_reg
    # (softplus, width 1 per the module); everything else (incl. padding) is identity.
    col = lax.broadcasted_iota(jnp.int32, y.shape, 1)
    sig = 1.0 / (1.0 + jnp.exp(-y))
    sp = jnp.maximum(y, 0.0) + jnp.log(1.0 + jnp.exp(-jnp.abs(y)))
    y = jnp.where(col == 0, sig, jnp.where(col == last_col, sp, y))
    o_ref[...] = y


def fc_heads(hf, pp, *, last_col):
    B = hf.shape[0]
    CP = 128
    vmem = pltpu.MemorySpace.VMEM
    kern = functools.partial(_fc_head_kernel, last_col=last_col)
    return pl.pallas_call(
        kern,
        out_shape=jax.ShapeDtypeStruct((B, CP), jnp.float32),
        in_specs=[pl.BlockSpec(memory_space=vmem)] * 7,
        out_specs=pl.BlockSpec(memory_space=vmem),
    )(hf, pp["w_fc1"], pp["t_fc1"], pp["w_fc2"], pp["t_fc2"],
      pp["w_heads"], pp["b_heads"])


# --------------------------------------------------------------------------------------
# Full forward pass (2 pallas_calls total)
# --------------------------------------------------------------------------------------
@functools.partial(jax.jit, static_argnames=("head_dims",))
def lite_cnn1d_forward(x_ncl, pp, *, head_dims):
    """x_ncl: (B, Cin, L) PyTorch layout. Returns the 5-tuple of head outputs."""
    B, _, L = x_ncl.shape
    x_cl = jnp.transpose(x_ncl, (0, 2, 1))        # (B, L, Cin), tiny

    h = conv_chain(x_cl, pp)                      # (B, L//4, 128) bf16
    hf = h.reshape(B, -1)                         # (l, c)-order flatten (perm folded in W1)

    heads = fc_heads(hf, pp, last_col=sum(head_dims) - 1)   # (B, 128) f32, lane-dense

    outs, idx = [], 0
    for w in head_dims:
        outs.append(heads[:, idx:idx + w])
        idx += w
    return tuple(outs)


# --------------------------------------------------------------------------------------
# Pure-JAX reference (mirrors the PyTorch module structure; f32, no fusion / padding)
# --------------------------------------------------------------------------------------
def lite_cnn1d_reference(x_ncl, p):
    x = jnp.transpose(x_ncl, (0, 2, 1))  # (B, L, Cin)

    def conv(x, w, b):
        return lax.conv_general_dilated(
            x, w, window_strides=(1,), padding="SAME",
            dimension_numbers=("NWC", "WIO", "NWC"),
            precision=lax.Precision.HIGHEST) + b

    def pool2(h):
        B, L, C = h.shape
        return h.reshape(B, L // 2, 2, C).max(axis=2)

    x1 = jax.nn.relu(conv(x, p["w_b1"], p["b_b1"]))
    x2 = jax.nn.relu(conv(x, p["w_b2"], p["b_b2"]))
    x3 = jax.nn.relu(conv(x, p["w_b3"], p["b_b3"]))
    h = jnp.concatenate([x1, x2, x3], axis=-1)
    s, t = _bn_fold(p["bn_lite"])
    h = h * s + t

    s, t = _bn_fold(p["bn1"])
    h = pool2(jax.nn.relu(conv(h, p["w_c1"], p["b_c1"]) * s + t))
    s, t = _bn_fold(p["bn2"])
    h = pool2(jax.nn.relu(conv(h, p["w_c2"], p["b_c2"]) * s + t))

    hf = jnp.transpose(h, (0, 2, 1)).reshape(h.shape[0], -1)

    s, t = _bn_fold(p["bn_fc1"])
    h = _gelu_tanh((jnp.dot(hf, p["w_fc1"], precision=lax.Precision.HIGHEST)
                    + p["b_fc1"]) * s + t)
    s, t = _bn_fold(p["bn_fc2"])
    h = _gelu_tanh((jnp.dot(h, p["w_fc2"], precision=lax.Precision.HIGHEST)
                    + p["b_fc2"]) * s + t)

    def lin(h, w, b):
        return jnp.dot(h, w, precision=lax.Precision.HIGHEST) + b

    o_check = 1.0 / (1.0 + jnp.exp(-lin(h, p["w_check"], p["b_check"])))
    o_type = lin(h, p["w_type"], p["b_type"])
    o_size_cls = lin(h, p["w_size_cls"], p["b_size_cls"])
    o_type_size = lin(h, p["w_type_size"], p["b_type_size"])
    z = lin(h, p["w_size_reg"], p["b_size_reg"])
    o_size_reg = jnp.maximum(z, 0.0) + jnp.log(1.0 + jnp.exp(-jnp.abs(z)))
    return o_check, o_type, o_size_cls, o_type_size, o_size_reg


# --------------------------------------------------------------------------------------
# Test
# --------------------------------------------------------------------------------------
if __name__ == "__main__":
    B, Cin, L = 2, 3, 64          # small input_size (must be divisible by 4)
    d_model = 32
    n_type, n_size, n_type_size = 3, 7, 13
    F1 = 128 * (L // 4)

    keys = iter(jax.random.split(jax.random.PRNGKey(0), 24))

    def xavier(shape, fan_in, fan_out):
        bound = (6.0 / (fan_in + fan_out)) ** 0.5
        return jax.random.uniform(next(keys), shape, minval=-bound, maxval=bound,
                                  dtype=jnp.float32)

    def bn_params(c):
        k1, k2, k3, k4 = jax.random.split(next(keys), 4)
        gamma = jax.random.uniform(k1, (c,), minval=0.8, maxval=1.2, dtype=jnp.float32)
        beta = 0.1 * jax.random.normal(k2, (c,), dtype=jnp.float32)
        mean = 0.1 * jax.random.normal(k3, (c,), dtype=jnp.float32)
        var = jax.random.uniform(k4, (c,), minval=0.5, maxval=1.5, dtype=jnp.float32)
        return (gamma, beta, mean, var)

    x = jax.random.normal(next(keys), (B, Cin, L), dtype=jnp.float32)

    p = {
        # LITE branches, conv weights in (tap, in, out) layout; biases zero (xavier init)
        "w_b1": xavier((3, Cin, d_model), Cin * 3, d_model * 3),
        "b_b1": jnp.zeros((d_model,), jnp.float32),
        "w_b2": xavier((5, Cin, d_model), Cin * 5, d_model * 5),
        "b_b2": jnp.zeros((d_model,), jnp.float32),
        "w_b3": xavier((7, Cin, d_model), Cin * 7, d_model * 7),
        "b_b3": jnp.zeros((d_model,), jnp.float32),
        "bn_lite": bn_params(3 * d_model),
        "w_c1": xavier((3, 3 * d_model, 64), 3 * d_model * 3, 64 * 3),
        "b_c1": jnp.zeros((64,), jnp.float32),
        "bn1": bn_params(64),
        "w_c2": xavier((3, 64, 128), 64 * 3, 128 * 3),
        "b_c2": jnp.zeros((128,), jnp.float32),
        "bn2": bn_params(128),
        # FC weights stored (in, out), pre-transposed vs torch
        "w_fc1": xavier((F1, 256), F1, 256),
        "b_fc1": jnp.zeros((256,), jnp.float32),
        "bn_fc1": bn_params(256),
        "w_fc2": xavier((256, 128), 256, 128),
        "b_fc2": jnp.zeros((128,), jnp.float32),
        "bn_fc2": bn_params(128),
        "w_check": xavier((128, 1), 128, 1),
        "b_check": jnp.zeros((1,), jnp.float32),
        "w_type": xavier((128, n_type), 128, n_type),
        "b_type": jnp.zeros((n_type,), jnp.float32),
        "w_size_cls": xavier((128, n_size), 128, n_size),
        "b_size_cls": jnp.zeros((n_size,), jnp.float32),
        "w_type_size": xavier((128, n_type_size), 128, n_type_size),
        "b_type_size": jnp.zeros((n_type_size,), jnp.float32),
        "w_size_reg": xavier((128, 1), 128, 1),
        "b_size_reg": jnp.zeros((1,), jnp.float32),
    }

    # One-time weight preparation (hoisted out of the forward path).
    pp, n_heads = prepare_params(p)
    pp = jax.tree_util.tree_map(jax.block_until_ready, pp)

    head_dims = (1, n_type, n_size, n_type_size, 1)
    assert sum(head_dims) == n_heads

    outs = lite_cnn1d_forward(x, pp, head_dims=head_dims)
    outs = [jax.block_until_ready(o) for o in outs]

    refs = lite_cnn1d_reference(x, p)
    expected_shapes = [(B, 1), (B, n_type), (B, n_size), (B, n_type_size), (B, 1)]
    names = ["check", "type", "size_cls", "type_size", "size_reg"]
    # Tolerance accounts for bf16 matmul inputs (f32 accumulation) vs the f32 reference.
    for name, shp, o, r in zip(names, expected_shapes, outs, refs):
        assert o.shape == shp, f"shape mismatch for {name}: {o.shape} vs {shp}"
        assert jnp.allclose(o, r, atol=3e-2, rtol=3e-2), f"value mismatch in {name}"

    print("KERNEL_OK")
</pallas_src>

<mosaic_0001>
module attributes {stable_mosaic.version = 11 : i64} {
  func.func @_conv_chain_kernel(%arg0: i32, %arg1: memref<1x64x3xf32, #tpu.memory_space<vmem>>, %arg2: memref<7x3x128xbf16, #tpu.memory_space<vmem>>, %arg3: memref<1x128xf32, #tpu.memory_space<vmem>>, %arg4: memref<1x128xf32, #tpu.memory_space<vmem>>, %arg5: memref<1x128xf32, #tpu.memory_space<vmem>>, %arg6: memref<3x128x128xbf16, #tpu.memory_space<vmem>>, %arg7: memref<1x128xf32, #tpu.memory_space<vmem>>, %arg8: memref<1x128xf32, #tpu.memory_space<vmem>>, %arg9: memref<3x128x128xbf16, #tpu.memory_space<vmem>>, %arg10: memref<1x128xf32, #tpu.memory_space<vmem>>, %arg11: memref<1x128xf32, #tpu.memory_space<vmem>>, %arg12: memref<1x16x128xbf16, #tpu.memory_space<vmem>>, %arg13: memref<70x3xf32, #tpu.memory_space<vmem>>, %arg14: memref<66x128xf32, #tpu.memory_space<vmem>>, %arg15: memref<34x128xf32, #tpu.memory_space<vmem>>, %arg16: memref<64x128xf32, #tpu.memory_space<vmem>>) attributes {dimension_semantics = [#tpu.dimension_semantics<parallel>], iteration_bounds = array<i64: 2>, scalar_prefetch = 0 : i64, scratch_operands = 4 : i64, tpu.core_type = #tpu.core_type<tc>, window_params = [{transform_indices = @transform_0, window_bounds = array<i64: 1, 64, 3>}, {pipeline_mode = #tpu.pipeline_mode<synchronous>, transform_indices = @transform_1, window_bounds = array<i64: 7, 3, 128>}, {pipeline_mode = #tpu.pipeline_mode<synchronous>, transform_indices = @transform_2, window_bounds = array<i64: 1, 128>}, {pipeline_mode = #tpu.pipeline_mode<synchronous>, transform_indices = @transform_3, window_bounds = array<i64: 1, 128>}, {pipeline_mode = #tpu.pipeline_mode<synchronous>, transform_indices = @transform_4, window_bounds = array<i64: 1, 128>}, {pipeline_mode = #tpu.pipeline_mode<synchronous>, transform_indices = @transform_5, window_bounds = array<i64: 3, 128, 128>}, {pipeline_mode = #tpu.pipeline_mode<synchronous>, transform_indices = @transform_6, window_bounds = array<i64: 1, 128>}, {pipeline_mode = #tpu.pipeline_mode<synchronous>, transform_indices = @transform_7, window_bounds = array<i64: 1, 128>}, {pipeline_mode = #tpu.pipeline_mode<synchronous>, transform_indices = @transform_8, window_bounds = array<i64: 3, 128, 128>}, {pipeline_mode = #tpu.pipeline_mode<synchronous>, transform_indices = @transform_9, window_bounds = array<i64: 1, 128>}, {pipeline_mode = #tpu.pipeline_mode<synchronous>, transform_indices = @transform_10, window_bounds = array<i64: 1, 128>}, {transform_indices = @transform_11, window_bounds = array<i64: 1, 16, 128>}]} {
    %cst = arith.constant 0.000000e+00 : f32
    %0 = vector.broadcast %cst : f32 to vector<3x3xf32>
    %c0 = arith.constant 0 : index
    %c0_0 = arith.constant 0 : index
    %1 = vector.load %arg13[%c0, %c0_0] : memref<70x3xf32, #tpu.memory_space<vmem>>, vector<3x3xf32>
    tpu.vector_store %arg13[%c0, %c0_0], %0 {strides = array<i32>} : memref<70x3xf32, #tpu.memory_space<vmem>>, vector<3x3xf32>,
    %cst_1 = arith.constant 0.000000e+00 : f32
    %2 = vector.broadcast %cst_1 : f32 to vector<3x3xf32>
    %c67 = arith.constant 67 : index
    %c0_2 = arith.constant 0 : index
    %3 = vector.load %arg13[%c67, %c0_2] : memref<70x3xf32, #tpu.memory_space<vmem>>, vector<3x3xf32>
    tpu.vector_store %arg13[%c67, %c0_2], %2 {strides = array<i32>} : memref<70x3xf32, #tpu.memory_space<vmem>>, vector<3x3xf32>,
    %cst_3 = arith.constant 0.000000e+00 : f32
    %4 = vector.broadcast %cst_3 : f32 to vector<1x128xf32>
    %c0_4 = arith.constant 0 : index
    %c0_5 = arith.constant 0 : index
    %5 = vector.load %arg14[%c0_4, %c0_5] : memref<66x128xf32, #tpu.memory_space<vmem>>, vector<1x128xf32>
    tpu.vector_store %arg14[%c0_4, %c0_5], %4 {strides = array<i32>} : memref<66x128xf32, #tpu.memory_space<vmem>>, vector<1x128xf32>,
    %cst_6 = arith.constant 0.000000e+00 : f32
    %6 = vector.broadcast %cst_6 : f32 to vector<1x128xf32>
    %c65 = arith.constant 65 : index
    %c0_7 = arith.constant 0 : index
    %7 = vector.load %arg14[%c65, %c0_7] : memref<66x128xf32, #tpu.memory_space<vmem>>, vector<1x128xf32>
    tpu.vector_store %arg14[%c65, %c0_7], %6 {strides = array<i32>} : memref<66x128xf32, #tpu.memory_space<vmem>>, vector<1x128xf32>,
    %cst_8 = arith.constant 0.000000e+00 : f32
    %8 = vector.broadcast %cst_8 : f32 to vector<1x128xf32>
    %c0_9 = arith.constant 0 : index
    %c0_10 = arith.constant 0 : index
    %9 = vector.load %arg15[%c0_9, %c0_10] : memref<34x128xf32, #tpu.memory_space<vmem>>, vector<1x128xf32>
    tpu.vector_store %arg15[%c0_9, %c0_10], %8 {strides = array<i32>} : memref<34x128xf32, #tpu.memory_space<vmem>>, vector<1x128xf32>,
    %cst_11 = arith.constant 0.000000e+00 : f32
    %10 = vector.broadcast %cst_11 : f32 to vector<1x128xf32>
    %c33 = arith.constant 33 : index
    %c0_12 = arith.constant 0 : index
    %11 = vector.load %arg15[%c33, %c0_12] : memref<34x128xf32, #tpu.memory_space<vmem>>, vector<1x128xf32>
    tpu.vector_store %arg15[%c33, %c0_12], %10 {strides = array<i32>} : memref<34x128xf32, #tpu.memory_space<vmem>>, vector<1x128xf32>,
    %c0_13 = arith.constant 0 : index
    %c0_14 = arith.constant 0 : index
    %c0_15 = arith.constant 0 : index
    %12 = vector.load %arg1[%c0_13, %c0_14, %c0_15] : memref<1x64x3xf32, #tpu.memory_space<vmem>>, vector<1x64x3xf32>
    %13 = vector.shape_cast %12 : vector<1x64x3xf32> to vector<64x3xf32>
    %c3 = arith.constant 3 : index
    %c0_16 = arith.constant 0 : index
    %14 = vector.load %arg13[%c3, %c0_16] : memref<70x3xf32, #tpu.memory_space<vmem>>, vector<64x3xf32>
    tpu.vector_store %arg13[%c3, %c0_16], %13 {strides = array<i32>} : memref<70x3xf32, #tpu.memory_space<vmem>>, vector<64x3xf32>,
    %c0_17 = arith.constant 0 : index
    %c0_18 = arith.constant 0 : index
    %15 = vector.load %arg13[%c0_17, %c0_18] : memref<70x3xf32, #tpu.memory_space<vmem>>, vector<64x3xf32>
    %16 = arith.truncf %15 : vector<64x3xf32> to vector<64x3xbf16>
    %c0_19 = arith.constant 0 : index
    %c0_20 = arith.constant 0 : index
    %c0_21 = arith.constant 0 : index
    %17 = vector.load %arg2[%c0_19, %c0_20, %c0_21] : memref<7x3x128xbf16, #tpu.memory_space<vmem>>, vector<1x3x128xbf16>
    %18 = vector.shape_cast %17 : vector<1x3x128xbf16> to vector<3x128xbf16>
    %cst_22 = arith.constant dense<0.000000e+00> : vector<64x128xf32>
    %19 = tpu.matmul %16, %18, %cst_22 {dimension_numbers = #tpu.dot_dimension_numbers<[1], [0], [0], [1], [0, 0, 1, 1], [], []>} : vector<64x3xbf16>, vector<3x128xbf16>, vector<64x128xf32> -> vector<64x128xf32>
    %c1 = arith.constant 1 : index
    %c0_23 = arith.constant 0 : index
    %20 = vector.load %arg13[%c1, %c0_23] : memref<70x3xf32, #tpu.memory_space<vmem>>, vector<64x3xf32>
    %21 = arith.truncf %20 : vector<64x3xf32> to vector<64x3xbf16>
    %c1_24 = arith.constant 1 : index
    %c0_25 = arith.constant 0 : index
    %c0_26 = arith.constant 0 : index
    %22 = vector.load %arg2[%c1_24, %c0_25, %c0_26] : memref<7x3x128xbf16, #tpu.memory_space<vmem>>, vector<1x3x128xbf16>
    %23 = vector.shape_cast %22 : vector<1x3x128xbf16> to vector<3x128xbf16>
    %cst_27 = arith.constant dense<0.000000e+00> : vector<64x128xf32>
    %24 = tpu.matmul %21, %23, %cst_27 {dimension_numbers = #tpu.dot_dimension_numbers<[1], [0], [0], [1], [0, 0, 1, 1], [], []>} : vector<64x3xbf16>, vector<3x128xbf16>, vector<64x128xf32> -> vector<64x128xf32>
    %25 = arith.addf %19, %24 : vector<64x128xf32>
    %c2 = arith.constant 2 : index
    %c0_28 = arith.constant 0 : index
    %26 = vector.load %arg13[%c2, %c0_28] : memref<70x3xf32, #tpu.memory_space<vmem>>, vector<64x3xf32>
    %27 = arith.truncf %26 : vector<64x3xf32> to vector<64x3xbf16>
    %c2_29 = arith.constant 2 : index
    %c0_30 = arith.constant 0 : index
    %c0_31 = arith.constant 0 : index
    %28 = vector.load %arg2[%c2_29, %c0_30, %c0_31] : memref<7x3x128xbf16, #tpu.memory_space<vmem>>, vector<1x3x128xbf16>
    %29 = vector.shape_cast %28 : vector<1x3x128xbf16> to vector<3x128xbf16>
    %cst_32 = arith.constant dense<0.000000e+00> : vector<64x128xf32>
    %30 = tpu.matmul %27, %29, %cst_32 {dimension_numbers = #tpu.dot_dimension_numbers<[1], [0], [0], [1], [0, 0, 1, 1], [], []>} : vector<64x3xbf16>, vector<3x128xbf16>, vector<64x128xf32> -> vector<64x128xf32>
    %31 = arith.addf %25, %30 : vector<64x128xf32>
    %c3_33 = arith.constant 3 : index
    %c0_34 = arith.constant 0 : index
    %32 = vector.load %arg13[%c3_33, %c0_34] : memref<70x3xf32, #tpu.memory_space<vmem>>, vector<64x3xf32>
    %33 = arith.truncf %32 : vector<64x3xf32> to vector<64x3xbf16>
    %c3_35 = arith.constant 3 : index
    %c0_36 = arith.constant 0 : index
    %c0_37 = arith.constant 0 : index
    %34 = vector.load %arg2[%c3_35, %c0_36, %c0_37] : memref<7x3x128xbf16, #tpu.memory_space<vmem>>, vector<1x3x128xbf16>
    %35 = vector.shape_cast %34 : vector<1x3x128xbf16> to vector<3x128xbf16>
    %cst_38 = arith.constant dense<0.000000e+00> : vector<64x128xf32>
    %36 = tpu.matmul %33, %35, %cst_38 {dimension_numbers = #tpu.dot_dimension_numbers<[1], [0], [0], [1], [0, 0, 1, 1], [], []>} : vector<64x3xbf16>, vector<3x128xbf16>, vector<64x128xf32> -> vector<64x128xf32>
    %37 = arith.addf %31, %36 : vector<64x128xf32>
    %c4 = arith.constant 4 : index
    %c0_39 = arith.constant 0 : index
    %38 = vector.load %arg13[%c4, %c0_39] : memref<70x3xf32, #tpu.memory_space<vmem>>, vector<64x3xf32>
    %39 = arith.truncf %38 : vector<64x3xf32> to vector<64x3xbf16>
    %c4_40 = arith.constant 4 : index
    %c0_41 = arith.constant 0 : index
    %c0_42 = arith.constant 0 : index
    %40 = vector.load %arg2[%c4_40, %c0_41, %c0_42] : memref<7x3x128xbf16, #tpu.memory_space<vmem>>, vector<1x3x128xbf16>
    %41 = vector.shape_cast %40 : vector<1x3x128xbf16> to vector<3x128xbf16>
    %cst_43 = arith.constant dense<0.000000e+00> : vector<64x128xf32>
    %42 = tpu.matmul %39, %41, %cst_43 {dimension_numbers = #tpu.dot_dimension_numbers<[1], [0], [0], [1], [0, 0, 1, 1], [], []>} : vector<64x3xbf16>, vector<3x128xbf16>, vector<64x128xf32> -> vector<64x128xf32>
    %43 = arith.addf %37, %42 : vector<64x128xf32>
    %c5 = arith.constant 5 : index
    %c0_44 = arith.constant 0 : index
    %44 = vector.load %arg13[%c5, %c0_44] : memref<70x3xf32, #tpu.memory_space<vmem>>, vector<64x3xf32>
    %45 = arith.truncf %44 : vector<64x3xf32> to vector<64x3xbf16>
    %c5_45 = arith.constant 5 : index
    %c0_46 = arith.constant 0 : index
    %c0_47 = arith.constant 0 : index
    %46 = vector.load %arg2[%c5_45, %c0_46, %c0_47] : memref<7x3x128xbf16, #tpu.memory_space<vmem>>, vector<1x3x128xbf16>
    %47 = vector.shape_cast %46 : vector<1x3x128xbf16> to vector<3x128xbf16>
    %cst_48 = arith.constant dense<0.000000e+00> : vector<64x128xf32>
    %48 = tpu.matmul %45, %47, %cst_48 {dimension_numbers = #tpu.dot_dimension_numbers<[1], [0], [0], [1], [0, 0, 1, 1], [], []>} : vector<64x3xbf16>, vector<3x128xbf16>, vector<64x128xf32> -> vector<64x128xf32>
    %49 = arith.addf %43, %48 : vector<64x128xf32>
    %c6 = arith.constant 6 : index
    %c0_49 = arith.constant 0 : index
    %50 = vector.load %arg13[%c6, %c0_49] : memref<70x3xf32, #tpu.memory_space<vmem>>, vector<64x3xf32>
    %51 = arith.truncf %50 : vector<64x3xf32> to vector<64x3xbf16>
    %c6_50 = arith.constant 6 : index
    %c0_51 = arith.constant 0 : index
    %c0_52 = arith.constant 0 : index
    %52 = vector.load %arg2[%c6_50, %c0_51, %c0_52] : memref<7x3x128xbf16, #tpu.memory_space<vmem>>, vector<1x3x128xbf16>
    %53 = vector.shape_cast %52 : vector<1x3x128xbf16> to vector<3x128xbf16>
    %cst_53 = arith.constant dense<0.000000e+00> : vector<64x128xf32>
    %54 = tpu.matmul %51, %53, %cst_53 {dimension_numbers = #tpu.dot_dimension_numbers<[1], [0], [0], [1], [0, 0, 1, 1], [], []>} : vector<64x3xbf16>, vector<3x128xbf16>, vector<64x128xf32> -> vector<64x128xf32>
    %55 = arith.addf %49, %54 : vector<64x128xf32>
    %c0_54 = arith.constant 0 : index
    %c0_55 = arith.constant 0 : index
    %56 = vector.load %arg3[%c0_54, %c0_55] : memref<1x128xf32, #tpu.memory_space<vmem>>, vector<1x128xf32>
    %57 = vector.broadcast %56 : vector<1x128xf32> to vector<64x128xf32>
    %58 = arith.addf %55, %57 : vector<64x128xf32>
    %cst_56 = arith.constant 0.000000e+00 : f32
    %59 = vector.broadcast %cst_56 : f32 to vector<64x128xf32>
    %60 = arith.maximumf %58, %59 : vector<64x128xf32>
    %c0_57 = arith.constant 0 : index
    %c0_58 = arith.constant 0 : index
    %61 = vector.load %arg4[%c0_57, %c0_58] : memref<1x128xf32, #tpu.memory_space<vmem>>, vector<1x128xf32>
    %62 = vector.broadcast %61 : vector<1x128xf32> to vector<64x128xf32>
    %63 = arith.mulf %60, %62 : vector<64x128xf32>
    %c0_59 = arith.constant 0 : index
    %c0_60 = arith.constant 0 : index
    %64 = vector.load %arg5[%c0_59, %c0_60] : memref<1x128xf32, #tpu.memory_space<vmem>>, vector<1x128xf32>
    %65 = vector.broadcast %64 : vector<1x128xf32> to vector<64x128xf32>
    %66 = arith.addf %63, %65 : vector<64x128xf32>
    %c1_61 = arith.constant 1 : index
    %c0_62 = arith.constant 0 : index
    %67 = vector.load %arg14[%c1_61, %c0_62] : memref<66x128xf32, #tpu.memory_space<vmem>>, vector<64x128xf32>
    tpu.vector_store %arg14[%c1_61, %c0_62], %66 {strides = array<i32>} : memref<66x128xf32, #tpu.memory_space<vmem>>, vector<64x128xf32>,
    %c0_63 = arith.constant 0 : index
    %c0_64 = arith.constant 0 : index
    %68 = vector.load %arg14[%c0_63, %c0_64] : memref<66x128xf32, #tpu.memory_space<vmem>>, vector<64x128xf32>
    %69 = arith.truncf %68 : vector<64x128xf32> to vector<64x128xbf16>
    %c0_65 = arith.constant 0 : index
    %c0_66 = arith.constant 0 : index
    %c0_67 = arith.constant 0 : index
    %70 = vector.load %arg6[%c0_65, %c0_66, %c0_67] : memref<3x128x128xbf16, #tpu.memory_space<vmem>>, vector<1x128x128xbf16>
    %71 = vector.shape_cast %70 : vector<1x128x128xbf16> to vector<128x128xbf16>
    %cst_68 = arith.constant dense<0.000000e+00> : vector<64x128xf32>
    %72 = tpu.matmul %69, %71, %cst_68 {dimension_numbers = #tpu.dot_dimension_numbers<[1], [0], [0], [1], [0, 0, 1, 1], [], []>} : vector<64x128xbf16>, vector<128x128xbf16>, vector<64x128xf32> -> vector<64x128xf32>
    %c1_69 = arith.constant 1 : index
    %c0_70 = arith.constant 0 : index
    %73 = vector.load %arg14[%c1_69, %c0_70] : memref<66x128xf32, #tpu.memory_space<vmem>>, vector<64x128xf32>
    %74 = arith.truncf %73 : vector<64x128xf32> to vector<64x128xbf16>
    %c1_71 = arith.constant 1 : index
    %c0_72 = arith.constant 0 : index
    %c0_73 = arith.constant 0 : index
    %75 = vector.load %arg6[%c1_71, %c0_72, %c0_73] : memref<3x128x128xbf16, #tpu.memory_space<vmem>>, vector<1x128x128xbf16>
    %76 = vector.shape_cast %75 : vector<1x128x128xbf16> to vector<128x128xbf16>
    %cst_74 = arith.constant dense<0.000000e+00> : vector<64x128xf32>
    %77 = tpu.matmul %74, %76, %cst_74 {dimension_numbers = #tpu.dot_dimension_numbers<[1], [0], [0], [1], [0, 0, 1, 1], [], []>} : vector<64x128xbf16>, vector<128x128xbf16>, vector<64x128xf32> -> vector<64x128xf32>
    %78 = arith.addf %72, %77 : vector<64x128xf32>
    %c2_75 = arith.constant 2 : index
    %c0_76 = arith.constant 0 : index
    %79 = vector.load %arg14[%c2_75, %c0_76] : memref<66x128xf32, #tpu.memory_space<vmem>>, vector<64x128xf32>
    %80 = arith.truncf %79 : vector<64x128xf32> to vector<64x128xbf16>
    %c2_77 = arith.constant 2 : index
    %c0_78 = arith.constant 0 : index
    %c0_79 = arith.constant 0 : index
    %81 = vector.load %arg6[%c2_77, %c0_78, %c0_79] : memref<3x128x128xbf16, #tpu.memory_space<vmem>>, vector<1x128x128xbf16>
    %82 = vector.shape_cast %81 : vector<1x128x128xbf16> to vector<128x128xbf16>
    %cst_80 = arith.constant dense<0.000000e+00> : vector<64x128xf32>
    %83 = tpu.matmul %80, %82, %cst_80 {dimension_numbers = #tpu.dot_dimension_numbers<[1], [0], [0], [1], [0, 0, 1, 1], [], []>} : vector<64x128xbf16>, vector<128x128xbf16>, vector<64x128xf32> -> vector<64x128xf32>
    %84 = arith.addf %78, %83 : vector<64x128xf32>
    %c0_81 = arith.constant 0 : index
    %c0_82 = arith.constant 0 : index
    %85 = vector.load %arg7[%c0_81, %c0_82] : memref<1x128xf32, #tpu.memory_space<vmem>>, vector<1x128xf32>
    %86 = vector.broadcast %85 : vector<1x128xf32> to vector<64x128xf32>
    %87 = arith.mulf %84, %86 : vector<64x128xf32>
    %c0_83 = arith.constant 0 : index
    %c0_84 = arith.constant 0 : index
    %88 = vector.load %arg8[%c0_83, %c0_84] : memref<1x128xf32, #tpu.memory_space<vmem>>, vector<1x128xf32>
    %89 = vector.broadcast %88 : vector<1x128xf32> to vector<64x128xf32>
    %90 = arith.addf %87, %89 : vector<64x128xf32>
    %cst_85 = arith.constant 0.000000e+00 : f32
    %91 = vector.broadcast %cst_85 : f32 to vector<64x128xf32>
    %92 = arith.maximumf %90, %91 : vector<64x128xf32>
    %c0_86 = arith.constant 0 : index
    %c0_87 = arith.constant 0 : index
    %93 = vector.load %arg16[%c0_86, %c0_87] : memref<64x128xf32, #tpu.memory_space<vmem>>, vector<64x128xf32>
    tpu.vector_store %arg16[%c0_86, %c0_87], %92 {strides = array<i32>} : memref<64x128xf32, #tpu.memory_space<vmem>>, vector<64x128xf32>,
    %c0_88 = arith.constant 0 : index
    %c0_89 = arith.constant 0 : index
    %94 = tpu.strided_load %arg16[%c0_88, %c0_89] {strides = array<i32: 2, 1>} : memref<64x128xf32, #tpu.memory_space<vmem>>, vector<32x128xf32>
    %c1_90 = arith.constant 1 : index
    %c0_91 = arith.constant 0 : index
    %95 = tpu.strided_load %arg16[%c1_90, %c0_91] {strides = array<i32: 2, 1>} : memref<64x128xf32, #tpu.memory_space<vmem>>, vector<32x128xf32>
    %96 = arith.maximumf %94, %95 : vector<32x128xf32>
    %c1_92 = arith.constant 1 : index
    %c0_93 = arith.constant 0 : index
    %97 = vector.load %arg15[%c1_92, %c0_93] : memref<34x128xf32, #tpu.memory_space<vmem>>, vector<32x128xf32>
    tpu.vector_store %arg15[%c1_92, %c0_93], %96 {strides = array<i32>} : memref<34x128xf32, #tpu.memory_space<vmem>>, vector<32x128xf32>,
    %c0_94 = arith.constant 0 : index
    %c0_95 = arith.constant 0 : index
    %98 = vector.load %arg15[%c0_94, %c0_95] : memref<34x128xf32, #tpu.memory_space<vmem>>, vector<32x128xf32>
    %99 = arith.truncf %98 : vector<32x128xf32> to vector<32x128xbf16>
    %c0_96 = arith.constant 0 : index
    %c0_97 = arith.constant 0 : index
    %c0_98 = arith.constant 0 : index
    %100 = vector.load %arg9[%c0_96, %c0_97, %c0_98] : memref<3x128x128xbf16, #tpu.memory_space<vmem>>, vector<1x128x128xbf16>
    %101 = vector.shape_cast %100 : vector<1x128x128xbf16> to vector<128x128xbf16>
    %cst_99 = arith.constant dense<0.000000e+00> : vector<32x128xf32>
    %102 = tpu.matmul %99, %101, %cst_99 {dimension_numbers = #tpu.dot_dimension_numbers<[1], [0], [0], [1], [0, 0, 1, 1], [], []>} : vector<32x128xbf16>, vector<128x128xbf16>, vector<32x128xf32> -> vector<32x128xf32>
    %c1_100 = arith.constant 1 : index
    %c0_101 = arith.constant 0 : index
    %103 = vector.load %arg15[%c1_100, %c0_101] : memref<34x128xf32, #tpu.memory_space<vmem>>, vector<32x128xf32>
    %104 = arith.truncf %103 : vector<32x128xf32> to vector<32x128xbf16>
    %c1_102 = arith.constant 1 : index
    %c0_103 = arith.constant 0 : index
    %c0_104 = arith.constant 0 : index
    %105 = vector.load %arg9[%c1_102, %c0_103, %c0_104] : memref<3x128x128xbf16, #tpu.memory_space<vmem>>, vector<1x128x128xbf16>
    %106 = vector.shape_cast %105 : vector<1x128x128xbf16> to vector<128x128xbf16>
    %cst_105 = arith.constant dense<0.000000e+00> : vector<32x128xf32>
    %107 = tpu.matmul %104, %106, %cst_105 {dimension_numbers = #tpu.dot_dimension_numbers<[1], [0], [0], [1], [0, 0, 1, 1], [], []>} : vector<32x128xbf16>, vector<128x128xbf16>, vector<32x128xf32> -> vector<32x128xf32>
    %108 = arith.addf %102, %107 : vector<32x128xf32>
    %c2_106 = arith.constant 2 : index
    %c0_107 = arith.constant 0 : index
    %109 = vector.load %arg15[%c2_106, %c0_107] : memref<34x128xf32, #tpu.memory_space<vmem>>, vector<32x128xf32>
    %110 = arith.truncf %109 : vector<32x128xf32> to vector<32x128xbf16>
    %c2_108 = arith.constant 2 : index
    %c0_109 = arith.constant 0 : index
    %c0_110 = arith.constant 0 : index
    %111 = vector.load %arg9[%c2_108, %c0_109, %c0_110] : memref<3x128x128xbf16, #tpu.memory_space<vmem>>, vector<1x128x128xbf16>
    %112 = vector.shape_cast %111 : vector<1x128x128xbf16> to vector<128x128xbf16>
    %cst_111 = arith.constant dense<0.000000e+00> : vector<32x128xf32>
    %113 = tpu.matmul %110, %112, %cst_111 {dimension_numbers = #tpu.dot_dimension_numbers<[1], [0], [0], [1], [0, 0, 1, 1], [], []>} : vector<32x128xbf16>, vector<128x128xbf16>, vector<32x128xf32> -> vector<32x128xf32>
    %114 = arith.addf %108, %113 : vector<32x128xf32>
    %c0_112 = arith.constant 0 : index
    %c0_113 = arith.constant 0 : index
    %115 = vector.load %arg10[%c0_112, %c0_113] : memref<1x128xf32, #tpu.memory_space<vmem>>, vector<1x128xf32>
    %116 = vector.broadcast %115 : vector<1x128xf32> to vector<32x128xf32>
    %117 = arith.mulf %114, %116 : vector<32x128xf32>
    %c0_114 = arith.constant 0 : index
    %c0_115 = arith.constant 0 : index
    %118 = vector.load %arg11[%c0_114, %c0_115] : memref<1x128xf32, #tpu.memory_space<vmem>>, vector<1x128xf32>
    %119 = vector.broadcast %118 : vector<1x128xf32> to vector<32x128xf32>
    %120 = arith.addf %117, %119 : vector<32x128xf32>
    %cst_116 = arith.constant 0.000000e+00 : f32
    %121 = vector.broadcast %cst_116 : f32 to vector<32x128xf32>
    %122 = arith.maximumf %120, %121 : vector<32x128xf32>
    %c0_117 = arith.constant 0 : index
    %c0_118 = arith.constant 0 : index
    %123 = vector.load %arg16[%c0_117, %c0_118] : memref<64x128xf32, #tpu.memory_space<vmem>>, vector<32x128xf32>
    tpu.vector_store %arg16[%c0_117, %c0_118], %122 {strides = array<i32>} : memref<64x128xf32, #tpu.memory_space<vmem>>, vector<32x128xf32>,
    %c0_119 = arith.constant 0 : index
    %c0_120 = arith.constant 0 : index
    %124 = tpu.strided_load %arg16[%c0_119, %c0_120] {strides = array<i32: 2, 1>} : memref<64x128xf32, #tpu.memory_space<vmem>>, vector<16x128xf32>
    %c1_121 = arith.constant 1 : index
    %c0_122 = arith.constant 0 : index
    %125 = tpu.strided_load %arg16[%c1_121, %c0_122] {strides = array<i32: 2, 1>} : memref<64x128xf32, #tpu.memory_space<vmem>>, vector<16x128xf32>
    %126 = arith.maximumf %124, %125 : vector<16x128xf32>
    %127 = arith.truncf %126 : vector<16x128xf32> to vector<16x128xbf16>
    %c0_123 = arith.constant 0 : index
    %c0_124 = arith.constant 0 : index
    %c0_125 = arith.constant 0 : index
    %128 = vector.load %arg12[%c0_123, %c0_124, %c0_125] : memref<1x16x128xbf16, #tpu.memory_space<vmem>>, vector<1x16x128xbf16>
    %129 = vector.shape_cast %128 : vector<1x16x128xbf16> to vector<16x128xbf16>
    %130 = vector.shape_cast %127 : vector<16x128xbf16> to vector<1x16x128xbf16>
    tpu.vector_store %arg12[%c0_123, %c0_124, %c0_125], %130 {strides = array<i32>} : memref<1x16x128xbf16, #tpu.memory_space<vmem>>, vector<1x16x128xbf16>,
    return
  }
  func.func @transform_0(%arg0: i32) -> (i32, i32, i32) {
    %c0_i32 = arith.constant 0 : i32
    %c0_i32_0 = arith.constant 0 : i32
    %c0_i32_1 = arith.constant 0 : i32
    return %arg0, %c0_i32, %c0_i32_0 : i32, i32, i32
  }
  func.func @transform_1(%arg0: i32) -> (i32, i32, i32) {
    %c0_i32 = arith.constant 0 : i32
    %c0_i32_0 = arith.constant 0 : i32
    %c0_i32_1 = arith.constant 0 : i32
    %c0_i32_2 = arith.constant 0 : i32
    return %c0_i32, %c0_i32_0, %c0_i32_1 : i32, i32, i32
  }
  func.func @transform_2(%arg0: i32) -> (i32, i32) {
    %c0_i32 = arith.constant 0 : i32
    %c0_i32_0 = arith.constant 0 : i32
    %c0_i32_1 = arith.constant 0 : i32
    return %c0_i32, %c0_i32_0 : i32, i32
  }
  func.func @transform_3(%arg0: i32) -> (i32, i32) {
    %c0_i32 = arith.constant 0 : i32
    %c0_i32_0 = arith.constant 0 : i32
    %c0_i32_1 = arith.constant 0 : i32
    return %c0_i32, %c0_i32_0 : i32, i32
  }
  func.func @transform_4(%arg0: i32) -> (i32, i32) {
    %c0_i32 = arith.constant 0 : i32
    %c0_i32_0 = arith.constant 0 : i32
    %c0_i32_1 = arith.constant 0 : i32
    return %c0_i32, %c0_i32_0 : i32, i32
  }
  func.func @transform_5(%arg0: i32) -> (i32, i32, i32) {
    %c0_i32 = arith.constant 0 : i32
    %c0_i32_0 = arith.constant 0 : i32
    %c0_i32_1 = arith.constant 0 : i32
    %c0_i32_2 = arith.constant 0 : i32
    return %c0_i32, %c0_i32_0, %c0_i32_1 : i32, i32, i32
  }
  func.func @transform_6(%arg0: i32) -> (i32, i32) {
    %c0_i32 = arith.constant 0 : i32
    %c0_i32_0 = arith.constant 0 : i32
    %c0_i32_1 = arith.constant 0 : i32
    return %c0_i32, %c0_i32_0 : i32, i32
  }
  func.func @transform_7(%arg0: i32) -> (i32, i32) {
    %c0_i32 = arith.constant 0 : i32
    %c0_i32_0 = arith.constant 0 : i32
    %c0_i32_1 = arith.constant 0 : i32
    return %c0_i32, %c0_i32_0 : i32, i32
  }
  func.func @transform_8(%arg0: i32) -> (i32, i32, i32) {
    %c0_i32 = arith.constant 0 : i32
    %c0_i32_0 = arith.constant 0 : i32
    %c0_i32_1 = arith.constant 0 : i32
    %c0_i32_2 = arith.constant 0 : i32
    return %c0_i32, %c0_i32_0, %c0_i32_1 : i32, i32, i32
  }
  func.func @transform_9(%arg0: i32) -> (i32, i32) {
    %c0_i32 = arith.constant 0 : i32
    %c0_i32_0 = arith.constant 0 : i32
    %c0_i32_1 = arith.constant 0 : i32
    return %c0_i32, %c0_i32_0 : i32, i32
  }
  func.func @transform_10(%arg0: i32) -> (i32, i32) {
    %c0_i32 = arith.constant 0 : i32
    %c0_i32_0 = arith.constant 0 : i32
    %c0_i32_1 = arith.constant 0 : i32
    return %c0_i32, %c0_i32_0 : i32, i32
  }
  func.func @transform_11(%arg0: i32) -> (i32, i32, i32) {
    %c0_i32 = arith.constant 0 : i32
    %c0_i32_0 = arith.constant 0 : i32
    %c0_i32_1 = arith.constant 0 : i32
    return %arg0, %c0_i32, %c0_i32_0 : i32, i32, i32
  }
}

module attributes {stable_mosaic.version = 11 : i64} {
  func.func @_fc_head_kernel(%arg0: memref<2x2048xbf16, #tpu.memory_space<vmem>>, %arg1: memref<2048x256xbf16, #tpu.memory_space<vmem>>, %arg2: memref<1x256xf32, #tpu.memory_space<vmem>>, %arg3: memref<256x128xbf16, #tpu.memory_space<vmem>>, %arg4: memref<1x128xf32, #tpu.memory_space<vmem>>, %arg5: memref<128x128xbf16, #tpu.memory_space<vmem>>, %arg6: memref<1x128xf32, #tpu.memory_space<vmem>>, %arg7: memref<2x128xf32, #tpu.memory_space<vmem>>) attributes {dimension_semantics = [], scalar_prefetch = 0 : i64, scratch_operands = 0 : i64, tpu.core_type = #tpu.core_type<tc>} {
    %c0 = arith.constant 0 : index
    %c0_0 = arith.constant 0 : index
    %0 = vector.load %arg0[%c0, %c0_0] : memref<2x2048xbf16, #tpu.memory_space<vmem>>, vector<2x2048xbf16>
    %c0_1 = arith.constant 0 : index
    %c0_2 = arith.constant 0 : index
    %1 = vector.load %arg1[%c0_1, %c0_2] : memref<2048x256xbf16, #tpu.memory_space<vmem>>, vector<2048x256xbf16>
    %cst = arith.constant dense<0.000000e+00> : vector<2x256xf32>
    %2 = tpu.matmul %0, %1, %cst {dimension_numbers = #tpu.dot_dimension_numbers<[1], [0], [0], [1], [0, 0, 1, 1], [], []>} : vector<2x2048xbf16>, vector<2048x256xbf16>, vector<2x256xf32> -> vector<2x256xf32>
    %c0_3 = arith.constant 0 : index
    %c0_4 = arith.constant 0 : index
    %3 = vector.load %arg2[%c0_3, %c0_4] : memref<1x256xf32, #tpu.memory_space<vmem>>, vector<1x256xf32>
    %4 = vector.broadcast %3 : vector<1x256xf32> to vector<2x256xf32>
    %5 = arith.addf %2, %4 : vector<2x256xf32>
    %cst_5 = arith.constant 5.000000e-01 : f32
    %6 = vector.broadcast %cst_5 : f32 to vector<2x256xf32>
    %7 = arith.mulf %6, %5 : vector<2x256xf32>
    %cst_6 = arith.constant 4.471500e-02 : f32
    %8 = vector.broadcast %cst_6 : f32 to vector<2x256xf32>
    %9 = arith.mulf %8, %5 : vector<2x256xf32>
    %10 = arith.mulf %9, %5 : vector<2x256xf32>
    %11 = arith.mulf %10, %5 : vector<2x256xf32>
    %12 = arith.addf %5, %11 : vector<2x256xf32>
    %cst_7 = arith.constant 0.797884583 : f32
    %13 = vector.broadcast %cst_7 : f32 to vector<2x256xf32>
    %14 = arith.mulf %13, %12 : vector<2x256xf32>
    %15 = math.tanh %14 : vector<2x256xf32>
    %cst_8 = arith.constant 1.000000e+00 : f32
    %16 = vector.broadcast %cst_8 : f32 to vector<2x256xf32>
    %17 = arith.addf %16, %15 : vector<2x256xf32>
    %18 = arith.mulf %7, %17 : vector<2x256xf32>
    %19 = arith.truncf %18 : vector<2x256xf32> to vector<2x256xbf16>
    %c0_9 = arith.constant 0 : index
    %c0_10 = arith.constant 0 : index
    %20 = vector.load %arg3[%c0_9, %c0_10] : memref<256x128xbf16, #tpu.memory_space<vmem>>, vector<256x128xbf16>
    %cst_11 = arith.constant dense<0.000000e+00> : vector<2x128xf32>
    %21 = tpu.matmul %19, %20, %cst_11 {dimension_numbers = #tpu.dot_dimension_numbers<[1], [0], [0], [1], [0, 0, 1, 1], [], []>} : vector<2x256xbf16>, vector<256x128xbf16>, vector<2x128xf32> -> vector<2x128xf32>
    %c0_12 = arith.constant 0 : index
    %c0_13 = arith.constant 0 : index
    %22 = vector.load %arg4[%c0_12, %c0_13] : memref<1x128xf32, #tpu.memory_space<vmem>>, vector<1x128xf32>
    %23 = vector.broadcast %22 : vector<1x128xf32> to vector<2x128xf32>
    %24 = arith.addf %21, %23 : vector<2x128xf32>
    %cst_14 = arith.constant 5.000000e-01 : f32
    %25 = vector.broadcast %cst_14 : f32 to vector<2x128xf32>
    %26 = arith.mulf %25, %24 : vector<2x128xf32>
    %cst_15 = arith.constant 4.471500e-02 : f32
    %27 = vector.broadcast %cst_15 : f32 to vector<2x128xf32>
    %28 = arith.mulf %27, %24 : vector<2x128xf32>
    %29 = arith.mulf %28, %24 : vector<2x128xf32>
    %30 = arith.mulf %29, %24 : vector<2x128xf32>
    %31 = arith.addf %24, %30 : vector<2x128xf32>
    %cst_16 = arith.constant 0.797884583 : f32
    %32 = vector.broadcast %cst_16 : f32 to vector<2x128xf32>
    %33 = arith.mulf %32, %31 : vector<2x128xf32>
    %34 = math.tanh %33 : vector<2x128xf32>
    %cst_17 = arith.constant 1.000000e+00 : f32
    %35 = vector.broadcast %cst_17 : f32 to vector<2x128xf32>
    %36 = arith.addf %35, %34 : vector<2x128xf32>
    %37 = arith.mulf %26, %36 : vector<2x128xf32>
    %38 = arith.truncf %37 : vector<2x128xf32> to vector<2x128xbf16>
    %c0_18 = arith.constant 0 : index
    %c0_19 = arith.constant 0 : index
    %39 = vector.load %arg5[%c0_18, %c0_19] : memref<128x128xbf16, #tpu.memory_space<vmem>>, vector<128x128xbf16>
    %cst_20 = arith.constant dense<0.000000e+00> : vector<2x128xf32>
    %40 = tpu.matmul %38, %39, %cst_20 {dimension_numbers = #tpu.dot_dimension_numbers<[1], [0], [0], [1], [0, 0, 1, 1], [], []>} : vector<2x128xbf16>, vector<128x128xbf16>, vector<2x128xf32> -> vector<2x128xf32>
    %c0_21 = arith.constant 0 : index
    %c0_22 = arith.constant 0 : index
    %41 = vector.load %arg6[%c0_21, %c0_22] : memref<1x128xf32, #tpu.memory_space<vmem>>, vector<1x128xf32>
    %42 = vector.broadcast %41 : vector<1x128xf32> to vector<2x128xf32>
    %43 = arith.addf %40, %42 : vector<2x128xf32>
    %44 = tpu.iota {dimensions = array<i32: 1>} : vector<2x128xi32>
    %cst_23 = arith.constant 0.000000e+00 : f32
    %45 = vector.broadcast %cst_23 : f32 to vector<2x128xf32>
    %46 = arith.subf %45, %43 : vector<2x128xf32>
    %47 = math.exp %46 : vector<2x128xf32>
    %cst_24 = arith.constant 1.000000e+00 : f32
    %48 = vector.broadcast %cst_24 : f32 to vector<2x128xf32>
    %49 = arith.addf %48, %47 : vector<2x128xf32>
    %cst_25 = arith.constant 1.000000e+00 : f32
    %50 = vector.broadcast %cst_25 : f32 to vector<2x128xf32>
    %51 = arith.divf %50, %49 : vector<2x128xf32>
    %cst_26 = arith.constant 0.000000e+00 : f32
    %52 = vector.broadcast %cst_26 : f32 to vector<2x128xf32>
    %53 = arith.maximumf %43, %52 : vector<2x128xf32>
    %54 = math.absf %43 : vector<2x128xf32>
    %cst_27 = arith.constant 0.000000e+00 : f32
    %55 = vector.broadcast %cst_27 : f32 to vector<2x128xf32>
    %56 = arith.subf %55, %54 : vector<2x128xf32>
    %57 = math.exp %56 : vector<2x128xf32>
    %cst_28 = arith.constant 1.000000e+00 : f32
    %58 = vector.broadcast %cst_28 : f32 to vector<2x128xf32>
    %59 = arith.addf %58, %57 : vector<2x128xf32>
    %60 = math.log %59 : vector<2x128xf32>
    %61 = arith.addf %53, %60 : vector<2x128xf32>
    %c0_i32 = arith.constant 0 : i32
    %62 = vector.broadcast %c0_i32 : i32 to vector<2x128xi32>
    %63 = arith.cmpi eq, %44, %62 : vector<2x128xi32>
    %c24_i32 = arith.constant 24 : i32
    %64 = vector.broadcast %c24_i32 : i32 to vector<2x128xi32>
    %65 = arith.cmpi eq, %44, %64 : vector<2x128xi32>
    %66 = arith.select %65, %61, %43 : vector<2x128xi1>, vector<2x128xf32>
    %67 = arith.select %63, %51, %66 : vector<2x128xi1>, vector<2x128xf32>
    %c0_29 = arith.constant 0 : index
    %c0_30 = arith.constant 0 : index
    %68 = vector.load %arg7[%c0_29, %c0_30] : memref<2x128xf32, #tpu.memory_space<vmem>>, vector<2x128xf32>
    tpu.vector_store %arg7[%c0_29, %c0_30], %67 {strides = array<i32>} : memref<2x128xf32, #tpu.memory_space<vmem>>, vector<2x128xf32>,
    return
  }
}

</mosaic_0001>

<llo_original>
// kernel: lite_cnn1d_forward.2
$region0: #{lite_cnn1d_forward.2}
  #allocation0 [shape = 'u32[]', space=smem, size = 0x4, offset = 0x4, fixed_abs, tag = 'smem constant byte address 0x4 - core index']
  #allocation1 [shape = 'u32[72,128]{1,0:T(1,128)}', space=vmem, size = 0x9000, scoped, tag = 'internal scratch']
  #allocation2 [shape = 'f32[70,3]{1,0:T(8,128)}', space=vmem, size = 0x9000, scoped, tag = 'scratch operand']
  #allocation3 [shape = 'f32[66,128]{1,0:T(8,128)}', space=vmem, size = 0x9000, scoped, tag = 'scratch operand']
  #allocation4 [shape = 'f32[34,128]{1,0:T(8,128)}', space=vmem, size = 0x5000, scoped, tag = 'scratch operand']
  #allocation5 [shape = 'f32[64,128]{1,0:T(8,128)}', space=vmem, size = 0x8000, scoped, tag = 'scratch operand']
  %s0 = inlined_call_operand.vmem [shape: f32[2,64,3], index: 0, kind: input, shape index: {}]
  %s1 = inlined_call_operand.vmem [shape: bf16[7,3,128], index: 1, kind: input, shape index: {}]
  %s2 = inlined_call_operand.vmem [shape: f32[1,128], index: 2, kind: input, shape index: {}]
  %s3 = inlined_call_operand.vmem [shape: f32[1,128], index: 3, kind: input, shape index: {}]
  %s4 = inlined_call_operand.vmem [shape: f32[1,128], index: 4, kind: input, shape index: {}]
  %s5 = inlined_call_operand.hbm [shape: bf16[3,128,128], index: 5, kind: input, shape index: {}]
  %s6 = inlined_call_operand.vmem [shape: f32[1,128], index: 6, kind: input, shape index: {}]
  %s7 = inlined_call_operand.vmem [shape: f32[1,128], index: 7, kind: input, shape index: {}]
  %s8 = inlined_call_operand.hbm [shape: bf16[3,128,128], index: 8, kind: input, shape index: {}]
  %s9 = inlined_call_operand.vmem [shape: f32[1,128], index: 9, kind: input, shape index: {}]
  %s10 = inlined_call_operand.vmem [shape: f32[1,128], index: 10, kind: input, shape index: {}]
  %s11 = inlined_call_operand.vmem [shape: bf16[2,16,128], index: 11, kind: output, shape index: {}]
  %s12 = sld [smem:[#allocation0]]
  $region85: #{lite_cnn1d_forward.2} parent=0
    _
  %s14 = ssub.s32 1, %s12
  %s15 = scalar_select 0, %s14, %s12
  $region1: #{lite_cnn1d_forward.2} parent=0
    #allocation6 [shape = 'u8[98304]{0}', space=vmem, size = 0x18000, scoped, tag = 'input window, operand 5, single buffered']
    #allocation7 [shape = 's32[2]{0}', space=sflag, size = 0x8, scoped, tag = 'scoped memory for lite_cnn1d_forward.2']
    #allocation8 [shape = 'u8[98304]{0}', space=vmem, size = 0x18000, scoped, tag = 'input window, operand 8, single buffered']
    #allocation9 [shape = 's32[1]{0}', space=sflag, size = 0x4, scoped, tag = 'scoped memory for lite_cnn1d_forward.2']
    %16 = vsyncpa [#allocation7], 0
    %17 = vsyncpa [#allocation9], 0
    loop: start=0, step=1, limit=4
    $region2: #{lite_cnn1d_forward.2} parent=1 // loop_pre_header
      _
    $region3: #{lite_cnn1d_forward.2} parent=1 // loop_header
      %s19 = sphi 0, %s23
      %p20 = scmp.ge.s32.totalorder %s19, 4
      %s29 = sphi 0, %s31
      %s32 = sphi 0, %s29
      %s33 = sphi 0, %s32
      %s49 = sphi 0, %s33
      %s53 = sphi 0, %s53
      %s55 = sphi 0, %s53
      %s56 = sphi 0, %s55
      %s70 = sphi 0, %s56
      %s74 = sphi 0, %s74
      %s76 = sphi 0, %s74
      %s77 = sphi 0, %s76
      %s91 = sphi 0, %s77
      %s95 = sphi 0, %s95
      %s97 = sphi 0, %s95
      %s98 = sphi 0, %s97
      %s112 = sphi 0, %s98
      %s116 = sphi 0, %s116
      %s118 = sphi 0, %s116
      %s119 = sphi 0, %s118
      %s133 = sphi 0, %s119
      %s137 = sphi 0, %s137
      %s139 = sphi 0, %s137
      %s140 = sphi 0, %s139
      %s154 = sphi 0, %s140
      %s158 = sphi 0, %s158
      %s160 = sphi 0, %s158
      %s161 = sphi 0, %s160
      %s175 = sphi 0, %s161
      %s179 = sphi 0, %s179
      %s181 = sphi 0, %s179
      %s182 = sphi 0, %s181
      %s196 = sphi 0, %s182
      %s200 = sphi 0, %s200
      %s202 = sphi 0, %s200
      %s203 = sphi 0, %s202
      %s217 = sphi 0, %s203
      %s221 = sphi 0, %s221
      %s223 = sphi 0, %s221
      %s224 = sphi 0, %s223
      %s238 = sphi 0, %s224
      %s242 = sphi 0, %s242
      %s244 = sphi 0, %s242
      %s245 = sphi 0, %s244
      %s259 = sphi 0, %s245
      %s265 = sphi 0, %s267
      %s268 = sphi 0, %s265
      %s269 = sphi 0, %s268
      %s285 = sphi 0, %s269
    $region4: #{lite_cnn1d_forward.2} parent=1 // loop_header_branch
      %22 = sbr.rel (%p20) target = $region8
    $region5: #{lite_cnn1d_forward.2} parent=1 // loop_body
      %s24 = ssub.s32 %s19, 1
      %s25 = ssub.s32 %s19, 2
      %s26 = sadd.s32 %s19, 1
      %s27 = ssub.s32 %s19, %s26
      %p28 = scmp.eq.s32.totalorder %s27, 0
      %s30 = sadd.s32 %s29, 1
      %s31 = scalar_select %p28, %s29, %s30
      %p34 = pneg %p28
      %p35 = scmp.eq.s32.totalorder %s19, 1
      %p36 = por %p34, %p35
      %p37 = scmp.ne.s32.totalorder %s29, %s32
      %p38 = scmp.eq.s32.totalorder %s19, 0
      %p39 = por %p37, %p38
      %p40 = scmp.ne.s32.totalorder %s29, %s32
      %p41 = scmp.eq.s32.totalorder %s24, 1
      %p42 = por %p40, %p41
      %p43 = scmp.ne.s32.totalorder %s32, %s33
      %p44 = scmp.eq.s32.totalorder %s24, 0
      %p45 = por %p43, %p44
      %p46 = scmp.ne.s32.totalorder %s32, %s33
      %p47 = scmp.eq.s32.totalorder %s25, 1
      %p48 = por %p46, %p47
      %p50 = scmp.ne.s32.totalorder %s33, %s49
      %p51 = scmp.eq.s32.totalorder %s25, 0
      %p52 = por %p50, %p51
      %s54 = sadd.s32 %s53, 1
      %p57 = scmp.eq.s32.totalorder %s19, 1
      %p58 = scmp.ne.s32.totalorder %s53, %s55
      %p59 = scmp.eq.s32.totalorder %s19, 0
      %p60 = por %p58, %p59
      %p61 = scmp.ne.s32.totalorder %s53, %s55
      %p62 = scmp.eq.s32.totalorder %s24, 1
      %p63 = por %p61, %p62
      %p64 = scmp.ne.s32.totalorder %s55, %s56
      %p65 = scmp.eq.s32.totalorder %s24, 0
      %p66 = por %p64, %p65
      %p67 = scmp.ne.s32.totalorder %s55, %s56
      %p68 = scmp.eq.s32.totalorder %s25, 1
      %p69 = por %p67, %p68
      %p71 = scmp.ne.s32.totalorder %s56, %s70
      %p72 = scmp.eq.s32.totalorder %s25, 0
      %p73 = por %p71, %p72
      %s75 = sadd.s32 %s74, 1
      %p78 = scmp.eq.s32.totalorder %s19, 1
      %p79 = scmp.ne.s32.totalorder %s74, %s76
      %p80 = scmp.eq.s32.totalorder %s19, 0
      %p81 = por %p79, %p80
      %p82 = scmp.ne.s32.totalorder %s74, %s76
      %p83 = scmp.eq.s32.totalorder %s24, 1
      %p84 = por %p82, %p83
      %p85 = scmp.ne.s32.totalorder %s76, %s77
      %p86 = scmp.eq.s32.totalorder %s24, 0
      %p87 = por %p85, %p86
      %p88 = scmp.ne.s32.totalorder %s76, %s77
      %p89 = scmp.eq.s32.totalorder %s25, 1
      %p90 = por %p88, %p89
      %p92 = scmp.ne.s32.totalorder %s77, %s91
      %p93 = scmp.eq.s32.totalorder %s25, 0
      %p94 = por %p92, %p93
      %s96 = sadd.s32 %s95, 1
      %p99 = scmp.eq.s32.totalorder %s19, 1
      %p100 = scmp.ne.s32.totalorder %s95, %s97
      %p101 = scmp.eq.s32.totalorder %s19, 0
      %p102 = por %p100, %p101
      %p103 = scmp.ne.s32.totalorder %s95, %s97
      %p104 = scmp.eq.s32.totalorder %s24, 1
      %p105 = por %p103, %p104
      %p106 = scmp.ne.s32.totalorder %s97, %s98
      %p107 = scmp.eq.s32.totalorder %s24, 0
      %p108 = por %p106, %p107
      %p109 = scmp.ne.s32.totalorder %s97, %s98
      %p110 = scmp.eq.s32.totalorder %s25, 1
      %p111 = por %p109, %p110
      %p113 = scmp.ne.s32.totalorder %s98, %s112
      %p114 = scmp.eq.s32.totalorder %s25, 0
      %p115 = por %p113, %p114
      %s117 = sadd.s32 %s116, 1
      %p120 = scmp.eq.s32.totalorder %s19, 1
      %p121 = scmp.ne.s32.totalorder %s116, %s118
      %p122 = scmp.eq.s32.totalorder %s19, 0
      %p123 = por %p121, %p122
      %p124 = scmp.ne.s32.totalorder %s116, %s118
      %p125 = scmp.eq.s32.totalorder %s24, 1
      %p126 = por %p124, %p125
      %p127 = scmp.ne.s32.totalorder %s118, %s119
      %p128 = scmp.eq.s32.totalorder %s24, 0
      %p129 = por %p127, %p128
      %p130 = scmp.ne.s32.totalorder %s118, %s119
      %p131 = scmp.eq.s32.totalorder %s25, 1
      %p132 = por %p130, %p131
      %p134 = scmp.ne.s32.totalorder %s119, %s133
      %p135 = scmp.eq.s32.totalorder %s25, 0
      %p136 = por %p134, %p135
      %s138 = sadd.s32 %s137, 1
      %p141 = scmp.eq.s32.totalorder %s19, 1
      %p142 = scmp.ne.s32.totalorder %s137, %s139
      %p143 = scmp.eq.s32.totalorder %s19, 0
      %p144 = por %p142, %p143
      %p145 = scmp.ne.s32.totalorder %s137, %s139
      %p146 = scmp.eq.s32.totalorder %s24, 1
      %p147 = por %p145, %p146
      %p148 = scmp.ne.s32.totalorder %s139, %s140
      %p149 = scmp.eq.s32.totalorder %s24, 0
      %p150 = por %p148, %p149
      %p151 = scmp.ne.s32.totalorder %s139, %s140
      %p152 = scmp.eq.s32.totalorder %s25, 1
      %p153 = por %p151, %p152
      %p155 = scmp.ne.s32.totalorder %s140, %s154
      %p156 = scmp.eq.s32.totalorder %s25, 0
      %p157 = por %p155, %p156
      %s159 = sadd.s32 %s158, 1
      %p162 = scmp.eq.s32.totalorder %s19, 1
      %p163 = scmp.ne.s32.totalorder %s158, %s160
      %p164 = scmp.eq.s32.totalorder %s19, 0
      %p165 = por %p163, %p164
      %p166 = scmp.ne.s32.totalorder %s158, %s160
      %p167 = scmp.eq.s32.totalorder %s24, 1
      %p168 = por %p166, %p167
      %p169 = scmp.ne.s32.totalorder %s160, %s161
      %p170 = scmp.eq.s32.totalorder %s24, 0
      %p171 = por %p169, %p170
      %p172 = scmp.ne.s32.totalorder %s160, %s161
      %p173 = scmp.eq.s32.totalorder %s25, 1
      %p174 = por %p172, %p173
      %p176 = scmp.ne.s32.totalorder %s161, %s175
      %p177 = scmp.eq.s32.totalorder %s25, 0
      %p178 = por %p176, %p177
      %s180 = sadd.s32 %s179, 1
      %p183 = scmp.eq.s32.totalorder %s19, 1
      %p184 = scmp.ne.s32.totalorder %s179, %s181
      %p185 = scmp.eq.s32.totalorder %s19, 0
      %p186 = por %p184, %p185
      %p187 = scmp.ne.s32.totalorder %s179, %s181
      %p188 = scmp.eq.s32.totalorder %s24, 1
      %p189 = por %p187, %p188
      %p190 = scmp.ne.s32.totalorder %s181, %s182
      %p191 = scmp.eq.s32.totalorder %s24, 0
      %p192 = por %p190, %p191
      %p193 = scmp.ne.s32.totalorder %s181, %s182
      %p194 = scmp.eq.s32.totalorder %s25, 1
      %p195 = por %p193, %p194
      %p197 = scmp.ne.s32.totalorder %s182, %s196
      %p198 = scmp.eq.s32.totalorder %s25, 0
      %p199 = por %p197, %p198
      %s201 = sadd.s32 %s200, 1
      %p204 = scmp.eq.s32.totalorder %s19, 1
      %p205 = scmp.ne.s32.totalorder %s200, %s202
      %p206 = scmp.eq.s32.totalorder %s19, 0
      %p207 = por %p205, %p206
      %p208 = scmp.ne.s32.totalorder %s200, %s202
      %p209 = scmp.eq.s32.totalorder %s24, 1
      %p210 = por %p208, %p209
      %p211 = scmp.ne.s32.totalorder %s202, %s203
      %p212 = scmp.eq.s32.totalorder %s24, 0
      %p213 = por %p211, %p212
      %p214 = scmp.ne.s32.totalorder %s202, %s203
      %p215 = scmp.eq.s32.totalorder %s25, 1
      %p216 = por %p214, %p215
      %p218 = scmp.ne.s32.totalorder %s203, %s217
      %p219 = scmp.eq.s32.totalorder %s25, 0
      %p220 = por %p218, %p219
      %s222 = sadd.s32 %s221, 1
      %p225 = scmp.eq.s32.totalorder %s19, 1
      %p226 = scmp.ne.s32.totalorder %s221, %s223
      %p227 = scmp.eq.s32.totalorder %s19, 0
      %p228 = por %p226, %p227
      %p229 = scmp.ne.s32.totalorder %s221, %s223
      %p230 = scmp.eq.s32.totalorder %s24, 1
      %p231 = por %p229, %p230
      %p232 = scmp.ne.s32.totalorder %s223, %s224
      %p233 = scmp.eq.s32.totalorder %s24, 0
      %p234 = por %p232, %p233
      %p235 = scmp.ne.s32.totalorder %s223, %s224
      %p236 = scmp.eq.s32.totalorder %s25, 1
      %p237 = por %p235, %p236
      %p239 = scmp.ne.s32.totalorder %s224, %s238
      %p240 = scmp.eq.s32.totalorder %s25, 0
      %p241 = por %p239, %p240
      %s243 = sadd.s32 %s242, 1
      %p246 = scmp.eq.s32.totalorder %s19, 1
      %p247 = scmp.ne.s32.totalorder %s242, %s244
      %p248 = scmp.eq.s32.totalorder %s19, 0
      %p249 = por %p247, %p248
      %p250 = scmp.ne.s32.totalorder %s242, %s244
      %p251 = scmp.eq.s32.totalorder %s24, 1
      %p252 = por %p250, %p251
      %p253 = scmp.ne.s32.totalorder %s244, %s245
      %p254 = scmp.eq.s32.totalorder %s24, 0
      %p255 = por %p253, %p254
      %p256 = scmp.ne.s32.totalorder %s244, %s245
      %p257 = scmp.eq.s32.totalorder %s25, 1
      %p258 = por %p256, %p257
      %p260 = scmp.ne.s32.totalorder %s245, %s259
      %p261 = scmp.eq.s32.totalorder %s25, 0
      %p262 = por %p260, %p261
      %s263 = ssub.s32 %s19, %s26
      %p264 = scmp.eq.s32.totalorder %s263, 0
      %s266 = sadd.s32 %s265, 1
      %s267 = scalar_select %p264, %s265, %s266
      %p270 = pneg %p264
      %p271 = scmp.eq.s32.totalorder %s19, 1
      %p272 = por %p270, %p271
      %p273 = scmp.ne.s32.totalorder %s265, %s268
      %p274 = scmp.eq.s32.totalorder %s19, 0
      %p275 = por %p273, %p274
      %p276 = scmp.ne.s32.totalorder %s265, %s268
      %p277 = scmp.eq.s32.totalorder %s24, 1
      %p278 = por %p276, %p277
      %p279 = scmp.ne.s32.totalorder %s268, %s269
      %p280 = scmp.eq.s32.totalorder %s24, 0
      %p281 = por %p279, %p280
      %p282 = scmp.ne.s32.totalorder %s268, %s269
      %p283 = scmp.eq.s32.totalorder %s25, 1
      %p284 = por %p282, %p283
      %p286 = scmp.ne.s32.totalorder %s269, %s285
      %p287 = scmp.eq.s32.totalorder %s25, 0
      %p288 = por %p286, %p287
      %p289 = scmp.le.s32.totalorder 1, %s19
      %p290 = scmp.lt.s32.totalorder %s19, 3
      %p291 = pnand %p289, %p290
      %p292 = pneg %p291
      // Predicated region
      $region9: #{lite_cnn1d_forward.2} parent=5 // pred_check
        _
      $region10: #{lite_cnn1d_forward.2} parent=5 // pred_check_branch
        %294 = sbr.rel (%p291) target = $region12
      $region11: #{lite_cnn1d_forward.2} parent=5 // pred_region
        %s295 = ssub.s32 %s19, 1
        // Predicated region
        $region13: #{lite_cnn1d_forward.2} parent=11 // pred_check
          %p296 = pneg %p66
        $region14: #{lite_cnn1d_forward.2} parent=11 // pred_check_branch
          %298 = sbr.rel (%p296) target = $region16
        $region15: #{lite_cnn1d_forward.2} parent=11 // pred_region
          _
        $region16: #{lite_cnn1d_forward.2} parent=11 // pred_fallthru
          _
        // Predicated region
        $region17: #{lite_cnn1d_forward.2} parent=11 // pred_check
          %p299 = pneg %p87
        $region18: #{lite_cnn1d_forward.2} parent=11 // pred_check_branch
          %301 = sbr.rel (%p299) target = $region20
        $region19: #{lite_cnn1d_forward.2} parent=11 // pred_region
          _
        $region20: #{lite_cnn1d_forward.2} parent=11 // pred_fallthru
          _
        // Predicated region
        $region21: #{lite_cnn1d_forward.2} parent=11 // pred_check
          %p302 = pneg %p108
        $region22: #{lite_cnn1d_forward.2} parent=11 // pred_check_branch
          %304 = sbr.rel (%p302) target = $region24
        $region23: #{lite_cnn1d_forward.2} parent=11 // pred_region
          _
        $region24: #{lite_cnn1d_forward.2} parent=11 // pred_fallthru
          _
        // Predicated region
        $region25: #{lite_cnn1d_forward.2} parent=11 // pred_check
          %p305 = pneg %p129
        $region26: #{lite_cnn1d_forward.2} parent=11 // pred_check_branch
          %307 = sbr.rel (%p305) target = $region28
        $region27: #{lite_cnn1d_forward.2} parent=11 // pred_region
          _
        $region28: #{lite_cnn1d_forward.2} parent=11 // pred_fallthru
          _
        // Predicated region
        $region29: #{lite_cnn1d_forward.2} parent=11 // pred_check
          %p308 = pneg %p150
        $region30: #{lite_cnn1d_forward.2} parent=11 // pred_check_branch
          %310 = sbr.rel (%p308) target = $region32
        $region31: #{lite_cnn1d_forward.2} parent=11 // pred_region
          %312 = vsyncadd [#allocation7], 0
          %s313 = sshll.u32 %s5, 4
          %s314 = int_to_ptr.hbm [resolvable:$true] %s313
          %s315 = sshll.u32 [#allocation6], 4
          %s316 = int_to_ptr.vmem [resolvable:$true] %s315
          %321 = dma.hbm_to_vmem [thread:$0]  %s314, 3072, %s316, [#allocation7], 64, 64, 4
        $region32: #{lite_cnn1d_forward.2} parent=11 // pred_fallthru
          _
        // Predicated region
        $region33: #{lite_cnn1d_forward.2} parent=11 // pred_check
          %p322 = pneg %p171
        $region34: #{lite_cnn1d_forward.2} parent=11 // pred_check_branch
          %324 = sbr.rel (%p322) target = $region36
        $region35: #{lite_cnn1d_forward.2} parent=11 // pred_region
          _
        $region36: #{lite_cnn1d_forward.2} parent=11 // pred_fallthru
          _
        // Predicated region
        $region37: #{lite_cnn1d_forward.2} parent=11 // pred_check
          %p325 = pneg %p192
        $region38: #{lite_cnn1d_forward.2} parent=11 // pred_check_branch
          %327 = sbr.rel (%p325) target = $region40
        $region39: #{lite_cnn1d_forward.2} parent=11 // pred_region
          _
        $region40: #{lite_cnn1d_forward.2} parent=11 // pred_fallthru
          _
        // Predicated region
        $region41: #{lite_cnn1d_forward.2} parent=11 // pred_check
          %p328 = pneg %p213
        $region42: #{lite_cnn1d_forward.2} parent=11 // pred_check_branch
          %330 = sbr.rel (%p328) target = $region44
        $region43: #{lite_cnn1d_forward.2} parent=11 // pred_region
          %332 = vsyncadd [#allocation9], 0
          %s333 = sshll.u32 %s8, 4
          %s334 = int_to_ptr.hbm [resolvable:$true] %s333
          %s335 = sshll.u32 [#allocation8], 4
          %s336 = int_to_ptr.vmem [resolvable:$true] %s335
          %341 = dma.hbm_to_vmem [thread:$0]  %s334, 3072, %s336, [#allocation9], 64, 64, 4
        $region44: #{lite_cnn1d_forward.2} parent=11 // pred_fallthru
          _
        // Predicated region
        $region45: #{lite_cnn1d_forward.2} parent=11 // pred_check
          %p342 = pneg %p234
        $region46: #{lite_cnn1d_forward.2} parent=11 // pred_check_branch
          %344 = sbr.rel (%p342) target = $region48
        $region47: #{lite_cnn1d_forward.2} parent=11 // pred_region
          _
        $region48: #{lite_cnn1d_forward.2} parent=11 // pred_fallthru
          _
        // Predicated region
        $region49: #{lite_cnn1d_forward.2} parent=11 // pred_check
          %p345 = pneg %p255
        $region50: #{lite_cnn1d_forward.2} parent=11 // pred_check_branch
          %347 = sbr.rel (%p345) target = $region52
        $region51: #{lite_cnn1d_forward.2} parent=11 // pred_region
          _
        $region52: #{lite_cnn1d_forward.2} parent=11 // pred_fallthru
          _
      $region12: #{lite_cnn1d_forward.2} parent=5 // pred_fallthru
        _
      %p348 = scmp.lt.s32.totalorder %s19, 2
      // Predicated region
      $region53: #{lite_cnn1d_forward.2} parent=5 // pred_check
        %p349 = pneg %p348
      $region54: #{lite_cnn1d_forward.2} parent=5 // pred_check_branch
        %351 = sbr.rel (%p349) target = $region56
      $region55: #{lite_cnn1d_forward.2} parent=5 // pred_region
        // Predicated region
        $region57: #{lite_cnn1d_forward.2} parent=55 // pred_check
          %p352 = pneg %p39
        $region58: #{lite_cnn1d_forward.2} parent=55 // pred_check_branch
          %354 = sbr.rel (%p352) target = $region60
        $region59: #{lite_cnn1d_forward.2} parent=55 // pred_region
          %p355 = scmp.lt.s32.totalorder %s19, 1
          %s356 = scalar_select %p355, %s19, 1
          %s357 = smul.addr %s356, 8
          %s358 = smul.addr %s357, 8
          %s359 = scalar_lea.vmem %s0, %s358
        $region60: #{lite_cnn1d_forward.2} parent=55 // pred_fallthru
          _
      $region56: #{lite_cnn1d_forward.2} parent=5 // pred_fallthru
        _
      %p360 = scmp.le.s32.totalorder 1, %s19
      %p361 = scmp.lt.s32.totalorder %s19, 3
      %p362 = pnand %p360, %p361
      %p363 = pneg %p362
      // Predicated region
      $region61: #{lite_cnn1d_forward.2} parent=5 // pred_check
        _
      $region62: #{lite_cnn1d_forward.2} parent=5 // pred_check_branch
        %365 = sbr.rel (%p362) target = $region64
      $region63: #{lite_cnn1d_forward.2} parent=5 // pred_region
        %s366 = ssub.s32 %s19, 1
        // Predicated region
        $region65: #{lite_cnn1d_forward.2} parent=63 // pred_check
          %p367 = pneg %p150
        $region66: #{lite_cnn1d_forward.2} parent=63 // pred_check_branch
          %369 = sbr.rel (%p367) target = $region68
        $region67: #{lite_cnn1d_forward.2} parent=63 // pred_region
          %371 = dma.done [#allocation7], 3072
        $region68: #{lite_cnn1d_forward.2} parent=63 // pred_fallthru
          _
        // Predicated region
        $region69: #{lite_cnn1d_forward.2} parent=63 // pred_check
          %p372 = pneg %p213
        $region70: #{lite_cnn1d_forward.2} parent=63 // pred_check_branch
          %374 = sbr.rel (%p372) target = $region72
        $region71: #{lite_cnn1d_forward.2} parent=63 // pred_region
          %376 = dma.done [#allocation9], 3072
        $region72: #{lite_cnn1d_forward.2} parent=63 // pred_fallthru
          _
        %p377 = scmp.lt.s32.totalorder %s24, 1
        %s378 = scalar_select %p377, %s24, 1
        %s379 = smul.addr %s378, 8
        %s380 = smul.addr %s379, 8
        %s381 = scalar_lea.vmem %s0, %s380
        %p382 = pneg %p45
        %p383 = pneg %p42
        %p384 = pneg %p66
        %p385 = pneg %p63
        %p386 = pneg %p87
        %p387 = pneg %p84
        %p388 = pneg %p108
        %p389 = pneg %p105
        %p390 = pneg %p129
        %p391 = pneg %p126
        %p392 = pneg %p150
        %p393 = pneg %p147
        %p394 = pneg %p171
        %p395 = pneg %p168
        %p396 = pneg %p192
        %p397 = pneg %p189
        %p398 = pneg %p213
        %p399 = pneg %p210
        %p400 = pneg %p234
        %p401 = pneg %p231
        %p402 = pneg %p255
        %p403 = pneg %p252
        %p404 = pneg %p281
        %p405 = pneg %p278
        %p406 = scmp.lt.s32.totalorder %s24, 1
        %s407 = scalar_select %p406, %s24, 1
        %s408 = smul.addr %s407, 2
        %s409 = smul.addr %s408, 4
        %s410 = scalar_lea.vmem %s11, %s409
        %p411 = scmp.lt.s32.totalorder %s24, 1
        %s412 = scalar_select %p411, %s24, 1
        %s413 = smul.addr %s412, 8
        %s414 = smul.addr %s413, 8
        %s415 = scalar_lea.vmem %s0, %s414
        %p416 = scmp.lt.s32.totalorder %s24, 1
        %s417 = scalar_select %p416, %s24, 1
        %s418 = smul.addr %s417, 2
        %s419 = smul.addr %s418, 4
        %s420 = scalar_lea.vmem %s11, %s419
        %vm422 = vcmask 18432
        %423 = vst.msk [vmem:[#allocation2] sm:$0x7] %vm422, 0.0
        %424 = vst.msk [vmem:[#allocation2 + $0x43] sm:$0x7] %vm422, 0.0
        %425 = vst [vmem:[#allocation3] sm:$0x1] 0.0
        %426 = vst [vmem:[#allocation3 + $0x41] sm:$0x1] 0.0
        %427 = vst [vmem:[#allocation4] sm:$0x1] 0.0
        %428 = vst [vmem:[#allocation4 + $0x21] sm:$0x1] 0.0
        %v429 = vld [vmem:[%s415] sm:$0xff]
        %v430 = vld [vmem:[%s415 + $0x8] sm:$0xff]
        %v431 = vld [vmem:[%s415 + $0x10] sm:$0xff]
        %v432 = vld [vmem:[%s415 + $0x18] sm:$0xff]
        %v433 = vld [vmem:[%s415 + $0x20] sm:$0xff]
        %v434 = vld [vmem:[%s415 + $0x28] sm:$0xff]
        %v435 = vld [vmem:[%s415 + $0x30] sm:$0xff]
        %v436 = vld [vmem:[%s415 + $0x38] sm:$0xff]
        %vm437 = vcmask 23552
        %438 = vst.msk [vmem:[#allocation2 + $0x3] sm:$0xff] %vm437, %v429
        %439 = vst.msk [vmem:[#allocation2 + $0xb] sm:$0xff] %vm437, %v430
        %440 = vst.msk [vmem:[#allocation2 + $0x13] sm:$0xff] %vm437, %v431
        %441 = vst.msk [vmem:[#allocation2 + $0x1b] sm:$0xff] %vm437, %v432
        %442 = vst.msk [vmem:[#allocation2 + $0x23] sm:$0xff] %vm437, %v433
        %443 = vst.msk [vmem:[#allocation2 + $0x2b] sm:$0xff] %vm437, %v434
        %444 = vst.msk [vmem:[#allocation2 + $0x33] sm:$0xff] %vm437, %v435
        %445 = vst.msk [vmem:[#allocation2 + $0x3b] sm:$0xff] %vm437, %v436
        %v446 = vld [vmem:[#allocation2] sm:$0xff]
        %v447 = vld [vmem:[#allocation2 + $0x8] sm:$0xff]
        %v448 = vld [vmem:[#allocation2 + $0x10] sm:$0xff]
        %v449 = vld [vmem:[#allocation2 + $0x18] sm:$0xff]
        %v450 = vld [vmem:[#allocation2 + $0x20] sm:$0xff]
        %v451 = vld [vmem:[#allocation2 + $0x28] sm:$0xff]
        %v452 = vld [vmem:[#allocation2 + $0x30] sm:$0xff]
        %v453 = vld [vmem:[#allocation2 + $0x38] sm:$0xff]
        %v454 = vpack.c.bf16 %v447, %v446
        %v455 = vpack.c.bf16 %v449, %v448
        %v456 = vpack.c.bf16 %v451, %v450
        %v457 = vpack.c.bf16 %v453, %v452
        %v458 = vld [vmem:[%s1] sm:$0x3]
        %v459 = vld [vmem:[#allocation2 + $0x1] sm:$0xff]
        %v460 = vld [vmem:[#allocation2 + $0x9] sm:$0xff]
        %v461 = vld [vmem:[#allocation2 + $0x11] sm:$0xff]
        %v462 = vld [vmem:[#allocation2 + $0x19] sm:$0xff]
        %v463 = vld [vmem:[#allocation2 + $0x21] sm:$0xff]
        %v464 = vld [vmem:[#allocation2 + $0x29] sm:$0xff]
        %v465 = vld [vmem:[#allocation2 + $0x31] sm:$0xff]
        %v466 = vld [vmem:[#allocation2 + $0x39] sm:$0xff]
        %v467 = vpack.c.bf16 %v460, %v459
        %v468 = vpack.c.bf16 %v462, %v461
        %v469 = vpack.c.bf16 %v464, %v463
        %v470 = vpack.c.bf16 %v466, %v465
        %s471 = scalar_lea.vmem %s1, 2
        %v472 = vld [vmem:[%s471] sm:$0x3]
        %v474 = vsel %vm437, %v467, 0
        %v477 = vsel %vm437, %v468, 0
        %v480 = vsel %vm437, %v469, 0
        %v483 = vsel %vm437, %v470, 0
        %vm485 = vcmask 1040384
        %vm486 = vcmask 1041408
        %v487 = vsel %vm485, 4294967295, 65535
        %v488 = vsel %vm486, %v487, 0
        %v490 = vand.u32 %v472, %v488
        %492 = vmatpush.bf16.msra.mxu0 0
        %493 = vmatpush.bf16.msra.mxu0 0
        %494 = vmatpush.bf16.msra.mxu0 0
        %495 = vmatpush.bf16.msra.mxu0 0
        %496 = vmatpush.bf16.msra.mxu0 0
        %497 = vmatpush.bf16.msra.mxu0 0
        %498 = vmatpush.bf16.msra.mxu0 0
        %499 = vmatpush.bf16.msra.mxu0 %v490
        %500 = vmatmul.bf16.gmra.mxu0 %v474
        %v501 = vpop.f32.mrf.mxu0
        %v502 = vadd.f32 0.0, %v501
        %v503 = vpop.f32.mrf.mxu0
        %v504 = vadd.f32 0.0, %v503
        %505 = vmatmul.bf16.gmra.mxu0 %v477
        %v506 = vpop.f32.mrf.mxu0
        %v507 = vadd.f32 0.0, %v506
        %v508 = vpop.f32.mrf.mxu0
        %v509 = vadd.f32 0.0, %v508
        %510 = vmatmul.bf16.gmra.mxu0 %v480
        %v511 = vpop.f32.mrf.mxu0
        %v512 = vadd.f32 0.0, %v511
        %v513 = vpop.f32.mrf.mxu0
        %v514 = vadd.f32 0.0, %v513
        %515 = vmatmul.bf16.gmra.mxu0 %v483
        %v516 = vpop.f32.mrf.mxu0
        %v517 = vadd.f32 0.0, %v516
        %v518 = vpop.f32.mrf.mxu0
        %v519 = vadd.f32 0.0, %v518
        %520 = vdwg.mxu0
        %v522 = vsel %vm437, %v454, 0
        %v525 = vsel %vm437, %v455, 0
        %v528 = vsel %vm437, %v456, 0
        %v531 = vsel %vm437, %v457, 0
        %v534 = vand.u32 %v458, %v488
        %536 = vmatpush.bf16.msra.mxu0 0
        %537 = vmatpush.bf16.msra.mxu0 0
        %538 = vmatpush.bf16.msra.mxu0 0
        %539 = vmatpush.bf16.msra.mxu0 0
        %540 = vmatpush.bf16.msra.mxu0 0
        %541 = vmatpush.bf16.msra.mxu0 0
        %542 = vmatpush.bf16.msra.mxu0 0
        %543 = vmatpush.bf16.msra.mxu0 %v534
        %544 = vmatmul.bf16.gmra.mxu0 %v522
        %v545 = vpop.f32.mrf.mxu0
        %v546 = vadd.f32 %v502, %v545
        %v547 = vpop.f32.mrf.mxu0
        %v548 = vadd.f32 %v504, %v547
        %549 = vmatmul.bf16.gmra.mxu0 %v525
        %v550 = vpop.f32.mrf.mxu0
        %v551 = vadd.f32 %v507, %v550
        %v552 = vpop.f32.mrf.mxu0
        %v553 = vadd.f32 %v509, %v552
        %554 = vmatmul.bf16.gmra.mxu0 %v528
        %v555 = vpop.f32.mrf.mxu0
        %v556 = vadd.f32 %v512, %v555
        %v557 = vpop.f32.mrf.mxu0
        %v558 = vadd.f32 %v514, %v557
        %559 = vmatmul.bf16.gmra.mxu0 %v531
        %v560 = vpop.f32.mrf.mxu0
        %v561 = vadd.f32 %v517, %v560
        %v562 = vpop.f32.mrf.mxu0
        %v563 = vadd.f32 %v519, %v562
        %564 = vdwg.mxu0
        %v565 = vld [vmem:[#allocation2 + $0x2] sm:$0xff]
        %v566 = vld [vmem:[#allocation2 + $0xa] sm:$0xff]
        %v567 = vld [vmem:[#allocation2 + $0x12] sm:$0xff]
        %v568 = vld [vmem:[#allocation2 + $0x1a] sm:$0xff]
        %v569 = vld [vmem:[#allocation2 + $0x22] sm:$0xff]
        %v570 = vld [vmem:[#allocation2 + $0x2a] sm:$0xff]
        %v571 = vld [vmem:[#allocation2 + $0x32] sm:$0xff]
        %v572 = vld [vmem:[#allocation2 + $0x3a] sm:$0xff]
        %v573 = vpack.c.bf16 %v566, %v565
        %v574 = vpack.c.bf16 %v568, %v567
        %v575 = vpack.c.bf16 %v570, %v569
        %v576 = vpack.c.bf16 %v572, %v571
        %s577 = scalar_lea.vmem %s1, 4
        %v578 = vld [vmem:[%s577] sm:$0x3]
        %v580 = vsel %vm437, %v573, 0
        %v583 = vsel %vm437, %v574, 0
        %v586 = vsel %vm437, %v575, 0
        %v589 = vsel %vm437, %v576, 0
        %v592 = vand.u32 %v578, %v488
        %594 = vmatpush.bf16.msra.mxu0 0
        %595 = vmatpush.bf16.msra.mxu0 0
        %596 = vmatpush.bf16.msra.mxu0 0
        %597 = vmatpush.bf16.msra.mxu0 0
        %598 = vmatpush.bf16.msra.mxu0 0
        %599 = vmatpush.bf16.msra.mxu0 0
        %600 = vmatpush.bf16.msra.mxu0 0
        %601 = vmatpush.bf16.msra.mxu0 %v592
        %602 = vmatmul.bf16.gmra.mxu0 %v580
        %v603 = vpop.f32.mrf.mxu0
        %v604 = vadd.f32 0.0, %v603
        %v605 = vpop.f32.mrf.mxu0
        %v606 = vadd.f32 0.0, %v605
        %607 = vmatmul.bf16.gmra.mxu0 %v583
        %v608 = vpop.f32.mrf.mxu0
        %v609 = vadd.f32 0.0, %v608
        %v610 = vpop.f32.mrf.mxu0
        %v611 = vadd.f32 0.0, %v610
        %612 = vmatmul.bf16.gmra.mxu0 %v586
        %v613 = vpop.f32.mrf.mxu0
        %v614 = vadd.f32 0.0, %v613
        %v615 = vpop.f32.mrf.mxu0
        %v616 = vadd.f32 0.0, %v615
        %617 = vmatmul.bf16.gmra.mxu0 %v589
        %v618 = vpop.f32.mrf.mxu0
        %v619 = vadd.f32 0.0, %v618
        %v620 = vpop.f32.mrf.mxu0
        %v621 = vadd.f32 0.0, %v620
        %622 = vdwg.mxu0
        %v623 = vadd.f32 %v546, %v604
        %v624 = vadd.f32 %v548, %v606
        %v625 = vadd.f32 %v551, %v609
        %v626 = vadd.f32 %v553, %v611
        %v627 = vadd.f32 %v556, %v614
        %v628 = vadd.f32 %v558, %v616
        %v629 = vadd.f32 %v561, %v619
        %v630 = vadd.f32 %v563, %v621
        %v631 = vld [vmem:[#allocation2 + $0x3] sm:$0xff]
        %v632 = vld [vmem:[#allocation2 + $0xb] sm:$0xff]
        %v633 = vld [vmem:[#allocation2 + $0x13] sm:$0xff]
        %v634 = vld [vmem:[#allocation2 + $0x1b] sm:$0xff]
        %v635 = vld [vmem:[#allocation2 + $0x23] sm:$0xff]
        %v636 = vld [vmem:[#allocation2 + $0x2b] sm:$0xff]
        %v637 = vld [vmem:[#allocation2 + $0x33] sm:$0xff]
        %v638 = vld [vmem:[#allocation2 + $0x3b] sm:$0xff]
        %v639 = vpack.c.bf16 %v632, %v631
        %v640 = vpack.c.bf16 %v634, %v633
        %v641 = vpack.c.bf16 %v636, %v635
        %v642 = vpack.c.bf16 %v638, %v637
        %s643 = scalar_lea.vmem %s1, 6
        %v644 = vld [vmem:[%s643] sm:$0x3]
        %v646 = vsel %vm437, %v639, 0
        %v649 = vsel %vm437, %v640, 0
        %v652 = vsel %vm437, %v641, 0
        %v655 = vsel %vm437, %v642, 0
        %v658 = vand.u32 %v644, %v488
        %660 = vmatpush.bf16.msra.mxu0 0
        %661 = vmatpush.bf16.msra.mxu0 0
        %662 = vmatpush.bf16.msra.mxu0 0
        %663 = vmatpush.bf16.msra.mxu0 0
        %664 = vmatpush.bf16.msra.mxu0 0
        %665 = vmatpush.bf16.msra.mxu0 0
        %666 = vmatpush.bf16.msra.mxu0 0
        %667 = vmatpush.bf16.msra.mxu0 %v658
        %668 = vmatmul.bf16.gmra.mxu0 %v646
        %v669 = vpop.f32.mrf.mxu0
        %v670 = vadd.f32 0.0, %v669
        %v671 = vpop.f32.mrf.mxu0
        %v672 = vadd.f32 0.0, %v671
        %673 = vmatmul.bf16.gmra.mxu0 %v649
        %v674 = vpop.f32.mrf.mxu0
        %v675 = vadd.f32 0.0, %v674
        %v676 = vpop.f32.mrf.mxu0
        %v677 = vadd.f32 0.0, %v676
        %678 = vmatmul.bf16.gmra.mxu0 %v652
        %v679 = vpop.f32.mrf.mxu0
        %v680 = vadd.f32 0.0, %v679
        %v681 = vpop.f32.mrf.mxu0
        %v682 = vadd.f32 0.0, %v681
        %683 = vmatmul.bf16.gmra.mxu0 %v655
        %v684 = vpop.f32.mrf.mxu0
        %v685 = vadd.f32 0.0, %v684
        %v686 = vpop.f32.mrf.mxu0
        %v687 = vadd.f32 0.0, %v686
        %688 = vdwg.mxu0
        %v689 = vadd.f32 %v623, %v670
        %v690 = vadd.f32 %v624, %v672
        %v691 = vadd.f32 %v625, %v675
        %v692 = vadd.f32 %v626, %v677
        %v693 = vadd.f32 %v627, %v680
        %v694 = vadd.f32 %v628, %v682
        %v695 = vadd.f32 %v629, %v685
        %v696 = vadd.f32 %v630, %v687
        %v697 = vld [vmem:[#allocation2 + $0x4] sm:$0xff]
        %v698 = vld [vmem:[#allocation2 + $0xc] sm:$0xff]
        %v699 = vld [vmem:[#allocation2 + $0x14] sm:$0xff]
        %v700 = vld [vmem:[#allocation2 + $0x1c] sm:$0xff]
        %v701 = vld [vmem:[#allocation2 + $0x24] sm:$0xff]
        %v702 = vld [vmem:[#allocation2 + $0x2c] sm:$0xff]
        %v703 = vld [vmem:[#allocation2 + $0x34] sm:$0xff]
        %v704 = vld [vmem:[#allocation2 + $0x3c] sm:$0xff]
        %v705 = vpack.c.bf16 %v698, %v697
        %v706 = vpack.c.bf16 %v700, %v699
        %v707 = vpack.c.bf16 %v702, %v701
        %v708 = vpack.c.bf16 %v704, %v703
        %s709 = scalar_lea.vmem %s1, 8
        %v710 = vld [vmem:[%s709] sm:$0x3]
        %v712 = vsel %vm437, %v705, 0
        %v715 = vsel %vm437, %v706, 0
        %v718 = vsel %vm437, %v707, 0
        %v721 = vsel %vm437, %v708, 0
        %v724 = vand.u32 %v710, %v488
        %726 = vmatpush.bf16.msra.mxu0 0
        %727 = vmatpush.bf16.msra.mxu0 0
        %728 = vmatpush.bf16.msra.mxu0 0
        %729 = vmatpush.bf16.msra.mxu0 0
        %730 = vmatpush.bf16.msra.mxu0 0
        %731 = vmatpush.bf16.msra.mxu0 0
        %732 = vmatpush.bf16.msra.mxu0 0
        %733 = vmatpush.bf16.msra.mxu0 %v724
        %734 = vmatmul.bf16.gmra.mxu0 %v712
        %v735 = vpop.f32.mrf.mxu0
        %v736 = vadd.f32 0.0, %v735
        %v737 = vpop.f32.mrf.mxu0
        %v738 = vadd.f32 0.0, %v737
        %739 = vmatmul.bf16.gmra.mxu0 %v715
        %v740 = vpop.f32.mrf.mxu0
        %v741 = vadd.f32 0.0, %v740
        %v742 = vpop.f32.mrf.mxu0
        %v743 = vadd.f32 0.0, %v742
        %744 = vmatmul.bf16.gmra.mxu0 %v718
        %v745 = vpop.f32.mrf.mxu0
        %v746 = vadd.f32 0.0, %v745
        %v747 = vpop.f32.mrf.mxu0
        %v748 = vadd.f32 0.0, %v747
        %749 = vmatmul.bf16.gmra.mxu0 %v721
        %v750 = vpop.f32.mrf.mxu0
        %v751 = vadd.f32 0.0, %v750
        %v752 = vpop.f32.mrf.mxu0
        %v753 = vadd.f32 0.0, %v752
        %754 = vdwg.mxu0
        %v755 = vadd.f32 %v689, %v736
        %v756 = vadd.f32 %v690, %v738
        %v757 = vadd.f32 %v691, %v741
        %v758 = vadd.f32 %v692, %v743
        %v759 = vadd.f32 %v693, %v746
        %v760 = vadd.f32 %v694, %v748
        %v761 = vadd.f32 %v695, %v751
        %v762 = vadd.f32 %v696, %v753
        %v763 = vld [vmem:[#allocation2 + $0x5] sm:$0xff]
        %v764 = vld [vmem:[#allocation2 + $0xd] sm:$0xff]
        %v765 = vld [vmem:[#allocation2 + $0x15] sm:$0xff]
        %v766 = vld [vmem:[#allocation2 + $0x1d] sm:$0xff]
        %v767 = vld [vmem:[#allocation2 + $0x25] sm:$0xff]
        %v768 = vld [vmem:[#allocation2 + $0x2d] sm:$0xff]
        %v769 = vld [vmem:[#allocation2 + $0x35] sm:$0xff]
        %v770 = vld [vmem:[#allocation2 + $0x3d] sm:$0xff]
        %v771 = vpack.c.bf16 %v764, %v763
        %v772 = vpack.c.bf16 %v766, %v765
        %v773 = vpack.c.bf16 %v768, %v767
        %v774 = vpack.c.bf16 %v770, %v769
        %s775 = scalar_lea.vmem %s1, 10
        %v776 = vld [vmem:[%s775] sm:$0x3]
        %v778 = vsel %vm437, %v771, 0
        %v781 = vsel %vm437, %v772, 0
        %v784 = vsel %vm437, %v773, 0
        %v787 = vsel %vm437, %v774, 0
        %v790 = vand.u32 %v776, %v488
        %792 = vmatpush.bf16.msra.mxu0 0
        %793 = vmatpush.bf16.msra.mxu0 0
        %794 = vmatpush.bf16.msra.mxu0 0
        %795 = vmatpush.bf16.msra.mxu0 0
        %796 = vmatpush.bf16.msra.mxu0 0
        %797 = vmatpush.bf16.msra.mxu0 0
        %798 = vmatpush.bf16.msra.mxu0 0
        %799 = vmatpush.bf16.msra.mxu0 %v790
        %800 = vmatmul.bf16.gmra.mxu0 %v778
        %v801 = vpop.f32.mrf.mxu0
        %v802 = vadd.f32 0.0, %v801
        %v803 = vpop.f32.mrf.mxu0
        %v804 = vadd.f32 0.0, %v803
        %805 = vmatmul.bf16.gmra.mxu0 %v781
        %v806 = vpop.f32.mrf.mxu0
        %v807 = vadd.f32 0.0, %v806
        %v808 = vpop.f32.mrf.mxu0
        %v809 = vadd.f32 0.0, %v808
        %810 = vmatmul.bf16.gmra.mxu0 %v784
        %v811 = vpop.f32.mrf.mxu0
        %v812 = vadd.f32 0.0, %v811
        %v813 = vpop.f32.mrf.mxu0
        %v814 = vadd.f32 0.0, %v813
        %815 = vmatmul.bf16.gmra.mxu0 %v787
        %v816 = vpop.f32.mrf.mxu0
        %v817 = vadd.f32 0.0, %v816
        %v818 = vpop.f32.mrf.mxu0
        %v819 = vadd.f32 0.0, %v818
        %820 = vdwg.mxu0
        %v821 = vadd.f32 %v755, %v802
        %v822 = vadd.f32 %v756, %v804
        %v823 = vadd.f32 %v757, %v807
        %v824 = vadd.f32 %v758, %v809
        %v825 = vadd.f32 %v759, %v812
        %v826 = vadd.f32 %v760, %v814
        %v827 = vadd.f32 %v761, %v817
        %v828 = vadd.f32 %v762, %v819
        %v829 = vld [vmem:[#allocation2 + $0x6] sm:$0xff]
        %v830 = vld [vmem:[#allocation2 + $0xe] sm:$0xff]
        %v831 = vld [vmem:[#allocation2 + $0x16] sm:$0xff]
        %v832 = vld [vmem:[#allocation2 + $0x1e] sm:$0xff]
        %v833 = vld [vmem:[#allocation2 + $0x26] sm:$0xff]
        %v834 = vld [vmem:[#allocation2 + $0x2e] sm:$0xff]
        %v835 = vld [vmem:[#allocation2 + $0x36] sm:$0xff]
        %v836 = vld [vmem:[#allocation2 + $0x3e] sm:$0xff]
        %v837 = vpack.c.bf16 %v830, %v829
        %v838 = vpack.c.bf16 %v832, %v831
        %v839 = vpack.c.bf16 %v834, %v833
        %v840 = vpack.c.bf16 %v836, %v835
        %s841 = scalar_lea.vmem %s1, 12
        %v842 = vld [vmem:[%s841] sm:$0x3]
        %v844 = vsel %vm437, %v837, 0
        %v847 = vsel %vm437, %v838, 0
        %v850 = vsel %vm437, %v839, 0
        %v853 = vsel %vm437, %v840, 0
        %v856 = vand.u32 %v842, %v488
        %858 = vmatpush.bf16.msra.mxu0 0
        %859 = vmatpush.bf16.msra.mxu0 0
        %860 = vmatpush.bf16.msra.mxu0 0
        %861 = vmatpush.bf16.msra.mxu0 0
        %862 = vmatpush.bf16.msra.mxu0 0
        %863 = vmatpush.bf16.msra.mxu0 0
        %864 = vmatpush.bf16.msra.mxu0 0
        %865 = vmatpush.bf16.msra.mxu0 %v856
        %866 = vmatmul.bf16.gmra.mxu0 %v844
        %v867 = vpop.f32.mrf.mxu0
        %v868 = vadd.f32 0.0, %v867
        %v869 = vpop.f32.mrf.mxu0
        %v870 = vadd.f32 0.0, %v869
        %871 = vmatmul.bf16.gmra.mxu0 %v847
        %v872 = vpop.f32.mrf.mxu0
        %v873 = vadd.f32 0.0, %v872
        %v874 = vpop.f32.mrf.mxu0
        %v875 = vadd.f32 0.0, %v874
        %876 = vmatmul.bf16.gmra.mxu0 %v850
        %v877 = vpop.f32.mrf.mxu0
        %v878 = vadd.f32 0.0, %v877
        %v879 = vpop.f32.mrf.mxu0
        %v880 = vadd.f32 0.0, %v879
        %881 = vmatmul.bf16.gmra.mxu0 %v853
        %v882 = vpop.f32.mrf.mxu0
        %v883 = vadd.f32 0.0, %v882
        %v884 = vpop.f32.mrf.mxu0
        %v885 = vadd.f32 0.0, %v884
        %886 = vdwg.mxu0
        %v887 = vadd.f32 %v821, %v868
        %v888 = vadd.f32 %v822, %v870
        %v889 = vadd.f32 %v823, %v873
        %v890 = vadd.f32 %v824, %v875
        %v891 = vadd.f32 %v825, %v878
        %v892 = vadd.f32 %v826, %v880
        %v893 = vadd.f32 %v827, %v883
        %v894 = vadd.f32 %v828, %v885
        %v895 = vld [vmem:[%s2] sm:$0x1]
        %v897 = vperm.slane %v895, 0
        %v899 = vadd.f32 %v887, %v897
        %v900 = vadd.f32 %v888, %v897
        %v901 = vadd.f32 %v889, %v897
        %v902 = vadd.f32 %v890, %v897
        %v903 = vadd.f32 %v891, %v897
        %v904 = vadd.f32 %v892, %v897
        %v905 = vadd.f32 %v893, %v897
        %v906 = vadd.f32 %v894, %v897
        %v907 = vmax.f32 %v899, 0.0
        %v908 = vmax.f32 %v900, 0.0
        %v909 = vmax.f32 %v901, 0.0
        %v910 = vmax.f32 %v902, 0.0
        %v911 = vmax.f32 %v903, 0.0
        %v912 = vmax.f32 %v904, 0.0
        %v913 = vmax.f32 %v905, 0.0
        %v914 = vmax.f32 %v906, 0.0
        %v915 = vld [vmem:[%s3] sm:$0x1]
        %v917 = vperm.slane %v915, 0
        %v919 = vmul.f32 %v907, %v917
        %v920 = vmul.f32 %v908, %v917
        %v921 = vmul.f32 %v909, %v917
        %v922 = vmul.f32 %v910, %v917
        %v923 = vmul.f32 %v911, %v917
        %v924 = vmul.f32 %v912, %v917
        %v925 = vmul.f32 %v913, %v917
        %v926 = vmul.f32 %v914, %v917
        %v927 = vld [vmem:[%s4] sm:$0x1]
        %v929 = vperm.slane %v927, 0
        %v931 = vadd.f32 %v919, %v929
        %v932 = vadd.f32 %v920, %v929
        %v933 = vadd.f32 %v921, %v929
        %v934 = vadd.f32 %v922, %v929
        %v935 = vadd.f32 %v923, %v929
        %v936 = vadd.f32 %v924, %v929
        %v937 = vadd.f32 %v925, %v929
        %v938 = vadd.f32 %v926, %v929
        %939 = vst [vmem:[#allocation3 + $0x1] sm:$0xff] %v931
        %940 = vst [vmem:[#allocation3 + $0x9] sm:$0xff] %v932
        %941 = vst [vmem:[#allocation3 + $0x11] sm:$0xff] %v933
        %942 = vst [vmem:[#allocation3 + $0x19] sm:$0xff] %v934
        %943 = vst [vmem:[#allocation3 + $0x21] sm:$0xff] %v935
        %944 = vst [vmem:[#allocation3 + $0x29] sm:$0xff] %v936
        %945 = vst [vmem:[#allocation3 + $0x31] sm:$0xff] %v937
        %946 = vst [vmem:[#allocation3 + $0x39] sm:$0xff] %v938
        %v947 = vld [vmem:[#allocation3] sm:$0xff]
        %v948 = vld [vmem:[#allocation3 + $0x8] sm:$0xff]
        %v949 = vld [vmem:[#allocation3 + $0x10] sm:$0xff]
        %v950 = vld [vmem:[#allocation3 + $0x18] sm:$0xff]
        %v951 = vld [vmem:[#allocation3 + $0x20] sm:$0xff]
        %v952 = vld [vmem:[#allocation3 + $0x28] sm:$0xff]
        %v953 = vld [vmem:[#allocation3 + $0x30] sm:$0xff]
        %v954 = vld [vmem:[#allocation3 + $0x38] sm:$0xff]
        %v955 = vpack.c.bf16 %v948, %v947
        %v956 = vpack.c.bf16 %v950, %v949
        %v957 = vpack.c.bf16 %v952, %v951
        %v958 = vpack.c.bf16 %v954, %v953
        %v959 = vld [vmem:[#allocation6] sm:$0xf]
        %v960 = vld [vmem:[#allocation6 + $0x4] sm:$0xf]
        %v961 = vld [vmem:[#allocation6 + $0x8] sm:$0xf]
        %v962 = vld [vmem:[#allocation6 + $0xc] sm:$0xf]
        %v963 = vld [vmem:[#allocation6 + $0x10] sm:$0xf]
        %v964 = vld [vmem:[#allocation6 + $0x14] sm:$0xf]
        %v965 = vld [vmem:[#allocation6 + $0x18] sm:$0xf]
        %v966 = vld [vmem:[#allocation6 + $0x1c] sm:$0xf]
        %v967 = vld [vmem:[#allocation6 + $0x20] sm:$0xf]
        %v968 = vld [vmem:[#allocation6 + $0x24] sm:$0xf]
        %v969 = vld [vmem:[#allocation6 + $0x28] sm:$0xf]
        %v970 = vld [vmem:[#allocation6 + $0x2c] sm:$0xf]
        %v971 = vld [vmem:[#allocation6 + $0x30] sm:$0xf]
        %v972 = vld [vmem:[#allocation6 + $0x34] sm:$0xf]
        %v973 = vld [vmem:[#allocation6 + $0x38] sm:$0xf]
        %v974 = vld [vmem:[#allocation6 + $0x3c] sm:$0xf]
        %v975 = vld [vmem:[#allocation3 + $0x1] sm:$0xff]
        %v976 = vld [vmem:[#allocation3 + $0x9] sm:$0xff]
        %v977 = vld [vmem:[#allocation3 + $0x11] sm:$0xff]
        %v978 = vld [vmem:[#allocation3 + $0x19] sm:$0xff]
        %v979 = vld [vmem:[#allocation3 + $0x21] sm:$0xff]
        %v980 = vld [vmem:[#allocation3 + $0x29] sm:$0xff]
        %v981 = vld [vmem:[#allocation3 + $0x31] sm:$0xff]
        %v982 = vld [vmem:[#allocation3 + $0x39] sm:$0xff]
        %v983 = vpack.c.bf16 %v976, %v975
        %v984 = vpack.c.bf16 %v978, %v977
        %v985 = vpack.c.bf16 %v980, %v979
        %v986 = vpack.c.bf16 %v982, %v981
        %s987 = scalar_lea.vmem [#allocation6], 64
        %v988 = vld [vmem:[%s987] sm:$0xf]
        %v989 = vld [vmem:[%s987 + $0x4] sm:$0xf]
        %v990 = vld [vmem:[%s987 + $0x8] sm:$0xf]
        %v991 = vld [vmem:[%s987 + $0xc] sm:$0xf]
        %v992 = vld [vmem:[%s987 + $0x10] sm:$0xf]
        %v993 = vld [vmem:[%s987 + $0x14] sm:$0xf]
        %v994 = vld [vmem:[%s987 + $0x18] sm:$0xf]
        %v995 = vld [vmem:[%s987 + $0x1c] sm:$0xf]
        %v996 = vld [vmem:[%s987 + $0x20] sm:$0xf]
        %v997 = vld [vmem:[%s987 + $0x24] sm:$0xf]
        %v998 = vld [vmem:[%s987 + $0x28] sm:$0xf]
        %v999 = vld [vmem:[%s987 + $0x2c] sm:$0xf]
        %v1000 = vld [vmem:[%s987 + $0x30] sm:$0xf]
        %v1001 = vld [vmem:[%s987 + $0x34] sm:$0xf]
        %v1002 = vld [vmem:[%s987 + $0x38] sm:$0xf]
        %v1003 = vld [vmem:[%s987 + $0x3c] sm:$0xf]
        %v1020 = vunpack.c.l.b16 %v988
        %v1021 = vunpack.c.l.b16 %v989
        %v1022 = vunpack.c.l.b16 %v990
        %v1023 = vunpack.c.l.b16 %v991
        %v1024 = vunpack.c.l.b16 %v992
        %v1025 = vunpack.c.l.b16 %v993
        %v1026 = vunpack.c.l.b16 %v994
        %v1027 = vunpack.c.l.b16 %v995
        %v1028 = vunpack.c.l.b16 %v996
        %v1029 = vunpack.c.l.b16 %v997
        %v1030 = vunpack.c.l.b16 %v998
        %v1031 = vunpack.c.l.b16 %v999
        %v1032 = vunpack.c.l.b16 %v1000
        %v1033 = vunpack.c.l.b16 %v1001
        %v1034 = vunpack.c.l.b16 %v1002
        %v1035 = vunpack.c.l.b16 %v1003
        %v1036 = vpack.c.b16 %v1021, %v1020
        %v1037 = vpack.c.b16 %v1023, %v1022
        %v1038 = vpack.c.b16 %v1025, %v1024
        %v1039 = vpack.c.b16 %v1027, %v1026
        %v1040 = vpack.c.b16 %v1029, %v1028
        %v1041 = vpack.c.b16 %v1031, %v1030
        %v1042 = vpack.c.b16 %v1033, %v1032
        %v1043 = vpack.c.b16 %v1035, %v1034
        %1052 = vmatpush.bf16.msra.mxu0 %v1043
        %1053 = vmatpush.bf16.msra.mxu0 %v1042
        %1054 = vmatpush.bf16.msra.mxu0 %v1041
        %1055 = vmatpush.bf16.msra.mxu0 %v1040
        %1056 = vmatpush.bf16.msra.mxu0 %v1039
        %1057 = vmatpush.bf16.msra.mxu0 %v1038
        %1058 = vmatpush.bf16.msra.mxu0 %v1037
        %1059 = vmatpush.bf16.msra.mxu0 %v1036
        %1060 = vmatmul.bf16.gmra.mxu0 %v983
        %v1061 = vpop.f32.mrf.mxu0
        %v1062 = vadd.f32 0.0, %v1061
        %v1063 = vpop.f32.mrf.mxu0
        %v1064 = vadd.f32 0.0, %v1063
        %1065 = vmatmul.bf16.gmra.mxu0 %v984
        %v1066 = vpop.f32.mrf.mxu0
        %v1067 = vadd.f32 0.0, %v1066
        %v1068 = vpop.f32.mrf.mxu0
        %v1069 = vadd.f32 0.0, %v1068
        %1070 = vmatmul.bf16.gmra.mxu0 %v985
        %v1071 = vpop.f32.mrf.mxu0
        %v1072 = vadd.f32 0.0, %v1071
        %v1073 = vpop.f32.mrf.mxu0
        %v1074 = vadd.f32 0.0, %v1073
        %1075 = vmatmul.bf16.gmra.mxu0 %v986
        %v1076 = vpop.f32.mrf.mxu0
        %v1077 = vadd.f32 0.0, %v1076
        %v1078 = vpop.f32.mrf.mxu0
        %v1079 = vadd.f32 0.0, %v1078
        %1080 = vdwg.mxu0
        %v1097 = vunpack.c.l.b16 %v959
        %v1098 = vunpack.c.l.b16 %v960
        %v1099 = vunpack.c.l.b16 %v961
        %v1100 = vunpack.c.l.b16 %v962
        %v1101 = vunpack.c.l.b16 %v963
        %v1102 = vunpack.c.l.b16 %v964
        %v1103 = vunpack.c.l.b16 %v965
        %v1104 = vunpack.c.l.b16 %v966
        %v1105 = vunpack.c.l.b16 %v967
        %v1106 = vunpack.c.l.b16 %v968
        %v1107 = vunpack.c.l.b16 %v969
        %v1108 = vunpack.c.l.b16 %v970
        %v1109 = vunpack.c.l.b16 %v971
        %v1110 = vunpack.c.l.b16 %v972
        %v1111 = vunpack.c.l.b16 %v973
        %v1112 = vunpack.c.l.b16 %v974
        %v1113 = vpack.c.b16 %v1098, %v1097
        %v1114 = vpack.c.b16 %v1100, %v1099
        %v1115 = vpack.c.b16 %v1102, %v1101
        %v1116 = vpack.c.b16 %v1104, %v1103
        %v1117 = vpack.c.b16 %v1106, %v1105
        %v1118 = vpack.c.b16 %v1108, %v1107
        %v1119 = vpack.c.b16 %v1110, %v1109
        %v1120 = vpack.c.b16 %v1112, %v1111
        %1129 = vmatpush.bf16.msra.mxu0 %v1120
        %1130 = vmatpush.bf16.msra.mxu0 %v1119
        %1131 = vmatpush.bf16.msra.mxu0 %v1118
        %1132 = vmatpush.bf16.msra.mxu0 %v1117
        %1133 = vmatpush.bf16.msra.mxu0 %v1116
        %1134 = vmatpush.bf16.msra.mxu0 %v1115
        %1135 = vmatpush.bf16.msra.mxu0 %v1114
        %1136 = vmatpush.bf16.msra.mxu0 %v1113
        %1137 = vmatmul.bf16.gmra.mxu0 %v955
        %v1138 = vpop.f32.mrf.mxu0
        %v1139 = vadd.f32 %v1062, %v1138
        %v1140 = vpop.f32.mrf.mxu0
        %v1141 = vadd.f32 %v1064, %v1140
        %1142 = vmatmul.bf16.gmra.mxu0 %v956
        %v1143 = vpop.f32.mrf.mxu0
        %v1144 = vadd.f32 %v1067, %v1143
        %v1145 = vpop.f32.mrf.mxu0
        %v1146 = vadd.f32 %v1069, %v1145
        %1147 = vmatmul.bf16.gmra.mxu0 %v957
        %v1148 = vpop.f32.mrf.mxu0
        %v1149 = vadd.f32 %v1072, %v1148
        %v1150 = vpop.f32.mrf.mxu0
        %v1151 = vadd.f32 %v1074, %v1150
        %1152 = vmatmul.bf16.gmra.mxu0 %v958
        %v1153 = vpop.f32.mrf.mxu0
        %v1154 = vadd.f32 %v1077, %v1153
        %v1155 = vpop.f32.mrf.mxu0
        %v1156 = vadd.f32 %v1079, %v1155
        %1157 = vdwg.mxu0
        %v1158 = vld [vmem:[#allocation3 + $0x2] sm:$0xff]
        %v1159 = vld [vmem:[#allocation3 + $0xa] sm:$0xff]
        %v1160 = vld [vmem:[#allocation3 + $0x12] sm:$0xff]
        %v1161 = vld [vmem:[#allocation3 + $0x1a] sm:$0xff]
        %v1162 = vld [vmem:[#allocation3 + $0x22] sm:$0xff]
        %v1163 = vld [vmem:[#allocation3 + $0x2a] sm:$0xff]
        %v1164 = vld [vmem:[#allocation3 + $0x32] sm:$0xff]
        %v1165 = vld [vmem:[#allocation3 + $0x3a] sm:$0xff]
        %v1166 = vpack.c.bf16 %v1159, %v1158
        %v1167 = vpack.c.bf16 %v1161, %v1160
        %v1168 = vpack.c.bf16 %v1163, %v1162
        %v1169 = vpack.c.bf16 %v1165, %v1164
        %s1170 = scalar_lea.vmem [#allocation6], 128
        %v1171 = vld [vmem:[%s1170] sm:$0xf]
        %v1172 = vld [vmem:[%s1170 + $0x4] sm:$0xf]
        %v1173 = vld [vmem:[%s1170 + $0x8] sm:$0xf]
        %v1174 = vld [vmem:[%s1170 + $0xc] sm:$0xf]
        %v1175 = vld [vmem:[%s1170 + $0x10] sm:$0xf]
        %v1176 = vld [vmem:[%s1170 + $0x14] sm:$0xf]
        %v1177 = vld [vmem:[%s1170 + $0x18] sm:$0xf]
        %v1178 = vld [vmem:[%s1170 + $0x1c] sm:$0xf]
        %v1179 = vld [vmem:[%s1170 + $0x20] sm:$0xf]
        %v1180 = vld [vmem:[%s1170 + $0x24] sm:$0xf]
        %v1181 = vld [vmem:[%s1170 + $0x28] sm:$0xf]
        %v1182 = vld [vmem:[%s1170 + $0x2c] sm:$0xf]
        %v1183 = vld [vmem:[%s1170 + $0x30] sm:$0xf]
        %v1184 = vld [vmem:[%s1170 + $0x34] sm:$0xf]
        %v1185 = vld [vmem:[%s1170 + $0x38] sm:$0xf]
        %v1186 = vld [vmem:[%s1170 + $0x3c] sm:$0xf]
        %v1203 = vunpack.c.l.b16 %v1171
        %v1204 = vunpack.c.l.b16 %v1172
        %v1205 = vunpack.c.l.b16 %v1173
        %v1206 = vunpack.c.l.b16 %v1174
        %v1207 = vunpack.c.l.b16 %v1175
        %v1208 = vunpack.c.l.b16 %v1176
        %v1209 = vunpack.c.l.b16 %v1177
        %v1210 = vunpack.c.l.b16 %v1178
        %v1211 = vunpack.c.l.b16 %v1179
        %v1212 = vunpack.c.l.b16 %v1180
        %v1213 = vunpack.c.l.b16 %v1181
        %v1214 = vunpack.c.l.b16 %v1182
        %v1215 = vunpack.c.l.b16 %v1183
        %v1216 = vunpack.c.l.b16 %v1184
        %v1217 = vunpack.c.l.b16 %v1185
        %v1218 = vunpack.c.l.b16 %v1186
        %v1219 = vpack.c.b16 %v1204, %v1203
        %v1220 = vpack.c.b16 %v1206, %v1205
        %v1221 = vpack.c.b16 %v1208, %v1207
        %v1222 = vpack.c.b16 %v1210, %v1209
        %v1223 = vpack.c.b16 %v1212, %v1211
        %v1224 = vpack.c.b16 %v1214, %v1213
        %v1225 = vpack.c.b16 %v1216, %v1215
        %v1226 = vpack.c.b16 %v1218, %v1217
        %1235 = vmatpush.bf16.msra.mxu0 %v1226
        %1236 = vmatpush.bf16.msra.mxu0 %v1225
        %1237 = vmatpush.bf16.msra.mxu0 %v1224
        %1238 = vmatpush.bf16.msra.mxu0 %v1223
        %1239 = vmatpush.bf16.msra.mxu0 %v1222
        %1240 = vmatpush.bf16.msra.mxu0 %v1221
        %1241 = vmatpush.bf16.msra.mxu0 %v1220
        %1242 = vmatpush.bf16.msra.mxu0 %v1219
        %1243 = vmatmul.bf16.gmra.mxu0 %v1166
        %v1244 = vpop.f32.mrf.mxu0
        %v1245 = vadd.f32 0.0, %v1244
        %v1246 = vpop.f32.mrf.mxu0
        %v1247 = vadd.f32 0.0, %v1246
        %1248 = vmatmul.bf16.gmra.mxu0 %v1167
        %v1249 = vpop.f32.mrf.mxu0
        %v1250 = vadd.f32 0.0, %v1249
        %v1251 = vpop.f32.mrf.mxu0
        %v1252 = vadd.f32 0.0, %v1251
        %1253 = vmatmul.bf16.gmra.mxu0 %v1168
        %v1254 = vpop.f32.mrf.mxu0
        %v1255 = vadd.f32 0.0, %v1254
        %v1256 = vpop.f32.mrf.mxu0
        %v1257 = vadd.f32 0.0, %v1256
        %1258 = vmatmul.bf16.gmra.mxu0 %v1169
        %v1259 = vpop.f32.mrf.mxu0
        %v1260 = vadd.f32 0.0, %v1259
        %v1261 = vpop.f32.mrf.mxu0
        %v1262 = vadd.f32 0.0, %v1261
        %1263 = vdwg.mxu0
        %v1264 = vadd.f32 %v1139, %v1245
        %v1265 = vadd.f32 %v1141, %v1247
        %v1266 = vadd.f32 %v1144, %v1250
        %v1267 = vadd.f32 %v1146, %v1252
        %v1268 = vadd.f32 %v1149, %v1255
        %v1269 = vadd.f32 %v1151, %v1257
        %v1270 = vadd.f32 %v1154, %v1260
        %v1271 = vadd.f32 %v1156, %v1262
        %v1272 = vld [vmem:[%s6] sm:$0x1]
        %v1274 = vperm.slane %v1272, 0
        %v1276 = vmul.f32 %v1264, %v1274
        %v1277 = vmul.f32 %v1265, %v1274
        %v1278 = vmul.f32 %v1266, %v1274
        %v1279 = vmul.f32 %v1267, %v1274
        %v1280 = vmul.f32 %v1268, %v1274
        %v1281 = vmul.f32 %v1269, %v1274
        %v1282 = vmul.f32 %v1270, %v1274
        %v1283 = vmul.f32 %v1271, %v1274
        %v1284 = vld [vmem:[%s7] sm:$0x1]
        %v1286 = vperm.slane %v1284, 0
        %v1288 = vadd.f32 %v1276, %v1286
        %v1289 = vadd.f32 %v1277, %v1286
        %v1290 = vadd.f32 %v1278, %v1286
        %v1291 = vadd.f32 %v1279, %v1286
        %v1292 = vadd.f32 %v1280, %v1286
        %v1293 = vadd.f32 %v1281, %v1286
        %v1294 = vadd.f32 %v1282, %v1286
        %v1295 = vadd.f32 %v1283, %v1286
        %v1296 = vmax.f32 %v1288, 0.0
        %v1297 = vmax.f32 %v1289, 0.0
        %v1298 = vmax.f32 %v1290, 0.0
        %v1299 = vmax.f32 %v1291, 0.0
        %v1300 = vmax.f32 %v1292, 0.0
        %v1301 = vmax.f32 %v1293, 0.0
        %v1302 = vmax.f32 %v1294, 0.0
        %v1303 = vmax.f32 %v1295, 0.0
        %1304 = vst [vmem:[#allocation5] sm:$0xff] %v1296
        %1305 = vst [vmem:[#allocation5 + $0x8] sm:$0xff] %v1297
        %1306 = vst [vmem:[#allocation5 + $0x10] sm:$0xff] %v1298
        %1307 = vst [vmem:[#allocation5 + $0x18] sm:$0xff] %v1299
        %1308 = vst [vmem:[#allocation5 + $0x20] sm:$0xff] %v1300
        %1309 = vst [vmem:[#allocation5 + $0x28] sm:$0xff] %v1301
        %1310 = vst [vmem:[#allocation5 + $0x30] sm:$0xff] %v1302
        %1311 = vst [vmem:[#allocation5 + $0x38] sm:$0xff] %v1303
        %v1312 = vld [vmem:[#allocation5] ss:$2 sm:$0xff]
        %s1313 = scalar_lea.vmem [#allocation5], 16
        %v1314 = vld [vmem:[%s1313] ss:$2 sm:$0xff]
        %s1315 = scalar_lea.vmem [#allocation5], 32
        %v1316 = vld [vmem:[%s1315] ss:$2 sm:$0xff]
        %s1317 = scalar_lea.vmem [#allocation5], 48
        %v1318 = vld [vmem:[%s1317] ss:$2 sm:$0xff]
        %s1319 = scalar_lea.vmem [#allocation5], 1
        %v1320 = vld [vmem:[%s1319] ss:$2 sm:$0xff]
        %s1321 = scalar_lea.vmem [#allocation5], 17
        %v1322 = vld [vmem:[%s1321] ss:$2 sm:$0xff]
        %s1323 = scalar_lea.vmem [#allocation5], 33
        %v1324 = vld [vmem:[%s1323] ss:$2 sm:$0xff]
        %s1325 = scalar_lea.vmem [#allocation5], 49
        %v1326 = vld [vmem:[%s1325] ss:$2 sm:$0xff]
        %v1327 = vmax.f32 %v1312, %v1320
        %v1328 = vmax.f32 %v1314, %v1322
        %v1329 = vmax.f32 %v1316, %v1324
        %v1330 = vmax.f32 %v1318, %v1326
        %1331 = vst [vmem:[#allocation4 + $0x1] sm:$0xff] %v1327
        %1332 = vst [vmem:[#allocation4 + $0x9] sm:$0xff] %v1328
        %1333 = vst [vmem:[#allocation4 + $0x11] sm:$0xff] %v1329
        %1334 = vst [vmem:[#allocation4 + $0x19] sm:$0xff] %v1330
        %v1335 = vld [vmem:[#allocation4] sm:$0xff]
        %v1336 = vld [vmem:[#allocation4 + $0x8] sm:$0xff]
        %v1337 = vld [vmem:[#allocation4 + $0x10] sm:$0xff]
        %v1338 = vld [vmem:[#allocation4 + $0x18] sm:$0xff]
        %v1339 = vpack.c.bf16 %v1336, %v1335
        %v1340 = vpack.c.bf16 %v1338, %v1337
        %v1341 = vld [vmem:[#allocation8] sm:$0xf]
        %v1342 = vld [vmem:[#allocation8 + $0x4] sm:$0xf]
        %v1343 = vld [vmem:[#allocation8 + $0x8] sm:$0xf]
        %v1344 = vld [vmem:[#allocation8 + $0xc] sm:$0xf]
        %v1345 = vld [vmem:[#allocation8 + $0x10] sm:$0xf]
        %v1346 = vld [vmem:[#allocation8 + $0x14] sm:$0xf]
        %v1347 = vld [vmem:[#allocation8 + $0x18] sm:$0xf]
        %v1348 = vld [vmem:[#allocation8 + $0x1c] sm:$0xf]
        %v1349 = vld [vmem:[#allocation8 + $0x20] sm:$0xf]
        %v1350 = vld [vmem:[#allocation8 + $0x24] sm:$0xf]
        %v1351 = vld [vmem:[#allocation8 + $0x28] sm:$0xf]
        %v1352 = vld [vmem:[#allocation8 + $0x2c] sm:$0xf]
        %v1353 = vld [vmem:[#allocation8 + $0x30] sm:$0xf]
        %v1354 = vld [vmem:[#allocation8 + $0x34] sm:$0xf]
        %v1355 = vld [vmem:[#allocation8 + $0x38] sm:$0xf]
        %v1356 = vld [vmem:[#allocation8 + $0x3c] sm:$0xf]
        %v1357 = vld [vmem:[#allocation4 + $0x1] sm:$0xff]
        %v1358 = vld [vmem:[#allocation4 + $0x9] sm:$0xff]
        %v1359 = vld [vmem:[#allocation4 + $0x11] sm:$0xff]
        %v1360 = vld [vmem:[#allocation4 + $0x19] sm:$0xff]
        %v1361 = vpack.c.bf16 %v1358, %v1357
        %v1362 = vpack.c.bf16 %v1360, %v1359
        %s1363 = scalar_lea.vmem [#allocation8], 64
        %v1364 = vld [vmem:[%s1363] sm:$0xf]
        %v1365 = vld [vmem:[%s1363 + $0x4] sm:$0xf]
        %v1366 = vld [vmem:[%s1363 + $0x8] sm:$0xf]
        %v1367 = vld [vmem:[%s1363 + $0xc] sm:$0xf]
        %v1368 = vld [vmem:[%s1363 + $0x10] sm:$0xf]
        %v1369 = vld [vmem:[%s1363 + $0x14] sm:$0xf]
        %v1370 = vld [vmem:[%s1363 + $0x18] sm:$0xf]
        %v1371 = vld [vmem:[%s1363 + $0x1c] sm:$0xf]
        %v1372 = vld [vmem:[%s1363 + $0x20] sm:$0xf]
        %v1373 = vld [vmem:[%s1363 + $0x24] sm:$0xf]
        %v1374 = vld [vmem:[%s1363 + $0x28] sm:$0xf]
        %v1375 = vld [vmem:[%s1363 + $0x2c] sm:$0xf]
        %v1376 = vld [vmem:[%s1363 + $0x30] sm:$0xf]
        %v1377 = vld [vmem:[%s1363 + $0x34] sm:$0xf]
        %v1378 = vld [vmem:[%s1363 + $0x38] sm:$0xf]
        %v1379 = vld [vmem:[%s1363 + $0x3c] sm:$0xf]
        %v1396 = vunpack.c.l.b16 %v1364
        %v1397 = vunpack.c.l.b16 %v1365
        %v1398 = vunpack.c.l.b16 %v1366
        %v1399 = vunpack.c.l.b16 %v1367
        %v1400 = vunpack.c.l.b16 %v1368
        %v1401 = vunpack.c.l.b16 %v1369
        %v1402 = vunpack.c.l.b16 %v1370
        %v1403 = vunpack.c.l.b16 %v1371
        %v1404 = vunpack.c.l.b16 %v1372
        %v1405 = vunpack.c.l.b16 %v1373
        %v1406 = vunpack.c.l.b16 %v1374
        %v1407 = vunpack.c.l.b16 %v1375
        %v1408 = vunpack.c.l.b16 %v1376
        %v1409 = vunpack.c.l.b16 %v1377
        %v1410 = vunpack.c.l.b16 %v1378
        %v1411 = vunpack.c.l.b16 %v1379
        %v1412 = vpack.c.b16 %v1397, %v1396
        %v1413 = vpack.c.b16 %v1399, %v1398
        %v1414 = vpack.c.b16 %v1401, %v1400
        %v1415 = vpack.c.b16 %v1403, %v1402
        %v1416 = vpack.c.b16 %v1405, %v1404
        %v1417 = vpack.c.b16 %v1407, %v1406
        %v1418 = vpack.c.b16 %v1409, %v1408
        %v1419 = vpack.c.b16 %v1411, %v1410
        %1428 = vmatpush.bf16.msra.mxu0 %v1419
        %1429 = vmatpush.bf16.msra.mxu0 %v1418
        %1430 = vmatpush.bf16.msra.mxu0 %v1417
        %1431 = vmatpush.bf16.msra.mxu0 %v1416
        %1432 = vmatpush.bf16.msra.mxu0 %v1415
        %1433 = vmatpush.bf16.msra.mxu0 %v1414
        %1434 = vmatpush.bf16.msra.mxu0 %v1413
        %1435 = vmatpush.bf16.msra.mxu0 %v1412
        %1436 = vmatmul.bf16.gmra.mxu0 %v1361
        %v1437 = vpop.f32.mrf.mxu0
        %v1438 = vadd.f32 0.0, %v1437
        %v1439 = vpop.f32.mrf.mxu0
        %v1440 = vadd.f32 0.0, %v1439
        %1441 = vmatmul.bf16.gmra.mxu0 %v1362
        %v1442 = vpop.f32.mrf.mxu0
        %v1443 = vadd.f32 0.0, %v1442
        %v1444 = vpop.f32.mrf.mxu0
        %v1445 = vadd.f32 0.0, %v1444
        %1446 = vdwg.mxu0
        %v1463 = vunpack.c.l.b16 %v1341
        %v1464 = vunpack.c.l.b16 %v1342
        %v1465 = vunpack.c.l.b16 %v1343
        %v1466 = vunpack.c.l.b16 %v1344
        %v1467 = vunpack.c.l.b16 %v1345
        %v1468 = vunpack.c.l.b16 %v1346
        %v1469 = vunpack.c.l.b16 %v1347
        %v1470 = vunpack.c.l.b16 %v1348
        %v1471 = vunpack.c.l.b16 %v1349
        %v1472 = vunpack.c.l.b16 %v1350
        %v1473 = vunpack.c.l.b16 %v1351
        %v1474 = vunpack.c.l.b16 %v1352
        %v1475 = vunpack.c.l.b16 %v1353
        %v1476 = vunpack.c.l.b16 %v1354
        %v1477 = vunpack.c.l.b16 %v1355
        %v1478 = vunpack.c.l.b16 %v1356
        %v1479 = vpack.c.b16 %v1464, %v1463
        %v1480 = vpack.c.b16 %v1466, %v1465
        %v1481 = vpack.c.b16 %v1468, %v1467
        %v1482 = vpack.c.b16 %v1470, %v1469
        %v1483 = vpack.c.b16 %v1472, %v1471
        %v1484 = vpack.c.b16 %v1474, %v1473
        %v1485 = vpack.c.b16 %v1476, %v1475
        %v1486 = vpack.c.b16 %v1478, %v1477
        %1495 = vmatpush.bf16.msra.mxu0 %v1486
        %1496 = vmatpush.bf16.msra.mxu0 %v1485
        %1497 = vmatpush.bf16.msra.mxu0 %v1484
        %1498 = vmatpush.bf16.msra.mxu0 %v1483
        %1499 = vmatpush.bf16.msra.mxu0 %v1482
        %1500 = vmatpush.bf16.msra.mxu0 %v1481
        %1501 = vmatpush.bf16.msra.mxu0 %v1480
        %1502 = vmatpush.bf16.msra.mxu0 %v1479
        %1503 = vmatmul.bf16.gmra.mxu0 %v1339
        %v1504 = vpop.f32.mrf.mxu0
        %v1505 = vadd.f32 %v1438, %v1504
        %v1506 = vpop.f32.mrf.mxu0
        %v1507 = vadd.f32 %v1440, %v1506
        %1508 = vmatmul.bf16.gmra.mxu0 %v1340
        %v1509 = vpop.f32.mrf.mxu0
        %v1510 = vadd.f32 %v1443, %v1509
        %v1511 = vpop.f32.mrf.mxu0
        %v1512 = vadd.f32 %v1445, %v1511
        %1513 = vdwg.mxu0
        %v1514 = vld [vmem:[#allocation4 + $0x2] sm:$0xff]
        %v1515 = vld [vmem:[#allocation4 + $0xa] sm:$0xff]
        %v1516 = vld [vmem:[#allocation4 + $0x12] sm:$0xff]
        %v1517 = vld [vmem:[#allocation4 + $0x1a] sm:$0xff]
        %v1518 = vpack.c.bf16 %v1515, %v1514
        %v1519 = vpack.c.bf16 %v1517, %v1516
        %s1520 = scalar_lea.vmem [#allocation8], 128
        %v1521 = vld [vmem:[%s1520] sm:$0xf]
        %v1522 = vld [vmem:[%s1520 + $0x4] sm:$0xf]
        %v1523 = vld [vmem:[%s1520 + $0x8] sm:$0xf]
        %v1524 = vld [vmem:[%s1520 + $0xc] sm:$0xf]
        %v1525 = vld [vmem:[%s1520 + $0x10] sm:$0xf]
        %v1526 = vld [vmem:[%s1520 + $0x14] sm:$0xf]
        %v1527 = vld [vmem:[%s1520 + $0x18] sm:$0xf]
        %v1528 = vld [vmem:[%s1520 + $0x1c] sm:$0xf]
        %v1529 = vld [vmem:[%s1520 + $0x20] sm:$0xf]
        %v1530 = vld [vmem:[%s1520 + $0x24] sm:$0xf]
        %v1531 = vld [vmem:[%s1520 + $0x28] sm:$0xf]
        %v1532 = vld [vmem:[%s1520 + $0x2c] sm:$0xf]
        %v1533 = vld [vmem:[%s1520 + $0x30] sm:$0xf]
        %v1534 = vld [vmem:[%s1520 + $0x34] sm:$0xf]
        %v1535 = vld [vmem:[%s1520 + $0x38] sm:$0xf]
        %v1536 = vld [vmem:[%s1520 + $0x3c] sm:$0xf]
        %v1553 = vunpack.c.l.b16 %v1521
        %v1554 = vunpack.c.l.b16 %v1522
        %v1555 = vunpack.c.l.b16 %v1523
        %v1556 = vunpack.c.l.b16 %v1524
        %v1557 = vunpack.c.l.b16 %v1525
        %v1558 = vunpack.c.l.b16 %v1526
        %v1559 = vunpack.c.l.b16 %v1527
        %v1560 = vunpack.c.l.b16 %v1528
        %v1561 = vunpack.c.l.b16 %v1529
        %v1562 = vunpack.c.l.b16 %v1530
        %v1563 = vunpack.c.l.b16 %v1531
        %v1564 = vunpack.c.l.b16 %v1532
        %v1565 = vunpack.c.l.b16 %v1533
        %v1566 = vunpack.c.l.b16 %v1534
        %v1567 = vunpack.c.l.b16 %v1535
        %v1568 = vunpack.c.l.b16 %v1536
        %v1569 = vpack.c.b16 %v1554, %v1553
        %v1570 = vpack.c.b16 %v1556, %v1555
        %v1571 = vpack.c.b16 %v1558, %v1557
        %v1572 = vpack.c.b16 %v1560, %v1559
        %v1573 = vpack.c.b16 %v1562, %v1561
        %v1574 = vpack.c.b16 %v1564, %v1563
        %v1575 = vpack.c.b16 %v1566, %v1565
        %v1576 = vpack.c.b16 %v1568, %v1567
        %1585 = vmatpush.bf16.msra.mxu0 %v1576
        %1586 = vmatpush.bf16.msra.mxu0 %v1575
        %1587 = vmatpush.bf16.msra.mxu0 %v1574
        %1588 = vmatpush.bf16.msra.mxu0 %v1573
        %1589 = vmatpush.bf16.msra.mxu0 %v1572
        %1590 = vmatpush.bf16.msra.mxu0 %v1571
        %1591 = vmatpush.bf16.msra.mxu0 %v1570
        %1592 = vmatpush.bf16.msra.mxu0 %v1569
        %1593 = vmatmul.bf16.gmra.mxu0 %v1518
        %v1594 = vpop.f32.mrf.mxu0
        %v1595 = vadd.f32 0.0, %v1594
        %v1596 = vpop.f32.mrf.mxu0
        %v1597 = vadd.f32 0.0, %v1596
        %1598 = vmatmul.bf16.gmra.mxu0 %v1519
        %v1599 = vpop.f32.mrf.mxu0
        %v1600 = vadd.f32 0.0, %v1599
        %v1601 = vpop.f32.mrf.mxu0
        %v1602 = vadd.f32 0.0, %v1601
        %1603 = vdwg.mxu0
        %v1604 = vadd.f32 %v1505, %v1595
        %v1605 = vadd.f32 %v1507, %v1597
        %v1606 = vadd.f32 %v1510, %v1600
        %v1607 = vadd.f32 %v1512, %v1602
        %v1608 = vld [vmem:[%s9] sm:$0x1]
        %v1610 = vperm.slane %v1608, 0
        %v1612 = vmul.f32 %v1604, %v1610
        %v1613 = vmul.f32 %v1605, %v1610
        %v1614 = vmul.f32 %v1606, %v1610
        %v1615 = vmul.f32 %v1607, %v1610
        %v1616 = vld [vmem:[%s10] sm:$0x1]
        %v1618 = vperm.slane %v1616, 0
        %v1620 = vadd.f32 %v1612, %v1618
        %v1621 = vadd.f32 %v1613, %v1618
        %v1622 = vadd.f32 %v1614, %v1618
        %v1623 = vadd.f32 %v1615, %v1618
        %v1624 = vmax.f32 %v1620, 0.0
        %v1625 = vmax.f32 %v1621, 0.0
        %v1626 = vmax.f32 %v1622, 0.0
        %v1627 = vmax.f32 %v1623, 0.0
        %1628 = vst [vmem:[#allocation5] sm:$0xff] %v1624
        %1629 = vst [vmem:[#allocation5 + $0x8] sm:$0xff] %v1625
        %1630 = vst [vmem:[#allocation5 + $0x10] sm:$0xff] %v1626
        %1631 = vst [vmem:[#allocation5 + $0x18] sm:$0xff] %v1627
        %v1632 = vld [vmem:[#allocation5] ss:$2 sm:$0xff]
        %s1633 = scalar_lea.vmem [#allocation5], 16
        %v1634 = vld [vmem:[%s1633] ss:$2 sm:$0xff]
        %v1635 = vld [vmem:[%s1319] ss:$2 sm:$0xff]
        %v1636 = vld [vmem:[%s1321] ss:$2 sm:$0xff]
        %v1637 = vmax.f32 %v1632, %v1635
        %v1638 = vmax.f32 %v1634, %v1636
        %v1639 = vpack.c.bf16 %v1637, %v1637
        %v1640 = vpack.c.bf16 %v1638, %v1638
        %1641 = vst [vmem:[%s420] sm:$0xf] %v1639
        %1642 = vst [vmem:[%s420 + $0x4] sm:$0xf] %v1640
        %p1643 = scmp.lt.s32.totalorder %s24, 1
        %s1644 = scalar_select %p1643, %s24, 1
        %s1645 = smul.addr %s1644, 2
        %s1646 = smul.addr %s1645, 4
        %s1647 = scalar_lea.vmem %s11, %s1646
        // Predicated region
        $region73: #{lite_cnn1d_forward.2} parent=63 // pred_check
          %p1648 = pneg %p278
        $region74: #{lite_cnn1d_forward.2} parent=63 // pred_check_branch
          %1650 = sbr.rel (%p1648) target = $region76
        $region75: #{lite_cnn1d_forward.2} parent=63 // pred_region
          _
        $region76: #{lite_cnn1d_forward.2} parent=63 // pred_fallthru
          _
      $region64: #{lite_cnn1d_forward.2} parent=5 // pred_fallthru
        _
      %p1651 = scmp.le.s32.totalorder 2, %s19
      // Predicated region
      $region77: #{lite_cnn1d_forward.2} parent=5 // pred_check
        %p1652 = pneg %p1651
      $region78: #{lite_cnn1d_forward.2} parent=5 // pred_check_branch
        %1654 = sbr.rel (%p1652) target = $region80
      $region79: #{lite_cnn1d_forward.2} parent=5 // pred_region
        %s1655 = ssub.s32 %s19, 2
        // Predicated region
        $region81: #{lite_cnn1d_forward.2} parent=79 // pred_check
          %p1656 = pneg %p284
        $region82: #{lite_cnn1d_forward.2} parent=79 // pred_check_branch
          %1658 = sbr.rel (%p1656) target = $region84
        $region83: #{lite_cnn1d_forward.2} parent=79 // pred_region
          %p1659 = scmp.lt.s32.totalorder %s25, 1
          %s1660 = scalar_select %p1659, %s25, 1
          %s1661 = smul.addr %s1660, 2
          %s1662 = smul.addr %s1661, 4
          %s1663 = scalar_lea.vmem %s11, %s1662
        $region84: #{lite_cnn1d_forward.2} parent=79 // pred_fallthru
          _
      $region80: #{lite_cnn1d_forward.2} parent=5 // pred_fallthru
        _
    $region6: #{lite_cnn1d_forward.2} parent=1 // loop_footer
      %s23 = sadd.s32 1, %s19
    $region7: #{lite_cnn1d_forward.2} parent=1 // loop_footer_branch
      %18 = sbr.rel target = $region3
    $region8: #{lite_cnn1d_forward.2} parent=1 // loop_exit
      _
    %1664 = vsyncpa [#allocation7], 1
    %s1665 = scalar_lea.sflag [#allocation7], 1
    %1666 = vsyncpa %s1665, 1
    %1667 = vsyncpa [#allocation9], 1

// kernel: lite_cnn1d_forward.3
$region0: #{lite_cnn1d_forward.3}
  #allocation0 [shape = 'u32[]', space=smem, size = 0x4, offset = 0x4, fixed_abs, tag = 'smem constant byte address 0x4 - core index']
  #allocation1 [shape = 'u32[72,128]{1,0:T(1,128)}', space=vmem, size = 0x9000, scoped, tag = 'internal scratch']
  %s0 = inlined_call_operand.vmem [shape: bf16[2,2048], index: 0, kind: input, shape index: {}]
  %s1 = inlined_call_operand.hbm [shape: bf16[2048,256], index: 1, kind: input, shape index: {}]
  %s2 = inlined_call_operand.vmem [shape: f32[1,256], index: 2, kind: input, shape index: {}]
  %s3 = inlined_call_operand.vmem [shape: bf16[256,128], index: 3, kind: input, shape index: {}]
  %s4 = inlined_call_operand.vmem [shape: f32[1,128], index: 4, kind: input, shape index: {}]
  %s5 = inlined_call_operand.hbm [shape: bf16[128,128], index: 5, kind: input, shape index: {}]
  %s6 = inlined_call_operand.vmem [shape: f32[1,128], index: 6, kind: input, shape index: {}]
  %s7 = inlined_call_operand.vmem [shape: f32[2,128], index: 7, kind: output, shape index: {}]
  %s8 = sld [smem:[#allocation0]]
  $region46: #{lite_cnn1d_forward.3} parent=0
    _
  %s10 = ssub.s32 1, %s8
  %s11 = scalar_select 0, %s10, %s8
  $region1: #{lite_cnn1d_forward.3} parent=0
    #allocation2 [shape = 'u8[1048576]{0}', space=vmem, size = 0x100000, scoped, tag = 'input window, operand 1, single buffered']
    #allocation3 [shape = 's32[1]{0}', space=sflag, size = 0x4, scoped, tag = 'scoped memory for lite_cnn1d_forward.3']
    #allocation4 [shape = 'u8[32768]{0}', space=vmem, size = 0x8000, scoped, tag = 'input window, operand 5, single buffered']
    #allocation5 [shape = 's32[1]{0}', space=sflag, size = 0x4, scoped, tag = 'scoped memory for lite_cnn1d_forward.3']
    %12 = vsyncpa [#allocation3], 0
    %13 = vsyncpa [#allocation5], 0
    // Predicated region
    $region2: #{lite_cnn1d_forward.3} parent=1 // pred_check
      _
    $region3: #{lite_cnn1d_forward.3} parent=1 // pred_check_branch
      %15 = sbr.rel (0) target = $region5
    $region4: #{lite_cnn1d_forward.3} parent=1 // pred_region
      _
    $region5: #{lite_cnn1d_forward.3} parent=1 // pred_fallthru
      _
    // Predicated region
    $region6: #{lite_cnn1d_forward.3} parent=1 // pred_check
      _
    $region7: #{lite_cnn1d_forward.3} parent=1 // pred_check_branch
      %17 = sbr.rel (0) target = $region9
    $region8: #{lite_cnn1d_forward.3} parent=1 // pred_region
      %19 = vsyncadd [#allocation3], 0
      %s20 = sshll.u32 %s1, 4
      %s21 = int_to_ptr.hbm [resolvable:$true] %s20
      %s22 = sshll.u32 [#allocation2], 4
      %s23 = int_to_ptr.vmem [resolvable:$true] %s22
      %28 = dma.hbm_to_vmem [thread:$0]  %s21, 32768, %s23, [#allocation3], 128, 128, 8
    $region9: #{lite_cnn1d_forward.3} parent=1 // pred_fallthru
      _
    // Predicated region
    $region10: #{lite_cnn1d_forward.3} parent=1 // pred_check
      _
    $region11: #{lite_cnn1d_forward.3} parent=1 // pred_check_branch
      %30 = sbr.rel (0) target = $region13
    $region12: #{lite_cnn1d_forward.3} parent=1 // pred_region
      _
    $region13: #{lite_cnn1d_forward.3} parent=1 // pred_fallthru
      _
    // Predicated region
    $region14: #{lite_cnn1d_forward.3} parent=1 // pred_check
      _
    $region15: #{lite_cnn1d_forward.3} parent=1 // pred_check_branch
      %32 = sbr.rel (0) target = $region17
    $region16: #{lite_cnn1d_forward.3} parent=1 // pred_region
      _
    $region17: #{lite_cnn1d_forward.3} parent=1 // pred_fallthru
      _
    // Predicated region
    $region18: #{lite_cnn1d_forward.3} parent=1 // pred_check
      _
    $region19: #{lite_cnn1d_forward.3} parent=1 // pred_check_branch
      %34 = sbr.rel (0) target = $region21
    $region20: #{lite_cnn1d_forward.3} parent=1 // pred_region
      _
    $region21: #{lite_cnn1d_forward.3} parent=1 // pred_fallthru
      _
    // Predicated region
    $region22: #{lite_cnn1d_forward.3} parent=1 // pred_check
      _
    $region23: #{lite_cnn1d_forward.3} parent=1 // pred_check_branch
      %36 = sbr.rel (0) target = $region25
    $region24: #{lite_cnn1d_forward.3} parent=1 // pred_region
      %38 = vsyncadd [#allocation5], 0
      %s39 = sshll.u32 %s5, 4
      %s40 = int_to_ptr.hbm [resolvable:$true] %s39
      %s41 = sshll.u32 [#allocation4], 4
      %s42 = int_to_ptr.vmem [resolvable:$true] %s41
      %47 = dma.hbm_to_vmem [thread:$0]  %s40, 1024, %s42, [#allocation5], 64, 64, 4
    $region25: #{lite_cnn1d_forward.3} parent=1 // pred_fallthru
      _
    // Predicated region
    $region26: #{lite_cnn1d_forward.3} parent=1 // pred_check
      _
    $region27: #{lite_cnn1d_forward.3} parent=1 // pred_check_branch
      %49 = sbr.rel (0) target = $region29
    $region28: #{lite_cnn1d_forward.3} parent=1 // pred_region
      _
    $region29: #{lite_cnn1d_forward.3} parent=1 // pred_fallthru
      _
    // Predicated region
    $region30: #{lite_cnn1d_forward.3} parent=1 // pred_check
      _
    $region31: #{lite_cnn1d_forward.3} parent=1 // pred_check_branch
      %51 = sbr.rel (0) target = $region33
    $region32: #{lite_cnn1d_forward.3} parent=1 // pred_region
      %53 = dma.done [#allocation3], 32768
    $region33: #{lite_cnn1d_forward.3} parent=1 // pred_fallthru
      _
    // Predicated region
    $region34: #{lite_cnn1d_forward.3} parent=1 // pred_check
      _
    $region35: #{lite_cnn1d_forward.3} parent=1 // pred_check_branch
      %55 = sbr.rel (0) target = $region37
    $region36: #{lite_cnn1d_forward.3} parent=1 // pred_region
      %57 = dma.done [#allocation5], 1024
    $region37: #{lite_cnn1d_forward.3} parent=1 // pred_fallthru
      _
    %v58 = vld [vmem:[%s0] sm:$0xff]
    %v59 = vld [vmem:[%s0 + $0x8] sm:$0xff]
    %v60 = vld [vmem:[#allocation2] sm:$0xff]
    %v61 = vld [vmem:[#allocation2 + $0x8] sm:$0xff]
    %v62 = vld [vmem:[#allocation2 + $0x10] sm:$0xff]
    %v63 = vld [vmem:[#allocation2 + $0x18] sm:$0xff]
    %v64 = vld [vmem:[#allocation2 + $0x20] sm:$0xff]
    %v65 = vld [vmem:[#allocation2 + $0x28] sm:$0xff]
    %v66 = vld [vmem:[#allocation2 + $0x30] sm:$0xff]
    %v67 = vld [vmem:[#allocation2 + $0x38] sm:$0xff]
    %v68 = vld [vmem:[#allocation2 + $0x40] sm:$0xff]
    %v69 = vld [vmem:[#allocation2 + $0x48] sm:$0xff]
    %v70 = vld [vmem:[#allocation2 + $0x50] sm:$0xff]
    %v71 = vld [vmem:[#allocation2 + $0x58] sm:$0xff]
    %v72 = vld [vmem:[#allocation2 + $0x60] sm:$0xff]
    %v73 = vld [vmem:[#allocation2 + $0x68] sm:$0xff]
    %v74 = vld [vmem:[#allocation2 + $0x70] sm:$0xff]
    %v75 = vld [vmem:[#allocation2 + $0x78] sm:$0xff]
    %v76 = vld [vmem:[#allocation2 + $0x80] sm:$0xff]
    %v77 = vld [vmem:[#allocation2 + $0x88] sm:$0xff]
    %v78 = vld [vmem:[#allocation2 + $0x90] sm:$0xff]
    %v79 = vld [vmem:[#allocation2 + $0x98] sm:$0xff]
    %v80 = vld [vmem:[#allocation2 + $0xa0] sm:$0xff]
    %v81 = vld [vmem:[#allocation2 + $0xa8] sm:$0xff]
    %v82 = vld [vmem:[#allocation2 + $0xb0] sm:$0xff]
    %v83 = vld [vmem:[#allocation2 + $0xb8] sm:$0xff]
    %v84 = vld [vmem:[#allocation2 + $0xc0] sm:$0xff]
    %v85 = vld [vmem:[#allocation2 + $0xc8] sm:$0xff]
    %v86 = vld [vmem:[#allocation2 + $0xd0] sm:$0xff]
    %v87 = vld [vmem:[#allocation2 + $0xd8] sm:$0xff]
    %v88 = vld [vmem:[#allocation2 + $0xe0] sm:$0xff]
    %v89 = vld [vmem:[#allocation2 + $0xe8] sm:$0xff]
    %v90 = vld [vmem:[#allocation2 + $0xf0] sm:$0xff]
    %v91 = vld [vmem:[#allocation2 + $0xf8] sm:$0xff]
    %v92 = vld [vmem:[#allocation2 + $0x100] sm:$0xff]
    %v93 = vld [vmem:[#allocation2 + $0x108] sm:$0xff]
    %v94 = vld [vmem:[#allocation2 + $0x110] sm:$0xff]
    %v95 = vld [vmem:[#allocation2 + $0x118] sm:$0xff]
    %v96 = vld [vmem:[#allocation2 + $0x120] sm:$0xff]
    %v97 = vld [vmem:[#allocation2 + $0x128] sm:$0xff]
    %v98 = vld [vmem:[#allocation2 + $0x130] sm:$0xff]
    %v99 = vld [vmem:[#allocation2 + $0x138] sm:$0xff]
    %v100 = vld [vmem:[#allocation2 + $0x140] sm:$0xff]
    %v101 = vld [vmem:[#allocation2 + $0x148] sm:$0xff]
    %v102 = vld [vmem:[#allocation2 + $0x150] sm:$0xff]
    %v103 = vld [vmem:[#allocation2 + $0x158] sm:$0xff]
    %v104 = vld [vmem:[#allocation2 + $0x160] sm:$0xff]
    %v105 = vld [vmem:[#allocation2 + $0x168] sm:$0xff]
    %v106 = vld [vmem:[#allocation2 + $0x170] sm:$0xff]
    %v107 = vld [vmem:[#allocation2 + $0x178] sm:$0xff]
    %v108 = vld [vmem:[#allocation2 + $0x180] sm:$0xff]
    %v109 = vld [vmem:[#allocation2 + $0x188] sm:$0xff]
    %v110 = vld [vmem:[#allocation2 + $0x190] sm:$0xff]
    %v111 = vld [vmem:[#allocation2 + $0x198] sm:$0xff]
    %v112 = vld [vmem:[#allocation2 + $0x1a0] sm:$0xff]
    %v113 = vld [vmem:[#allocation2 + $0x1a8] sm:$0xff]
    %v114 = vld [vmem:[#allocation2 + $0x1b0] sm:$0xff]
    %v115 = vld [vmem:[#allocation2 + $0x1b8] sm:$0xff]
    %v116 = vld [vmem:[#allocation2 + $0x1c0] sm:$0xff]
    %v117 = vld [vmem:[#allocation2 + $0x1c8] sm:$0xff]
    %v118 = vld [vmem:[#allocation2 + $0x1d0] sm:$0xff]
    %v119 = vld [vmem:[#allocation2 + $0x1d8] sm:$0xff]
    %v120 = vld [vmem:[#allocation2 + $0x1e0] sm:$0xff]
    %v121 = vld [vmem:[#allocation2 + $0x1e8] sm:$0xff]
    %v122 = vld [vmem:[#allocation2 + $0x1f0] sm:$0xff]
    %v123 = vld [vmem:[#allocation2 + $0x1f8] sm:$0xff]
    %v124 = vld [vmem:[#allocation2 + $0x200] sm:$0xff]
    %v125 = vld [vmem:[#allocation2 + $0x208] sm:$0xff]
    %v126 = vld [vmem:[#allocation2 + $0x210] sm:$0xff]
    %v127 = vld [vmem:[#allocation2 + $0x218] sm:$0xff]
    %v128 = vld [vmem:[#allocation2 + $0x220] sm:$0xff]
    %v129 = vld [vmem:[#allocation2 + $0x228] sm:$0xff]
    %v130 = vld [vmem:[#allocation2 + $0x230] sm:$0xff]
    %v131 = vld [vmem:[#allocation2 + $0x238] sm:$0xff]
    %v132 = vld [vmem:[#allocation2 + $0x240] sm:$0xff]
    %v133 = vld [vmem:[#allocation2 + $0x248] sm:$0xff]
    %v134 = vld [vmem:[#allocation2 + $0x250] sm:$0xff]
    %v135 = vld [vmem:[#allocation2 + $0x258] sm:$0xff]
    %v136 = vld [vmem:[#allocation2 + $0x260] sm:$0xff]
    %v137 = vld [vmem:[#allocation2 + $0x268] sm:$0xff]
    %v138 = vld [vmem:[#allocation2 + $0x270] sm:$0xff]
    %v139 = vld [vmem:[#allocation2 + $0x278] sm:$0xff]
    %v140 = vld [vmem:[#allocation2 + $0x280] sm:$0xff]
    %v141 = vld [vmem:[#allocation2 + $0x288] sm:$0xff]
    %v142 = vld [vmem:[#allocation2 + $0x290] sm:$0xff]
    %v143 = vld [vmem:[#allocation2 + $0x298] sm:$0xff]
    %v144 = vld [vmem:[#allocation2 + $0x2a0] sm:$0xff]
    %v145 = vld [vmem:[#allocation2 + $0x2a8] sm:$0xff]
    %v146 = vld [vmem:[#allocation2 + $0x2b0] sm:$0xff]
    %v147 = vld [vmem:[#allocation2 + $0x2b8] sm:$0xff]
    %v148 = vld [vmem:[#allocation2 + $0x2c0] sm:$0xff]
    %v149 = vld [vmem:[#allocation2 + $0x2c8] sm:$0xff]
    %v150 = vld [vmem:[#allocation2 + $0x2d0] sm:$0xff]
    %v151 = vld [vmem:[#allocation2 + $0x2d8] sm:$0xff]
    %v152 = vld [vmem:[#allocation2 + $0x2e0] sm:$0xff]
    %v153 = vld [vmem:[#allocation2 + $0x2e8] sm:$0xff]
    %v154 = vld [vmem:[#allocation2 + $0x2f0] sm:$0xff]
    %v155 = vld [vmem:[#allocation2 + $0x2f8] sm:$0xff]
    %v156 = vld [vmem:[#allocation2 + $0x300] sm:$0xff]
    %v157 = vld [vmem:[#allocation2 + $0x308] sm:$0xff]
    %v158 = vld [vmem:[#allocation2 + $0x310] sm:$0xff]
    %v159 = vld [vmem:[#allocation2 + $0x318] sm:$0xff]
    %v160 = vld [vmem:[#allocation2 + $0x320] sm:$0xff]
    %v161 = vld [vmem:[#allocation2 + $0x328] sm:$0xff]
    %v162 = vld [vmem:[#allocation2 + $0x330] sm:$0xff]
    %v163 = vld [vmem:[#allocation2 + $0x338] sm:$0xff]
    %v164 = vld [vmem:[#allocation2 + $0x340] sm:$0xff]
    %v165 = vld [vmem:[#allocation2 + $0x348] sm:$0xff]
    %v166 = vld [vmem:[#allocation2 + $0x350] sm:$0xff]
    %v167 = vld [vmem:[#allocation2 + $0x358] sm:$0xff]
    %v168 = vld [vmem:[#allocation2 + $0x360] sm:$0xff]
    %v169 = vld [vmem:[#allocation2 + $0x368] sm:$0xff]
    %v170 = vld [vmem:[#allocation2 + $0x370] sm:$0xff]
    %v171 = vld [vmem:[#allocation2 + $0x378] sm:$0xff]
    %v172 = vld [vmem:[#allocation2 + $0x380] sm:$0xff]
    %v173 = vld [vmem:[#allocation2 + $0x388] sm:$0xff]
    %v174 = vld [vmem:[#allocation2 + $0x390] sm:$0xff]
    %v175 = vld [vmem:[#allocation2 + $0x398] sm:$0xff]
    %v176 = vld [vmem:[#allocation2 + $0x3a0] sm:$0xff]
    %v177 = vld [vmem:[#allocation2 + $0x3a8] sm:$0xff]
    %v178 = vld [vmem:[#allocation2 + $0x3b0] sm:$0xff]
    %v179 = vld [vmem:[#allocation2 + $0x3b8] sm:$0xff]
    %v180 = vld [vmem:[#allocation2 + $0x3c0] sm:$0xff]
    %v181 = vld [vmem:[#allocation2 + $0x3c8] sm:$0xff]
    %v182 = vld [vmem:[#allocation2 + $0x3d0] sm:$0xff]
    %v183 = vld [vmem:[#allocation2 + $0x3d8] sm:$0xff]
    %v184 = vld [vmem:[#allocation2 + $0x3e0] sm:$0xff]
    %v185 = vld [vmem:[#allocation2 + $0x3e8] sm:$0xff]
    %v186 = vld [vmem:[#allocation2 + $0x3f0] sm:$0xff]
    %v187 = vld [vmem:[#allocation2 + $0x3f8] sm:$0xff]
    %v188 = vld [vmem:[#allocation2 + $0x400] sm:$0xff]
    %v189 = vld [vmem:[#allocation2 + $0x408] sm:$0xff]
    %v190 = vld [vmem:[#allocation2 + $0x410] sm:$0xff]
    %v191 = vld [vmem:[#allocation2 + $0x418] sm:$0xff]
    %v192 = vld [vmem:[#allocation2 + $0x420] sm:$0xff]
    %v193 = vld [vmem:[#allocation2 + $0x428] sm:$0xff]
    %v194 = vld [vmem:[#allocation2 + $0x430] sm:$0xff]
    %v195 = vld [vmem:[#allocation2 + $0x438] sm:$0xff]
    %v196 = vld [vmem:[#allocation2 + $0x440] sm:$0xff]
    %v197 = vld [vmem:[#allocation2 + $0x448] sm:$0xff]
    %v198 = vld [vmem:[#allocation2 + $0x450] sm:$0xff]
    %v199 = vld [vmem:[#allocation2 + $0x458] sm:$0xff]
    %v200 = vld [vmem:[#allocation2 + $0x460] sm:$0xff]
    %v201 = vld [vmem:[#allocation2 + $0x468] sm:$0xff]
    %v202 = vld [vmem:[#allocation2 + $0x470] sm:$0xff]
    %v203 = vld [vmem:[#allocation2 + $0x478] sm:$0xff]
    %v204 = vld [vmem:[#allocation2 + $0x480] sm:$0xff]
    %v205 = vld [vmem:[#allocation2 + $0x488] sm:$0xff]
    %v206 = vld [vmem:[#allocation2 + $0x490] sm:$0xff]
    %v207 = vld [vmem:[#allocation2 + $0x498] sm:$0xff]
    %v208 = vld [vmem:[#allocation2 + $0x4a0] sm:$0xff]
    %v209 = vld [vmem:[#allocation2 + $0x4a8] sm:$0xff]
    %v210 = vld [vmem:[#allocation2 + $0x4b0] sm:$0xff]
    %v211 = vld [vmem:[#allocation2 + $0x4b8] sm:$0xff]
    %v212 = vld [vmem:[#allocation2 + $0x4c0] sm:$0xff]
    %v213 = vld [vmem:[#allocation2 + $0x4c8] sm:$0xff]
    %v214 = vld [vmem:[#allocation2 + $0x4d0] sm:$0xff]
    %v215 = vld [vmem:[#allocation2 + $0x4d8] sm:$0xff]
    %v216 = vld [vmem:[#allocation2 + $0x4e0] sm:$0xff]
    %v217 = vld [vmem:[#allocation2 + $0x4e8] sm:$0xff]
    %v218 = vld [vmem:[#allocation2 + $0x4f0] sm:$0xff]
    %v219 = vld [vmem:[#allocation2 + $0x4f8] sm:$0xff]
    %v220 = vld [vmem:[#allocation2 + $0x500] sm:$0xff]
    %v221 = vld [vmem:[#allocation2 + $0x508] sm:$0xff]
    %v222 = vld [vmem:[#allocation2 + $0x510] sm:$0xff]
    %v223 = vld [vmem:[#allocation2 + $0x518] sm:$0xff]
    %v224 = vld [vmem:[#allocation2 + $0x520] sm:$0xff]
    %v225 = vld [vmem:[#allocation2 + $0x528] sm:$0xff]
    %v226 = vld [vmem:[#allocation2 + $0x530] sm:$0xff]
    %v227 = vld [vmem:[#allocation2 + $0x538] sm:$0xff]
    %v228 = vld [vmem:[#allocation2 + $0x540] sm:$0xff]
    %v229 = vld [vmem:[#allocation2 + $0x548] sm:$0xff]
    %v230 = vld [vmem:[#allocation2 + $0x550] sm:$0xff]
    %v231 = vld [vmem:[#allocation2 + $0x558] sm:$0xff]
    %v232 = vld [vmem:[#allocation2 + $0x560] sm:$0xff]
    %v233 = vld [vmem:[#allocation2 + $0x568] sm:$0xff]
    %v234 = vld [vmem:[#allocation2 + $0x570] sm:$0xff]
    %v235 = vld [vmem:[#allocation2 + $0x578] sm:$0xff]
    %v236 = vld [vmem:[#allocation2 + $0x580] sm:$0xff]
    %v237 = vld [vmem:[#allocation2 + $0x588] sm:$0xff]
    %v238 = vld [vmem:[#allocation2 + $0x590] sm:$0xff]
    %v239 = vld [vmem:[#allocation2 + $0x598] sm:$0xff]
    %v240 = vld [vmem:[#allocation2 + $0x5a0] sm:$0xff]
    %v241 = vld [vmem:[#allocation2 + $0x5a8] sm:$0xff]
    %v242 = vld [vmem:[#allocation2 + $0x5b0] sm:$0xff]
    %v243 = vld [vmem:[#allocation2 + $0x5b8] sm:$0xff]
    %v244 = vld [vmem:[#allocation2 + $0x5c0] sm:$0xff]
    %v245 = vld [vmem:[#allocation2 + $0x5c8] sm:$0xff]
    %v246 = vld [vmem:[#allocation2 + $0x5d0] sm:$0xff]
    %v247 = vld [vmem:[#allocation2 + $0x5d8] sm:$0xff]
    %v248 = vld [vmem:[#allocation2 + $0x5e0] sm:$0xff]
    %v249 = vld [vmem:[#allocation2 + $0x5e8] sm:$0xff]
    %v250 = vld [vmem:[#allocation2 + $0x5f0] sm:$0xff]
    %v251 = vld [vmem:[#allocation2 + $0x5f8] sm:$0xff]
    %v252 = vld [vmem:[#allocation2 + $0x600] sm:$0xff]
    %v253 = vld [vmem:[#allocation2 + $0x608] sm:$0xff]
    %v254 = vld [vmem:[#allocation2 + $0x610] sm:$0xff]
    %v255 = vld [vmem:[#allocation2 + $0x618] sm:$0xff]
    %v256 = vld [vmem:[#allocation2 + $0x620] sm:$0xff]
    %v257 = vld [vmem:[#allocation2 + $0x628] sm:$0xff]
    %v258 = vld [vmem:[#allocation2 + $0x630] sm:$0xff]
    %v259 = vld [vmem:[#allocation2 + $0x638] sm:$0xff]
    %v260 = vld [vmem:[#allocation2 + $0x640] sm:$0xff]
    %v261 = vld [vmem:[#allocation2 + $0x648] sm:$0xff]
    %v262 = vld [vmem:[#allocation2 + $0x650] sm:$0xff]
    %v263 = vld [vmem:[#allocation2 + $0x658] sm:$0xff]
    %v264 = vld [vmem:[#allocation2 + $0x660] sm:$0xff]
    %v265 = vld [vmem:[#allocation2 + $0x668] sm:$0xff]
    %v266 = vld [vmem:[#allocation2 + $0x670] sm:$0xff]
    %v267 = vld [vmem:[#allocation2 + $0x678] sm:$0xff]
    %v268 = vld [vmem:[#allocation2 + $0x680] sm:$0xff]
    %v269 = vld [vmem:[#allocation2 + $0x688] sm:$0xff]
    %v270 = vld [vmem:[#allocation2 + $0x690] sm:$0xff]
    %v271 = vld [vmem:[#allocation2 + $0x698] sm:$0xff]
    %v272 = vld [vmem:[#allocation2 + $0x6a0] sm:$0xff]
    %v273 = vld [vmem:[#allocation2 + $0x6a8] sm:$0xff]
    %v274 = vld [vmem:[#allocation2 + $0x6b0] sm:$0xff]
    %v275 = vld [vmem:[#allocation2 + $0x6b8] sm:$0xff]
    %v276 = vld [vmem:[#allocation2 + $0x6c0] sm:$0xff]
    %v277 = vld [vmem:[#allocation2 + $0x6c8] sm:$0xff]
    %v278 = vld [vmem:[#allocation2 + $0x6d0] sm:$0xff]
    %v279 = vld [vmem:[#allocation2 + $0x6d8] sm:$0xff]
    %v280 = vld [vmem:[#allocation2 + $0x6e0] sm:$0xff]
    %v281 = vld [vmem:[#allocation2 + $0x6e8] sm:$0xff]
    %v282 = vld [vmem:[#allocation2 + $0x6f0] sm:$0xff]
    %v283 = vld [vmem:[#allocation2 + $0x6f8] sm:$0xff]
    %v284 = vld [vmem:[#allocation2 + $0x700] sm:$0xff]
    %v285 = vld [vmem:[#allocation2 + $0x708] sm:$0xff]
    %v286 = vld [vmem:[#allocation2 + $0x710] sm:$0xff]
    %v287 = vld [vmem:[#allocation2 + $0x718] sm:$0xff]
    %v288 = vld [vmem:[#allocation2 + $0x720] sm:$0xff]
    %v289 = vld [vmem:[#allocation2 + $0x728] sm:$0xff]
    %v290 = vld [vmem:[#allocation2 + $0x730] sm:$0xff]
    %v291 = vld [vmem:[#allocation2 + $0x738] sm:$0xff]
    %v292 = vld [vmem:[#allocation2 + $0x740] sm:$0xff]
    %v293 = vld [vmem:[#allocation2 + $0x748] sm:$0xff]
    %v294 = vld [vmem:[#allocation2 + $0x750] sm:$0xff]
    %v295 = vld [vmem:[#allocation2 + $0x758] sm:$0xff]
    %v296 = vld [vmem:[#allocation2 + $0x760] sm:$0xff]
    %v297 = vld [vmem:[#allocation2 + $0x768] sm:$0xff]
    %v298 = vld [vmem:[#allocation2 + $0x770] sm:$0xff]
    %v299 = vld [vmem:[#allocation2 + $0x778] sm:$0xff]
    %v300 = vld [vmem:[#allocation2 + $0x780] sm:$0xff]
    %v301 = vld [vmem:[#allocation2 + $0x788] sm:$0xff]
    %v302 = vld [vmem:[#allocation2 + $0x790] sm:$0xff]
    %v303 = vld [vmem:[#allocation2 + $0x798] sm:$0xff]
    %v304 = vld [vmem:[#allocation2 + $0x7a0] sm:$0xff]
    %v305 = vld [vmem:[#allocation2 + $0x7a8] sm:$0xff]
    %v306 = vld [vmem:[#allocation2 + $0x7b0] sm:$0xff]
    %v307 = vld [vmem:[#allocation2 + $0x7b8] sm:$0xff]
    %v308 = vld [vmem:[#allocation2 + $0x7c0] sm:$0xff]
    %v309 = vld [vmem:[#allocation2 + $0x7c8] sm:$0xff]
    %v310 = vld [vmem:[#allocation2 + $0x7d0] sm:$0xff]
    %v311 = vld [vmem:[#allocation2 + $0x7d8] sm:$0xff]
    %v312 = vld [vmem:[#allocation2 + $0x7e0] sm:$0xff]
    %v313 = vld [vmem:[#allocation2 + $0x7e8] sm:$0xff]
    %v314 = vld [vmem:[#allocation2 + $0x7f0] sm:$0xff]
    %v315 = vld [vmem:[#allocation2 + $0x7f8] sm:$0xff]
    %v316 = vld [vmem:[%s2] sm:$0x3]
    %v318 = vperm.slane %v316, 0
    %v319 = vperm.slane %v316, 1
    %323 = vst [vmem:[#allocation1] ss:$9 sm:$0xff] %v58
    %v324 = vld [vmem:[#allocation1] sm:$0xff]
    %v325 = vld [vmem:[#allocation1 + $0x9] sm:$0xff]
    %v326 = vld [vmem:[#allocation1 + $0x12] sm:$0xff]
    %v327 = vld [vmem:[#allocation1 + $0x1b] sm:$0xff]
    %v328 = vld [vmem:[#allocation1 + $0x24] sm:$0xff]
    %v329 = vld [vmem:[#allocation1 + $0x2d] sm:$0xff]
    %v330 = vld [vmem:[#allocation1 + $0x36] sm:$0xff]
    %v331 = vld [vmem:[#allocation1 + $0x3f] sm:$0xff]
    %333 = vst [vmem:[#allocation1] ss:$9 sm:$0xff] %v59
    %v334 = vld [vmem:[#allocation1] sm:$0xff]
    %v335 = vld [vmem:[#allocation1 + $0x9] sm:$0xff]
    %v336 = vld [vmem:[#allocation1 + $0x12] sm:$0xff]
    %v337 = vld [vmem:[#allocation1 + $0x1b] sm:$0xff]
    %v338 = vld [vmem:[#allocation1 + $0x24] sm:$0xff]
    %v339 = vld [vmem:[#allocation1 + $0x2d] sm:$0xff]
    %v340 = vld [vmem:[#allocation1 + $0x36] sm:$0xff]
    %v341 = vld [vmem:[#allocation1 + $0x3f] sm:$0xff]
    %v614 = vunpack.c.l.b16 %v60
    %v615 = vunpack.c.h.b16 %v60
    %v616 = vunpack.c.l.b16 %v61
    %v617 = vunpack.c.h.b16 %v61
    %v618 = vunpack.c.l.b16 %v62
    %v619 = vunpack.c.h.b16 %v62
    %v620 = vunpack.c.l.b16 %v63
    %v621 = vunpack.c.h.b16 %v63
    %v622 = vunpack.c.l.b16 %v64
    %v623 = vunpack.c.h.b16 %v64
    %v624 = vunpack.c.l.b16 %v65
    %v625 = vunpack.c.h.b16 %v65
    %v626 = vunpack.c.l.b16 %v66
    %v627 = vunpack.c.h.b16 %v66
    %v628 = vunpack.c.l.b16 %v67
    %v629 = vunpack.c.h.b16 %v67
    %v630 = vunpack.c.l.b16 %v68
    %v631 = vunpack.c.h.b16 %v68
    %v632 = vunpack.c.l.b16 %v69
    %v633 = vunpack.c.h.b16 %v69
    %v634 = vunpack.c.l.b16 %v70
    %v635 = vunpack.c.h.b16 %v70
    %v636 = vunpack.c.l.b16 %v71
    %v637 = vunpack.c.h.b16 %v71
    %v638 = vunpack.c.l.b16 %v72
    %v639 = vunpack.c.h.b16 %v72
    %v640 = vunpack.c.l.b16 %v73
    %v641 = vunpack.c.h.b16 %v73
    %v642 = vunpack.c.l.b16 %v74
    %v643 = vunpack.c.h.b16 %v74
    %v644 = vunpack.c.l.b16 %v75
    %v645 = vunpack.c.h.b16 %v75
    %v646 = vunpack.c.l.b16 %v76
    %v647 = vunpack.c.h.b16 %v76
    %v648 = vunpack.c.l.b16 %v77
    %v649 = vunpack.c.h.b16 %v77
    %v650 = vunpack.c.l.b16 %v78
    %v651 = vunpack.c.h.b16 %v78
    %v652 = vunpack.c.l.b16 %v79
    %v653 = vunpack.c.h.b16 %v79
    %v654 = vunpack.c.l.b16 %v80
    %v655 = vunpack.c.h.b16 %v80
    %v656 = vunpack.c.l.b16 %v81
    %v657 = vunpack.c.h.b16 %v81
    %v658 = vunpack.c.l.b16 %v82
    %v659 = vunpack.c.h.b16 %v82
    %v660 = vunpack.c.l.b16 %v83
    %v661 = vunpack.c.h.b16 %v83
    %v662 = vunpack.c.l.b16 %v84
    %v663 = vunpack.c.h.b16 %v84
    %v664 = vunpack.c.l.b16 %v85
    %v665 = vunpack.c.h.b16 %v85
    %v666 = vunpack.c.l.b16 %v86
    %v667 = vunpack.c.h.b16 %v86
    %v668 = vunpack.c.l.b16 %v87
    %v669 = vunpack.c.h.b16 %v87
    %v670 = vunpack.c.l.b16 %v88
    %v671 = vunpack.c.h.b16 %v88
    %v672 = vunpack.c.l.b16 %v89
    %v673 = vunpack.c.h.b16 %v89
    %v674 = vunpack.c.l.b16 %v90
    %v675 = vunpack.c.h.b16 %v90
    %v676 = vunpack.c.l.b16 %v91
    %v677 = vunpack.c.h.b16 %v91
    %v678 = vunpack.c.l.b16 %v92
    %v679 = vunpack.c.h.b16 %v92
    %v680 = vunpack.c.l.b16 %v93
    %v681 = vunpack.c.h.b16 %v93
    %v682 = vunpack.c.l.b16 %v94
    %v683 = vunpack.c.h.b16 %v94
    %v684 = vunpack.c.l.b16 %v95
    %v685 = vunpack.c.h.b16 %v95
    %v686 = vunpack.c.l.b16 %v96
    %v687 = vunpack.c.h.b16 %v96
    %v688 = vunpack.c.l.b16 %v97
    %v689 = vunpack.c.h.b16 %v97
    %v690 = vunpack.c.l.b16 %v98
    %v691 = vunpack.c.h.b16 %v98
    %v692 = vunpack.c.l.b16 %v99
    %v693 = vunpack.c.h.b16 %v99
    %v694 = vunpack.c.l.b16 %v100
    %v695 = vunpack.c.h.b16 %v100
    %v696 = vunpack.c.l.b16 %v101
    %v697 = vunpack.c.h.b16 %v101
    %v698 = vunpack.c.l.b16 %v102
    %v699 = vunpack.c.h.b16 %v102
    %v700 = vunpack.c.l.b16 %v103
    %v701 = vunpack.c.h.b16 %v103
    %v702 = vunpack.c.l.b16 %v104
    %v703 = vunpack.c.h.b16 %v104
    %v704 = vunpack.c.l.b16 %v105
    %v705 = vunpack.c.h.b16 %v105
    %v706 = vunpack.c.l.b16 %v106
    %v707 = vunpack.c.h.b16 %v106
    %v708 = vunpack.c.l.b16 %v107
    %v709 = vunpack.c.h.b16 %v107
    %v710 = vunpack.c.l.b16 %v108
    %v711 = vunpack.c.h.b16 %v108
    %v712 = vunpack.c.l.b16 %v109
    %v713 = vunpack.c.h.b16 %v109
    %v714 = vunpack.c.l.b16 %v110
    %v715 = vunpack.c.h.b16 %v110
    %v716 = vunpack.c.l.b16 %v111
    %v717 = vunpack.c.h.b16 %v111
    %v718 = vunpack.c.l.b16 %v112
    %v719 = vunpack.c.h.b16 %v112
    %v720 = vunpack.c.l.b16 %v113
    %v721 = vunpack.c.h.b16 %v113
    %v722 = vunpack.c.l.b16 %v114
    %v723 = vunpack.c.h.b16 %v114
    %v724 = vunpack.c.l.b16 %v115
    %v725 = vunpack.c.h.b16 %v115
    %v726 = vunpack.c.l.b16 %v116
    %v727 = vunpack.c.h.b16 %v116
    %v728 = vunpack.c.l.b16 %v117
    %v729 = vunpack.c.h.b16 %v117
    %v730 = vunpack.c.l.b16 %v118
    %v731 = vunpack.c.h.b16 %v118
    %v732 = vunpack.c.l.b16 %v119
    %v733 = vunpack.c.h.b16 %v119
    %v734 = vunpack.c.l.b16 %v120
    %v735 = vunpack.c.h.b16 %v120
    %v736 = vunpack.c.l.b16 %v121
    %v737 = vunpack.c.h.b16 %v121
    %v738 = vunpack.c.l.b16 %v122
    %v739 = vunpack.c.h.b16 %v122
    %v740 = vunpack.c.l.b16 %v123
    %v741 = vunpack.c.h.b16 %v123
    %v742 = vunpack.c.l.b16 %v124
    %v743 = vunpack.c.h.b16 %v124
    %v744 = vunpack.c.l.b16 %v125
    %v745 = vunpack.c.h.b16 %v125
    %v746 = vunpack.c.l.b16 %v126
    %v747 = vunpack.c.h.b16 %v126
    %v748 = vunpack.c.l.b16 %v127
    %v749 = vunpack.c.h.b16 %v127
    %v750 = vunpack.c.l.b16 %v128
    %v751 = vunpack.c.h.b16 %v128
    %v752 = vunpack.c.l.b16 %v129
    %v753 = vunpack.c.h.b16 %v129
    %v754 = vunpack.c.l.b16 %v130
    %v755 = vunpack.c.h.b16 %v130
    %v756 = vunpack.c.l.b16 %v131
    %v757 = vunpack.c.h.b16 %v131
    %v758 = vunpack.c.l.b16 %v132
    %v759 = vunpack.c.h.b16 %v132
    %v760 = vunpack.c.l.b16 %v133
    %v761 = vunpack.c.h.b16 %v133
    %v762 = vunpack.c.l.b16 %v134
    %v763 = vunpack.c.h.b16 %v134
    %v764 = vunpack.c.l.b16 %v135
    %v765 = vunpack.c.h.b16 %v135
    %v766 = vunpack.c.l.b16 %v136
    %v767 = vunpack.c.h.b16 %v136
    %v768 = vunpack.c.l.b16 %v137
    %v769 = vunpack.c.h.b16 %v137
    %v770 = vunpack.c.l.b16 %v138
    %v771 = vunpack.c.h.b16 %v138
    %v772 = vunpack.c.l.b16 %v139
    %v773 = vunpack.c.h.b16 %v139
    %v774 = vunpack.c.l.b16 %v140
    %v775 = vunpack.c.h.b16 %v140
    %v776 = vunpack.c.l.b16 %v141
    %v777 = vunpack.c.h.b16 %v141
    %v778 = vunpack.c.l.b16 %v142
    %v779 = vunpack.c.h.b16 %v142
    %v780 = vunpack.c.l.b16 %v143
    %v781 = vunpack.c.h.b16 %v143
    %v782 = vunpack.c.l.b16 %v144
    %v783 = vunpack.c.h.b16 %v144
    %v784 = vunpack.c.l.b16 %v145
    %v785 = vunpack.c.h.b16 %v145
    %v786 = vunpack.c.l.b16 %v146
    %v787 = vunpack.c.h.b16 %v146
    %v788 = vunpack.c.l.b16 %v147
    %v789 = vunpack.c.h.b16 %v147
    %v790 = vunpack.c.l.b16 %v148
    %v791 = vunpack.c.h.b16 %v148
    %v792 = vunpack.c.l.b16 %v149
    %v793 = vunpack.c.h.b16 %v149
    %v794 = vunpack.c.l.b16 %v150
    %v795 = vunpack.c.h.b16 %v150
    %v796 = vunpack.c.l.b16 %v151
    %v797 = vunpack.c.h.b16 %v151
    %v798 = vunpack.c.l.b16 %v152
    %v799 = vunpack.c.h.b16 %v152
    %v800 = vunpack.c.l.b16 %v153
    %v801 = vunpack.c.h.b16 %v153
    %v802 = vunpack.c.l.b16 %v154
    %v803 = vunpack.c.h.b16 %v154
    %v804 = vunpack.c.l.b16 %v155
    %v805 = vunpack.c.h.b16 %v155
    %v806 = vunpack.c.l.b16 %v156
    %v807 = vunpack.c.h.b16 %v156
    %v808 = vunpack.c.l.b16 %v157
    %v809 = vunpack.c.h.b16 %v157
    %v810 = vunpack.c.l.b16 %v158
    %v811 = vunpack.c.h.b16 %v158
    %v812 = vunpack.c.l.b16 %v159
    %v813 = vunpack.c.h.b16 %v159
    %v814 = vunpack.c.l.b16 %v160
    %v815 = vunpack.c.h.b16 %v160
    %v816 = vunpack.c.l.b16 %v161
    %v817 = vunpack.c.h.b16 %v161
    %v818 = vunpack.c.l.b16 %v162
    %v819 = vunpack.c.h.b16 %v162
    %v820 = vunpack.c.l.b16 %v163
    %v821 = vunpack.c.h.b16 %v163
    %v822 = vunpack.c.l.b16 %v164
    %v823 = vunpack.c.h.b16 %v164
    %v824 = vunpack.c.l.b16 %v165
    %v825 = vunpack.c.h.b16 %v165
    %v826 = vunpack.c.l.b16 %v166
    %v827 = vunpack.c.h.b16 %v166
    %v828 = vunpack.c.l.b16 %v167
    %v829 = vunpack.c.h.b16 %v167
    %v830 = vunpack.c.l.b16 %v168
    %v831 = vunpack.c.h.b16 %v168
    %v832 = vunpack.c.l.b16 %v169
    %v833 = vunpack.c.h.b16 %v169
    %v834 = vunpack.c.l.b16 %v170
    %v835 = vunpack.c.h.b16 %v170
    %v836 = vunpack.c.l.b16 %v171
    %v837 = vunpack.c.h.b16 %v171
    %v838 = vunpack.c.l.b16 %v172
    %v839 = vunpack.c.h.b16 %v172
    %v840 = vunpack.c.l.b16 %v173
    %v841 = vunpack.c.h.b16 %v173
    %v842 = vunpack.c.l.b16 %v174
    %v843 = vunpack.c.h.b16 %v174
    %v844 = vunpack.c.l.b16 %v175
    %v845 = vunpack.c.h.b16 %v175
    %v846 = vunpack.c.l.b16 %v176
    %v847 = vunpack.c.h.b16 %v176
    %v848 = vunpack.c.l.b16 %v177
    %v849 = vunpack.c.h.b16 %v177
    %v850 = vunpack.c.l.b16 %v178
    %v851 = vunpack.c.h.b16 %v178
    %v852 = vunpack.c.l.b16 %v179
    %v853 = vunpack.c.h.b16 %v179
    %v854 = vunpack.c.l.b16 %v180
    %v855 = vunpack.c.h.b16 %v180
    %v856 = vunpack.c.l.b16 %v181
    %v857 = vunpack.c.h.b16 %v181
    %v858 = vunpack.c.l.b16 %v182
    %v859 = vunpack.c.h.b16 %v182
    %v860 = vunpack.c.l.b16 %v183
    %v861 = vunpack.c.h.b16 %v183
    %v862 = vunpack.c.l.b16 %v184
    %v863 = vunpack.c.h.b16 %v184
    %v864 = vunpack.c.l.b16 %v185
    %v865 = vunpack.c.h.b16 %v185
    %v866 = vunpack.c.l.b16 %v186
    %v867 = vunpack.c.h.b16 %v186
    %v868 = vunpack.c.l.b16 %v187
    %v869 = vunpack.c.h.b16 %v187
    %v870 = vunpack.c.l.b16 %v188
    %v871 = vunpack.c.h.b16 %v188
    %v872 = vunpack.c.l.b16 %v189
    %v873 = vunpack.c.h.b16 %v189
    %v874 = vunpack.c.l.b16 %v190
    %v875 = vunpack.c.h.b16 %v190
    %v876 = vunpack.c.l.b16 %v191
    %v877 = vunpack.c.h.b16 %v191
    %v878 = vunpack.c.l.b16 %v192
    %v879 = vunpack.c.h.b16 %v192
    %v880 = vunpack.c.l.b16 %v193
    %v881 = vunpack.c.h.b16 %v193
    %v882 = vunpack.c.l.b16 %v194
    %v883 = vunpack.c.h.b16 %v194
    %v884 = vunpack.c.l.b16 %v195
    %v885 = vunpack.c.h.b16 %v195
    %v886 = vunpack.c.l.b16 %v196
    %v887 = vunpack.c.h.b16 %v196
    %v888 = vunpack.c.l.b16 %v197
    %v889 = vunpack.c.h.b16 %v197
    %v890 = vunpack.c.l.b16 %v198
    %v891 = vunpack.c.h.b16 %v198
    %v892 = vunpack.c.l.b16 %v199
    %v893 = vunpack.c.h.b16 %v199
    %v894 = vunpack.c.l.b16 %v200
    %v895 = vunpack.c.h.b16 %v200
    %v896 = vunpack.c.l.b16 %v201
    %v897 = vunpack.c.h.b16 %v201
    %v898 = vunpack.c.l.b16 %v202
    %v899 = vunpack.c.h.b16 %v202
    %v900 = vunpack.c.l.b16 %v203
    %v901 = vunpack.c.h.b16 %v203
    %v902 = vunpack.c.l.b16 %v204
    %v903 = vunpack.c.h.b16 %v204
    %v904 = vunpack.c.l.b16 %v205
    %v905 = vunpack.c.h.b16 %v205
    %v906 = vunpack.c.l.b16 %v206
    %v907 = vunpack.c.h.b16 %v206
    %v908 = vunpack.c.l.b16 %v207
    %v909 = vunpack.c.h.b16 %v207
    %v910 = vunpack.c.l.b16 %v208
    %v911 = vunpack.c.h.b16 %v208
    %v912 = vunpack.c.l.b16 %v209
    %v913 = vunpack.c.h.b16 %v209
    %v914 = vunpack.c.l.b16 %v210
    %v915 = vunpack.c.h.b16 %v210
    %v916 = vunpack.c.l.b16 %v211
    %v917 = vunpack.c.h.b16 %v211
    %v918 = vunpack.c.l.b16 %v212
    %v919 = vunpack.c.h.b16 %v212
    %v920 = vunpack.c.l.b16 %v213
    %v921 = vunpack.c.h.b16 %v213
    %v922 = vunpack.c.l.b16 %v214
    %v923 = vunpack.c.h.b16 %v214
    %v924 = vunpack.c.l.b16 %v215
    %v925 = vunpack.c.h.b16 %v215
    %v926 = vunpack.c.l.b16 %v216
    %v927 = vunpack.c.h.b16 %v216
    %v928 = vunpack.c.l.b16 %v217
    %v929 = vunpack.c.h.b16 %v217
    %v930 = vunpack.c.l.b16 %v218
    %v931 = vunpack.c.h.b16 %v218
    %v932 = vunpack.c.l.b16 %v219
    %v933 = vunpack.c.h.b16 %v219
    %v934 = vunpack.c.l.b16 %v220
    %v935 = vunpack.c.h.b16 %v220
    %v936 = vunpack.c.l.b16 %v221
    %v937 = vunpack.c.h.b16 %v221
    %v938 = vunpack.c.l.b16 %v222
    %v939 = vunpack.c.h.b16 %v222
    %v940 = vunpack.c.l.b16 %v223
    %v941 = vunpack.c.h.b16 %v223
    %v942 = vunpack.c.l.b16 %v224
    %v943 = vunpack.c.h.b16 %v224
    %v944 = vunpack.c.l.b16 %v225
    %v945 = vunpack.c.h.b16 %v225
    %v946 = vunpack.c.l.b16 %v226
    %v947 = vunpack.c.h.b16 %v226
    %v948 = vunpack.c.l.b16 %v227
    %v949 = vunpack.c.h.b16 %v227
    %v950 = vunpack.c.l.b16 %v228
    %v951 = vunpack.c.h.b16 %v228
    %v952 = vunpack.c.l.b16 %v229
    %v953 = vunpack.c.h.b16 %v229
    %v954 = vunpack.c.l.b16 %v230
    %v955 = vunpack.c.h.b16 %v230
    %v956 = vunpack.c.l.b16 %v231
    %v957 = vunpack.c.h.b16 %v231
    %v958 = vunpack.c.l.b16 %v232
    %v959 = vunpack.c.h.b16 %v232
    %v960 = vunpack.c.l.b16 %v233
    %v961 = vunpack.c.h.b16 %v233
    %v962 = vunpack.c.l.b16 %v234
    %v963 = vunpack.c.h.b16 %v234
    %v964 = vunpack.c.l.b16 %v235
    %v965 = vunpack.c.h.b16 %v235
    %v966 = vunpack.c.l.b16 %v236
    %v967 = vunpack.c.h.b16 %v236
    %v968 = vunpack.c.l.b16 %v237
    %v969 = vunpack.c.h.b16 %v237
    %v970 = vunpack.c.l.b16 %v238
    %v971 = vunpack.c.h.b16 %v238
    %v972 = vunpack.c.l.b16 %v239
    %v973 = vunpack.c.h.b16 %v239
    %v974 = vunpack.c.l.b16 %v240
    %v975 = vunpack.c.h.b16 %v240
    %v976 = vunpack.c.l.b16 %v241
    %v977 = vunpack.c.h.b16 %v241
    %v978 = vunpack.c.l.b16 %v242
    %v979 = vunpack.c.h.b16 %v242
    %v980 = vunpack.c.l.b16 %v243
    %v981 = vunpack.c.h.b16 %v243
    %v982 = vunpack.c.l.b16 %v244
    %v983 = vunpack.c.h.b16 %v244
    %v984 = vunpack.c.l.b16 %v245
    %v985 = vunpack.c.h.b16 %v245
    %v986 = vunpack.c.l.b16 %v246
    %v987 = vunpack.c.h.b16 %v246
    %v988 = vunpack.c.l.b16 %v247
    %v989 = vunpack.c.h.b16 %v247
    %v990 = vunpack.c.l.b16 %v248
    %v991 = vunpack.c.h.b16 %v248
    %v992 = vunpack.c.l.b16 %v249
    %v993 = vunpack.c.h.b16 %v249
    %v994 = vunpack.c.l.b16 %v250
    %v995 = vunpack.c.h.b16 %v250
    %v996 = vunpack.c.l.b16 %v251
    %v997 = vunpack.c.h.b16 %v251
    %v998 = vunpack.c.l.b16 %v252
    %v999 = vunpack.c.h.b16 %v252
    %v1000 = vunpack.c.l.b16 %v253
    %v1001 = vunpack.c.h.b16 %v253
    %v1002 = vunpack.c.l.b16 %v254
    %v1003 = vunpack.c.h.b16 %v254
    %v1004 = vunpack.c.l.b16 %v255
    %v1005 = vunpack.c.h.b16 %v255
    %v1006 = vunpack.c.l.b16 %v256
    %v1007 = vunpack.c.h.b16 %v256
    %v1008 = vunpack.c.l.b16 %v257
    %v1009 = vunpack.c.h.b16 %v257
    %v1010 = vunpack.c.l.b16 %v258
    %v1011 = vunpack.c.h.b16 %v258
    %v1012 = vunpack.c.l.b16 %v259
    %v1013 = vunpack.c.h.b16 %v259
    %v1014 = vunpack.c.l.b16 %v260
    %v1015 = vunpack.c.h.b16 %v260
    %v1016 = vunpack.c.l.b16 %v261
    %v1017 = vunpack.c.h.b16 %v261
    %v1018 = vunpack.c.l.b16 %v262
    %v1019 = vunpack.c.h.b16 %v262
    %v1020 = vunpack.c.l.b16 %v263
    %v1021 = vunpack.c.h.b16 %v263
    %v1022 = vunpack.c.l.b16 %v264
    %v1023 = vunpack.c.h.b16 %v264
    %v1024 = vunpack.c.l.b16 %v265
    %v1025 = vunpack.c.h.b16 %v265
    %v1026 = vunpack.c.l.b16 %v266
    %v1027 = vunpack.c.h.b16 %v266
    %v1028 = vunpack.c.l.b16 %v267
    %v1029 = vunpack.c.h.b16 %v267
    %v1030 = vunpack.c.l.b16 %v268
    %v1031 = vunpack.c.h.b16 %v268
    %v1032 = vunpack.c.l.b16 %v269
    %v1033 = vunpack.c.h.b16 %v269
    %v1034 = vunpack.c.l.b16 %v270
    %v1035 = vunpack.c.h.b16 %v270
    %v1036 = vunpack.c.l.b16 %v271
    %v1037 = vunpack.c.h.b16 %v271
    %v1038 = vunpack.c.l.b16 %v272
    %v1039 = vunpack.c.h.b16 %v272
    %v1040 = vunpack.c.l.b16 %v273
    %v1041 = vunpack.c.h.b16 %v273
    %v1042 = vunpack.c.l.b16 %v274
    %v1043 = vunpack.c.h.b16 %v274
    %v1044 = vunpack.c.l.b16 %v275
    %v1045 = vunpack.c.h.b16 %v275
    %v1046 = vunpack.c.l.b16 %v276
    %v1047 = vunpack.c.h.b16 %v276
    %v1048 = vunpack.c.l.b16 %v277
    %v1049 = vunpack.c.h.b16 %v277
    %v1050 = vunpack.c.l.b16 %v278
    %v1051 = vunpack.c.h.b16 %v278
    %v1052 = vunpack.c.l.b16 %v279
    %v1053 = vunpack.c.h.b16 %v279
    %v1054 = vunpack.c.l.b16 %v280
    %v1055 = vunpack.c.h.b16 %v280
    %v1056 = vunpack.c.l.b16 %v281
    %v1057 = vunpack.c.h.b16 %v281
    %v1058 = vunpack.c.l.b16 %v282
    %v1059 = vunpack.c.h.b16 %v282
    %v1060 = vunpack.c.l.b16 %v283
    %v1061 = vunpack.c.h.b16 %v283
    %v1062 = vunpack.c.l.b16 %v284
    %v1063 = vunpack.c.h.b16 %v284
    %v1064 = vunpack.c.l.b16 %v285
    %v1065 = vunpack.c.h.b16 %v285
    %v1066 = vunpack.c.l.b16 %v286
    %v1067 = vunpack.c.h.b16 %v286
    %v1068 = vunpack.c.l.b16 %v287
    %v1069 = vunpack.c.h.b16 %v287
    %v1070 = vunpack.c.l.b16 %v288
    %v1071 = vunpack.c.h.b16 %v288
    %v1072 = vunpack.c.l.b16 %v289
    %v1073 = vunpack.c.h.b16 %v289
    %v1074 = vunpack.c.l.b16 %v290
    %v1075 = vunpack.c.h.b16 %v290
    %v1076 = vunpack.c.l.b16 %v291
    %v1077 = vunpack.c.h.b16 %v291
    %v1078 = vunpack.c.l.b16 %v292
    %v1079 = vunpack.c.h.b16 %v292
    %v1080 = vunpack.c.l.b16 %v293
    %v1081 = vunpack.c.h.b16 %v293
    %v1082 = vunpack.c.l.b16 %v294
    %v1083 = vunpack.c.h.b16 %v294
    %v1084 = vunpack.c.l.b16 %v295
    %v1085 = vunpack.c.h.b16 %v295
    %v1086 = vunpack.c.l.b16 %v296
    %v1087 = vunpack.c.h.b16 %v296
    %v1088 = vunpack.c.l.b16 %v297
    %v1089 = vunpack.c.h.b16 %v297
    %v1090 = vunpack.c.l.b16 %v298
    %v1091 = vunpack.c.h.b16 %v298
    %v1092 = vunpack.c.l.b16 %v299
    %v1093 = vunpack.c.h.b16 %v299
    %v1094 = vunpack.c.l.b16 %v300
    %v1095 = vunpack.c.h.b16 %v300
    %v1096 = vunpack.c.l.b16 %v301
    %v1097 = vunpack.c.h.b16 %v301
    %v1098 = vunpack.c.l.b16 %v302
    %v1099 = vunpack.c.h.b16 %v302
    %v1100 = vunpack.c.l.b16 %v303
    %v1101 = vunpack.c.h.b16 %v303
    %v1102 = vunpack.c.l.b16 %v304
    %v1103 = vunpack.c.h.b16 %v304
    %v1104 = vunpack.c.l.b16 %v305
    %v1105 = vunpack.c.h.b16 %v305
    %v1106 = vunpack.c.l.b16 %v306
    %v1107 = vunpack.c.h.b16 %v306
    %v1108 = vunpack.c.l.b16 %v307
    %v1109 = vunpack.c.h.b16 %v307
    %v1110 = vunpack.c.l.b16 %v308
    %v1111 = vunpack.c.h.b16 %v308
    %v1112 = vunpack.c.l.b16 %v309
    %v1113 = vunpack.c.h.b16 %v309
    %v1114 = vunpack.c.l.b16 %v310
    %v1115 = vunpack.c.h.b16 %v310
    %v1116 = vunpack.c.l.b16 %v311
    %v1117 = vunpack.c.h.b16 %v311
    %v1118 = vunpack.c.l.b16 %v312
    %v1119 = vunpack.c.h.b16 %v312
    %v1120 = vunpack.c.l.b16 %v313
    %v1121 = vunpack.c.h.b16 %v313
    %v1122 = vunpack.c.l.b16 %v314
    %v1123 = vunpack.c.h.b16 %v314
    %v1124 = vunpack.c.l.b16 %v315
    %v1125 = vunpack.c.h.b16 %v315
    %v1126 = vpack.c.b16 %v616, %v614
    %v1127 = vpack.c.b16 %v617, %v615
    %v1128 = vpack.c.b16 %v620, %v618
    %v1129 = vpack.c.b16 %v621, %v619
    %v1130 = vpack.c.b16 %v624, %v622
    %v1131 = vpack.c.b16 %v625, %v623
    %v1132 = vpack.c.b16 %v628, %v626
    %v1133 = vpack.c.b16 %v629, %v627
    %v1134 = vpack.c.b16 %v632, %v630
    %v1135 = vpack.c.b16 %v633, %v631
    %v1136 = vpack.c.b16 %v636, %v634
    %v1137 = vpack.c.b16 %v637, %v635
    %v1138 = vpack.c.b16 %v640, %v638
    %v1139 = vpack.c.b16 %v641, %v639
    %v1140 = vpack.c.b16 %v644, %v642
    %v1141 = vpack.c.b16 %v645, %v643
    %v1142 = vpack.c.b16 %v648, %v646
    %v1143 = vpack.c.b16 %v649, %v647
    %v1144 = vpack.c.b16 %v652, %v650
    %v1145 = vpack.c.b16 %v653, %v651
    %v1146 = vpack.c.b16 %v656, %v654
    %v1147 = vpack.c.b16 %v657, %v655
    %v1148 = vpack.c.b16 %v660, %v658
    %v1149 = vpack.c.b16 %v661, %v659
    %v1150 = vpack.c.b16 %v664, %v662
    %v1151 = vpack.c.b16 %v665, %v663
    %v1152 = vpack.c.b16 %v668, %v666
    %v1153 = vpack.c.b16 %v669, %v667
    %v1154 = vpack.c.b16 %v672, %v670
    %v1155 = vpack.c.b16 %v673, %v671
    %v1156 = vpack.c.b16 %v676, %v674
    %v1157 = vpack.c.b16 %v677, %v675
    %v1158 = vpack.c.b16 %v680, %v678
    %v1159 = vpack.c.b16 %v681, %v679
    %v1160 = vpack.c.b16 %v684, %v682
    %v1161 = vpack.c.b16 %v685, %v683
    %v1162 = vpack.c.b16 %v688, %v686
    %v1163 = vpack.c.b16 %v689, %v687
    %v1164 = vpack.c.b16 %v692, %v690
    %v1165 = vpack.c.b16 %v693, %v691
    %v1166 = vpack.c.b16 %v696, %v694
    %v1167 = vpack.c.b16 %v697, %v695
    %v1168 = vpack.c.b16 %v700, %v698
    %v1169 = vpack.c.b16 %v701, %v699
    %v1170 = vpack.c.b16 %v704, %v702
    %v1171 = vpack.c.b16 %v705, %v703
    %v1172 = vpack.c.b16 %v708, %v706
    %v1173 = vpack.c.b16 %v709, %v707
    %v1174 = vpack.c.b16 %v712, %v710
    %v1175 = vpack.c.b16 %v713, %v711
    %v1176 = vpack.c.b16 %v716, %v714
    %v1177 = vpack.c.b16 %v717, %v715
    %v1178 = vpack.c.b16 %v720, %v718
    %v1179 = vpack.c.b16 %v721, %v719
    %v1180 = vpack.c.b16 %v724, %v722
    %v1181 = vpack.c.b16 %v725, %v723
    %v1182 = vpack.c.b16 %v728, %v726
    %v1183 = vpack.c.b16 %v729, %v727
    %v1184 = vpack.c.b16 %v732, %v730
    %v1185 = vpack.c.b16 %v733, %v731
    %v1186 = vpack.c.b16 %v736, %v734
    %v1187 = vpack.c.b16 %v737, %v735
    %v1188 = vpack.c.b16 %v740, %v738
    %v1189 = vpack.c.b16 %v741, %v739
    %v1190 = vpack.c.b16 %v744, %v742
    %v1191 = vpack.c.b16 %v745, %v743
    %v1192 = vpack.c.b16 %v748, %v746
    %v1193 = vpack.c.b16 %v749, %v747
    %v1194 = vpack.c.b16 %v752, %v750
    %v1195 = vpack.c.b16 %v753, %v751
    %v1196 = vpack.c.b16 %v756, %v754
    %v1197 = vpack.c.b16 %v757, %v755
    %v1198 = vpack.c.b16 %v760, %v758
    %v1199 = vpack.c.b16 %v761, %v759
    %v1200 = vpack.c.b16 %v764, %v762
    %v1201 = vpack.c.b16 %v765, %v763
    %v1202 = vpack.c.b16 %v768, %v766
    %v1203 = vpack.c.b16 %v769, %v767
    %v1204 = vpack.c.b16 %v772, %v770
    %v1205 = vpack.c.b16 %v773, %v771
    %v1206 = vpack.c.b16 %v776, %v774
    %v1207 = vpack.c.b16 %v777, %v775
    %v1208 = vpack.c.b16 %v780, %v778
    %v1209 = vpack.c.b16 %v781, %v779
    %v1210 = vpack.c.b16 %v784, %v782
    %v1211 = vpack.c.b16 %v785, %v783
    %v1212 = vpack.c.b16 %v788, %v786
    %v1213 = vpack.c.b16 %v789, %v787
    %v1214 = vpack.c.b16 %v792, %v790
    %v1215 = vpack.c.b16 %v793, %v791
    %v1216 = vpack.c.b16 %v796, %v794
    %v1217 = vpack.c.b16 %v797, %v795
    %v1218 = vpack.c.b16 %v800, %v798
    %v1219 = vpack.c.b16 %v801, %v799
    %v1220 = vpack.c.b16 %v804, %v802
    %v1221 = vpack.c.b16 %v805, %v803
    %v1222 = vpack.c.b16 %v808, %v806
    %v1223 = vpack.c.b16 %v809, %v807
    %v1224 = vpack.c.b16 %v812, %v810
    %v1225 = vpack.c.b16 %v813, %v811
    %v1226 = vpack.c.b16 %v816, %v814
    %v1227 = vpack.c.b16 %v817, %v815
    %v1228 = vpack.c.b16 %v820, %v818
    %v1229 = vpack.c.b16 %v821, %v819
    %v1230 = vpack.c.b16 %v824, %v822
    %v1231 = vpack.c.b16 %v825, %v823
    %v1232 = vpack.c.b16 %v828, %v826
    %v1233 = vpack.c.b16 %v829, %v827
    %v1234 = vpack.c.b16 %v832, %v830
    %v1235 = vpack.c.b16 %v833, %v831
    %v1236 = vpack.c.b16 %v836, %v834
    %v1237 = vpack.c.b16 %v837, %v835
    %v1238 = vpack.c.b16 %v840, %v838
    %v1239 = vpack.c.b16 %v841, %v839
    %v1240 = vpack.c.b16 %v844, %v842
    %v1241 = vpack.c.b16 %v845, %v843
    %v1242 = vpack.c.b16 %v848, %v846
    %v1243 = vpack.c.b16 %v849, %v847
    %v1244 = vpack.c.b16 %v852, %v850
    %v1245 = vpack.c.b16 %v853, %v851
    %v1246 = vpack.c.b16 %v856, %v854
    %v1247 = vpack.c.b16 %v857, %v855
    %v1248 = vpack.c.b16 %v860, %v858
    %v1249 = vpack.c.b16 %v861, %v859
    %v1250 = vpack.c.b16 %v864, %v862
    %v1251 = vpack.c.b16 %v865, %v863
    %v1252 = vpack.c.b16 %v868, %v866
    %v1253 = vpack.c.b16 %v869, %v867
    %v1254 = vpack.c.b16 %v872, %v870
    %v1255 = vpack.c.b16 %v873, %v871
    %v1256 = vpack.c.b16 %v876, %v874
    %v1257 = vpack.c.b16 %v877, %v875
    %v1258 = vpack.c.b16 %v880, %v878
    %v1259 = vpack.c.b16 %v881, %v879
    %v1260 = vpack.c.b16 %v884, %v882
    %v1261 = vpack.c.b16 %v885, %v883
    %v1262 = vpack.c.b16 %v888, %v886
    %v1263 = vpack.c.b16 %v889, %v887
    %v1264 = vpack.c.b16 %v892, %v890
    %v1265 = vpack.c.b16 %v893, %v891
    %v1266 = vpack.c.b16 %v896, %v894
    %v1267 = vpack.c.b16 %v897, %v895
    %v1268 = vpack.c.b16 %v900, %v898
    %v1269 = vpack.c.b16 %v901, %v899
    %v1270 = vpack.c.b16 %v904, %v902
    %v1271 = vpack.c.b16 %v905, %v903
    %v1272 = vpack.c.b16 %v908, %v906
    %v1273 = vpack.c.b16 %v909, %v907
    %v1274 = vpack.c.b16 %v912, %v910
    %v1275 = vpack.c.b16 %v913, %v911
    %v1276 = vpack.c.b16 %v916, %v914
    %v1277 = vpack.c.b16 %v917, %v915
    %v1278 = vpack.c.b16 %v920, %v918
    %v1279 = vpack.c.b16 %v921, %v919
    %v1280 = vpack.c.b16 %v924, %v922
    %v1281 = vpack.c.b16 %v925, %v923
    %v1282 = vpack.c.b16 %v928, %v926
    %v1283 = vpack.c.b16 %v929, %v927
    %v1284 = vpack.c.b16 %v932, %v930
    %v1285 = vpack.c.b16 %v933, %v931
    %v1286 = vpack.c.b16 %v936, %v934
    %v1287 = vpack.c.b16 %v937, %v935
    %v1288 = vpack.c.b16 %v940, %v938
    %v1289 = vpack.c.b16 %v941, %v939
    %v1290 = vpack.c.b16 %v944, %v942
    %v1291 = vpack.c.b16 %v945, %v943
    %v1292 = vpack.c.b16 %v948, %v946
    %v1293 = vpack.c.b16 %v949, %v947
    %v1294 = vpack.c.b16 %v952, %v950
    %v1295 = vpack.c.b16 %v953, %v951
    %v1296 = vpack.c.b16 %v956, %v954
    %v1297 = vpack.c.b16 %v957, %v955
    %v1298 = vpack.c.b16 %v960, %v958
    %v1299 = vpack.c.b16 %v961, %v959
    %v1300 = vpack.c.b16 %v964, %v962
    %v1301 = vpack.c.b16 %v965, %v963
    %v1302 = vpack.c.b16 %v968, %v966
    %v1303 = vpack.c.b16 %v969, %v967
    %v1304 = vpack.c.b16 %v972, %v970
    %v1305 = vpack.c.b16 %v973, %v971
    %v1306 = vpack.c.b16 %v976, %v974
    %v1307 = vpack.c.b16 %v977, %v975
    %v1308 = vpack.c.b16 %v980, %v978
    %v1309 = vpack.c.b16 %v981, %v979
    %v1310 = vpack.c.b16 %v984, %v982
    %v1311 = vpack.c.b16 %v985, %v983
    %v1312 = vpack.c.b16 %v988, %v986
    %v1313 = vpack.c.b16 %v989, %v987
    %v1314 = vpack.c.b16 %v992, %v990
    %v1315 = vpack.c.b16 %v993, %v991
    %v1316 = vpack.c.b16 %v996, %v994
    %v1317 = vpack.c.b16 %v997, %v995
    %v1318 = vpack.c.b16 %v1000, %v998
    %v1319 = vpack.c.b16 %v1001, %v999
    %v1320 = vpack.c.b16 %v1004, %v1002
    %v1321 = vpack.c.b16 %v1005, %v1003
    %v1322 = vpack.c.b16 %v1008, %v1006
    %v1323 = vpack.c.b16 %v1009, %v1007
    %v1324 = vpack.c.b16 %v1012, %v1010
    %v1325 = vpack.c.b16 %v1013, %v1011
    %v1326 = vpack.c.b16 %v1016, %v1014
    %v1327 = vpack.c.b16 %v1017, %v1015
    %v1328 = vpack.c.b16 %v1020, %v1018
    %v1329 = vpack.c.b16 %v1021, %v1019
    %v1330 = vpack.c.b16 %v1024, %v1022
    %v1331 = vpack.c.b16 %v1025, %v1023
    %v1332 = vpack.c.b16 %v1028, %v1026
    %v1333 = vpack.c.b16 %v1029, %v1027
    %v1334 = vpack.c.b16 %v1032, %v1030
    %v1335 = vpack.c.b16 %v1033, %v1031
    %v1336 = vpack.c.b16 %v1036, %v1034
    %v1337 = vpack.c.b16 %v1037, %v1035
    %v1338 = vpack.c.b16 %v1040, %v1038
    %v1339 = vpack.c.b16 %v1041, %v1039
    %v1340 = vpack.c.b16 %v1044, %v1042
    %v1341 = vpack.c.b16 %v1045, %v1043
    %v1342 = vpack.c.b16 %v1048, %v1046
    %v1343 = vpack.c.b16 %v1049, %v1047
    %v1344 = vpack.c.b16 %v1052, %v1050
    %v1345 = vpack.c.b16 %v1053, %v1051
    %v1346 = vpack.c.b16 %v1056, %v1054
    %v1347 = vpack.c.b16 %v1057, %v1055
    %v1348 = vpack.c.b16 %v1060, %v1058
    %v1349 = vpack.c.b16 %v1061, %v1059
    %v1350 = vpack.c.b16 %v1064, %v1062
    %v1351 = vpack.c.b16 %v1065, %v1063
    %v1352 = vpack.c.b16 %v1068, %v1066
    %v1353 = vpack.c.b16 %v1069, %v1067
    %v1354 = vpack.c.b16 %v1072, %v1070
    %v1355 = vpack.c.b16 %v1073, %v1071
    %v1356 = vpack.c.b16 %v1076, %v1074
    %v1357 = vpack.c.b16 %v1077, %v1075
    %v1358 = vpack.c.b16 %v1080, %v1078
    %v1359 = vpack.c.b16 %v1081, %v1079
    %v1360 = vpack.c.b16 %v1084, %v1082
    %v1361 = vpack.c.b16 %v1085, %v1083
    %v1362 = vpack.c.b16 %v1088, %v1086
    %v1363 = vpack.c.b16 %v1089, %v1087
    %v1364 = vpack.c.b16 %v1092, %v1090
    %v1365 = vpack.c.b16 %v1093, %v1091
    %v1366 = vpack.c.b16 %v1096, %v1094
    %v1367 = vpack.c.b16 %v1097, %v1095
    %v1368 = vpack.c.b16 %v1100, %v1098
    %v1369 = vpack.c.b16 %v1101, %v1099
    %v1370 = vpack.c.b16 %v1104, %v1102
    %v1371 = vpack.c.b16 %v1105, %v1103
    %v1372 = vpack.c.b16 %v1108, %v1106
    %v1373 = vpack.c.b16 %v1109, %v1107
    %v1374 = vpack.c.b16 %v1112, %v1110
    %v1375 = vpack.c.b16 %v1113, %v1111
    %v1376 = vpack.c.b16 %v1116, %v1114
    %v1377 = vpack.c.b16 %v1117, %v1115
    %v1378 = vpack.c.b16 %v1120, %v1118
    %v1379 = vpack.c.b16 %v1121, %v1119
    %v1380 = vpack.c.b16 %v1124, %v1122
    %v1381 = vpack.c.b16 %v1125, %v1123
    %1638 = vmatpush.bf16.msra.mxu0 %v1140
    %1639 = vmatpush.bf16.msra.mxu0 %v1138
    %1640 = vmatpush.bf16.msra.mxu0 %v1136
    %1641 = vmatpush.bf16.msra.mxu0 %v1134
    %1642 = vmatpush.bf16.msra.mxu0 %v1132
    %1643 = vmatpush.bf16.msra.mxu0 %v1130
    %1644 = vmatpush.bf16.msra.mxu0 %v1128
    %1645 = vmatpush.bf16.msra.mxu0 %v1126
    %1646 = vmatmul.bf16.gmra.mxu0 %v324
    %v1647 = vpop.f32.mrf.mxu0
    %v1648 = vadd.f32 %v318, %v1647
    %v1649 = vpop.f32.mrf.mxu0
    %1650 = vdwg.mxu0
    %1651 = vmatpush.bf16.msra.mxu0 %v1156
    %1652 = vmatpush.bf16.msra.mxu0 %v1154
    %1653 = vmatpush.bf16.msra.mxu0 %v1152
    %1654 = vmatpush.bf16.msra.mxu0 %v1150
    %1655 = vmatpush.bf16.msra.mxu0 %v1148
    %1656 = vmatpush.bf16.msra.mxu0 %v1146
    %1657 = vmatpush.bf16.msra.mxu0 %v1144
    %1658 = vmatpush.bf16.msra.mxu0 %v1142
    %1659 = vmatmul.bf16.gmra.mxu0 %v325
    %v1660 = vpop.f32.mrf.mxu0
    %v1661 = vadd.f32 %v1648, %v1660
    %v1662 = vpop.f32.mrf.mxu0
    %1663 = vdwg.mxu0
    %1664 = vmatpush.bf16.msra.mxu0 %v1172
    %1665 = vmatpush.bf16.msra.mxu0 %v1170
    %1666 = vmatpush.bf16.msra.mxu0 %v1168
    %1667 = vmatpush.bf16.msra.mxu0 %v1166
    %1668 = vmatpush.bf16.msra.mxu0 %v1164
    %1669 = vmatpush.bf16.msra.mxu0 %v1162
    %1670 = vmatpush.bf16.msra.mxu0 %v1160
    %1671 = vmatpush.bf16.msra.mxu0 %v1158
    %1672 = vmatmul.bf16.gmra.mxu0 %v326
    %v1673 = vpop.f32.mrf.mxu0
    %v1674 = vadd.f32 %v1661, %v1673
    %v1675 = vpop.f32.mrf.mxu0
    %1676 = vdwg.mxu0
    %1677 = vmatpush.bf16.msra.mxu0 %v1188
    %1678 = vmatpush.bf16.msra.mxu0 %v1186
    %1679 = vmatpush.bf16.msra.mxu0 %v1184
    %1680 = vmatpush.bf16.msra.mxu0 %v1182
    %1681 = vmatpush.bf16.msra.mxu0 %v1180
    %1682 = vmatpush.bf16.msra.mxu0 %v1178
    %1683 = vmatpush.bf16.msra.mxu0 %v1176
    %1684 = vmatpush.bf16.msra.mxu0 %v1174
    %1685 = vmatmul.bf16.gmra.mxu0 %v327
    %v1686 = vpop.f32.mrf.mxu0
    %v1687 = vadd.f32 %v1674, %v1686
    %v1688 = vpop.f32.mrf.mxu0
    %1689 = vdwg.mxu0
    %1690 = vmatpush.bf16.msra.mxu0 %v1204
    %1691 = vmatpush.bf16.msra.mxu0 %v1202
    %1692 = vmatpush.bf16.msra.mxu0 %v1200
    %1693 = vmatpush.bf16.msra.mxu0 %v1198
    %1694 = vmatpush.bf16.msra.mxu0 %v1196
    %1695 = vmatpush.bf16.msra.mxu0 %v1194
    %1696 = vmatpush.bf16.msra.mxu0 %v1192
    %1697 = vmatpush.bf16.msra.mxu0 %v1190
    %1698 = vmatmul.bf16.gmra.mxu0 %v328
    %v1699 = vpop.f32.mrf.mxu0
    %v1700 = vadd.f32 %v1687, %v1699
    %v1701 = vpop.f32.mrf.mxu0
    %1702 = vdwg.mxu0
    %1703 = vmatpush.bf16.msra.mxu0 %v1220
    %1704 = vmatpush.bf16.msra.mxu0 %v1218
    %1705 = vmatpush.bf16.msra.mxu0 %v1216
    %1706 = vmatpush.bf16.msra.mxu0 %v1214
    %1707 = vmatpush.bf16.msra.mxu0 %v1212
    %1708 = vmatpush.bf16.msra.mxu0 %v1210
    %1709 = vmatpush.bf16.msra.mxu0 %v1208
    %1710 = vmatpush.bf16.msra.mxu0 %v1206
    %1711 = vmatmul.bf16.gmra.mxu0 %v329
    %v1712 = vpop.f32.mrf.mxu0
    %v1713 = vadd.f32 %v1700, %v1712
    %v1714 = vpop.f32.mrf.mxu0
    %1715 = vdwg.mxu0
    %1716 = vmatpush.bf16.msra.mxu0 %v1236
    %1717 = vmatpush.bf16.msra.mxu0 %v1234
    %1718 = vmatpush.bf16.msra.mxu0 %v1232
    %1719 = vmatpush.bf16.msra.mxu0 %v1230
    %1720 = vmatpush.bf16.msra.mxu0 %v1228
    %1721 = vmatpush.bf16.msra.mxu0 %v1226
    %1722 = vmatpush.bf16.msra.mxu0 %v1224
    %1723 = vmatpush.bf16.msra.mxu0 %v1222
    %1724 = vmatmul.bf16.gmra.mxu0 %v330
    %v1725 = vpop.f32.mrf.mxu0
    %v1726 = vadd.f32 %v1713, %v1725
    %v1727 = vpop.f32.mrf.mxu0
    %1728 = vdwg.mxu0
    %1729 = vmatpush.bf16.msra.mxu0 %v1252
    %1730 = vmatpush.bf16.msra.mxu0 %v1250
    %1731 = vmatpush.bf16.msra.mxu0 %v1248
    %1732 = vmatpush.bf16.msra.mxu0 %v1246
    %1733 = vmatpush.bf16.msra.mxu0 %v1244
    %1734 = vmatpush.bf16.msra.mxu0 %v1242
    %1735 = vmatpush.bf16.msra.mxu0 %v1240
    %1736 = vmatpush.bf16.msra.mxu0 %v1238
    %1737 = vmatmul.bf16.gmra.mxu0 %v331
    %v1738 = vpop.f32.mrf.mxu0
    %v1739 = vadd.f32 %v1726, %v1738
    %v1740 = vpop.f32.mrf.mxu0
    %1741 = vdwg.mxu0
    %1742 = vmatpush.bf16.msra.mxu0 %v1268
    %1743 = vmatpush.bf16.msra.mxu0 %v1266
    %1744 = vmatpush.bf16.msra.mxu0 %v1264
    %1745 = vmatpush.bf16.msra.mxu0 %v1262
    %1746 = vmatpush.bf16.msra.mxu0 %v1260
    %1747 = vmatpush.bf16.msra.mxu0 %v1258
    %1748 = vmatpush.bf16.msra.mxu0 %v1256
    %1749 = vmatpush.bf16.msra.mxu0 %v1254
    %1750 = vmatmul.bf16.gmra.mxu0 %v334
    %v1751 = vpop.f32.mrf.mxu0
    %v1752 = vadd.f32 %v1739, %v1751
    %v1753 = vpop.f32.mrf.mxu0
    %1754 = vdwg.mxu0
    %1755 = vmatpush.bf16.msra.mxu0 %v1284
    %1756 = vmatpush.bf16.msra.mxu0 %v1282
    %1757 = vmatpush.bf16.msra.mxu0 %v1280
    %1758 = vmatpush.bf16.msra.mxu0 %v1278
    %1759 = vmatpush.bf16.msra.mxu0 %v1276
    %1760 = vmatpush.bf16.msra.mxu0 %v1274
    %1761 = vmatpush.bf16.msra.mxu0 %v1272
    %1762 = vmatpush.bf16.msra.mxu0 %v1270
    %1763 = vmatmul.bf16.gmra.mxu0 %v335
    %v1764 = vpop.f32.mrf.mxu0
    %v1765 = vadd.f32 %v1752, %v1764
    %v1766 = vpop.f32.mrf.mxu0
    %1767 = vdwg.mxu0
    %1768 = vmatpush.bf16.msra.mxu0 %v1300
    %1769 = vmatpush.bf16.msra.mxu0 %v1298
    %1770 = vmatpush.bf16.msra.mxu0 %v1296
    %1771 = vmatpush.bf16.msra.mxu0 %v1294
    %1772 = vmatpush.bf16.msra.mxu0 %v1292
    %1773 = vmatpush.bf16.msra.mxu0 %v1290
    %1774 = vmatpush.bf16.msra.mxu0 %v1288
    %1775 = vmatpush.bf16.msra.mxu0 %v1286
    %1776 = vmatmul.bf16.gmra.mxu0 %v336
    %v1777 = vpop.f32.mrf.mxu0
    %v1778 = vadd.f32 %v1765, %v1777
    %v1779 = vpop.f32.mrf.mxu0
    %1780 = vdwg.mxu0
    %1781 = vmatpush.bf16.msra.mxu0 %v1316
    %1782 = vmatpush.bf16.msra.mxu0 %v1314
    %1783 = vmatpush.bf16.msra.mxu0 %v1312
    %1784 = vmatpush.bf16.msra.mxu0 %v1310
    %1785 = vmatpush.bf16.msra.mxu0 %v1308
    %1786 = vmatpush.bf16.msra.mxu0 %v1306
    %1787 = vmatpush.bf16.msra.mxu0 %v1304
    %1788 = vmatpush.bf16.msra.mxu0 %v1302
    %1789 = vmatmul.bf16.gmra.mxu0 %v337
    %v1790 = vpop.f32.mrf.mxu0
    %v1791 = vadd.f32 %v1778, %v1790
    %v1792 = vpop.f32.mrf.mxu0
    %1793 = vdwg.mxu0
    %1794 = vmatpush.bf16.msra.mxu0 %v1332
    %1795 = vmatpush.bf16.msra.mxu0 %v1330
    %1796 = vmatpush.bf16.msra.mxu0 %v1328
    %1797 = vmatpush.bf16.msra.mxu0 %v1326
    %1798 = vmatpush.bf16.msra.mxu0 %v1324
    %1799 = vmatpush.bf16.msra.mxu0 %v1322
    %1800 = vmatpush.bf16.msra.mxu0 %v1320
    %1801 = vmatpush.bf16.msra.mxu0 %v1318
    %1802 = vmatmul.bf16.gmra.mxu0 %v338
    %v1803 = vpop.f32.mrf.mxu0
    %v1804 = vadd.f32 %v1791, %v1803
    %v1805 = vpop.f32.mrf.mxu0
    %1806 = vdwg.mxu0
    %1807 = vmatpush.bf16.msra.mxu0 %v1348
    %1808 = vmatpush.bf16.msra.mxu0 %v1346
    %1809 = vmatpush.bf16.msra.mxu0 %v1344
    %1810 = vmatpush.bf16.msra.mxu0 %v1342
    %1811 = vmatpush.bf16.msra.mxu0 %v1340
    %1812 = vmatpush.bf16.msra.mxu0 %v1338
    %1813 = vmatpush.bf16.msra.mxu0 %v1336
    %1814 = vmatpush.bf16.msra.mxu0 %v1334
    %1815 = vmatmul.bf16.gmra.mxu0 %v339
    %v1816 = vpop.f32.mrf.mxu0
    %v1817 = vadd.f32 %v1804, %v1816
    %v1818 = vpop.f32.mrf.mxu0
    %1819 = vdwg.mxu0
    %1820 = vmatpush.bf16.msra.mxu0 %v1364
    %1821 = vmatpush.bf16.msra.mxu0 %v1362
    %1822 = vmatpush.bf16.msra.mxu0 %v1360
    %1823 = vmatpush.bf16.msra.mxu0 %v1358
    %1824 = vmatpush.bf16.msra.mxu0 %v1356
    %1825 = vmatpush.bf16.msra.mxu0 %v1354
    %1826 = vmatpush.bf16.msra.mxu0 %v1352
    %1827 = vmatpush.bf16.msra.mxu0 %v1350
    %1828 = vmatmul.bf16.gmra.mxu0 %v340
    %v1829 = vpop.f32.mrf.mxu0
    %v1830 = vadd.f32 %v1817, %v1829
    %v1831 = vpop.f32.mrf.mxu0
    %1832 = vdwg.mxu0
    %1833 = vmatpush.bf16.msra.mxu0 %v1380
    %1834 = vmatpush.bf16.msra.mxu0 %v1378
    %1835 = vmatpush.bf16.msra.mxu0 %v1376
    %1836 = vmatpush.bf16.msra.mxu0 %v1374
    %1837 = vmatpush.bf16.msra.mxu0 %v1372
    %1838 = vmatpush.bf16.msra.mxu0 %v1370
    %1839 = vmatpush.bf16.msra.mxu0 %v1368
    %1840 = vmatpush.bf16.msra.mxu0 %v1366
    %1841 = vmatmul.bf16.gmra.mxu0 %v341
    %v1842 = vpop.f32.mrf.mxu0
    %v1843 = vadd.f32 %v1830, %v1842
    %v1844 = vpop.f32.mrf.mxu0
    %1845 = vdwg.mxu0
    %1846 = vmatpush.bf16.msra.mxu0 %v1141
    %1847 = vmatpush.bf16.msra.mxu0 %v1139
    %1848 = vmatpush.bf16.msra.mxu0 %v1137
    %1849 = vmatpush.bf16.msra.mxu0 %v1135
    %1850 = vmatpush.bf16.msra.mxu0 %v1133
    %1851 = vmatpush.bf16.msra.mxu0 %v1131
    %1852 = vmatpush.bf16.msra.mxu0 %v1129
    %1853 = vmatpush.bf16.msra.mxu0 %v1127
    %1854 = vmatmul.bf16.gmra.mxu0 %v324
    %v1855 = vpop.f32.mrf.mxu0
    %v1856 = vadd.f32 %v319, %v1855
    %v1857 = vpop.f32.mrf.mxu0
    %1858 = vdwg.mxu0
    %1859 = vmatpush.bf16.msra.mxu0 %v1157
    %1860 = vmatpush.bf16.msra.mxu0 %v1155
    %1861 = vmatpush.bf16.msra.mxu0 %v1153
    %1862 = vmatpush.bf16.msra.mxu0 %v1151
    %1863 = vmatpush.bf16.msra.mxu0 %v1149
    %1864 = vmatpush.bf16.msra.mxu0 %v1147
    %1865 = vmatpush.bf16.msra.mxu0 %v1145
    %1866 = vmatpush.bf16.msra.mxu0 %v1143
    %1867 = vmatmul.bf16.gmra.mxu0 %v325
    %v1868 = vpop.f32.mrf.mxu0
    %v1869 = vadd.f32 %v1856, %v1868
    %v1870 = vpop.f32.mrf.mxu0
    %1871 = vdwg.mxu0
    %1872 = vmatpush.bf16.msra.mxu0 %v1173
    %1873 = vmatpush.bf16.msra.mxu0 %v1171
    %1874 = vmatpush.bf16.msra.mxu0 %v1169
    %1875 = vmatpush.bf16.msra.mxu0 %v1167
    %1876 = vmatpush.bf16.msra.mxu0 %v1165
    %1877 = vmatpush.bf16.msra.mxu0 %v1163
    %1878 = vmatpush.bf16.msra.mxu0 %v1161
    %1879 = vmatpush.bf16.msra.mxu0 %v1159
    %1880 = vmatmul.bf16.gmra.mxu0 %v326
    %v1881 = vpop.f32.mrf.mxu0
    %v1882 = vadd.f32 %v1869, %v1881
    %v1883 = vpop.f32.mrf.mxu0
    %1884 = vdwg.mxu0
    %1885 = vmatpush.bf16.msra.mxu0 %v1189
    %1886 = vmatpush.bf16.msra.mxu0 %v1187
    %1887 = vmatpush.bf16.msra.mxu0 %v1185
    %1888 = vmatpush.bf16.msra.mxu0 %v1183
    %1889 = vmatpush.bf16.msra.mxu0 %v1181
    %1890 = vmatpush.bf16.msra.mxu0 %v1179
    %1891 = vmatpush.bf16.msra.mxu0 %v1177
    %1892 = vmatpush.bf16.msra.mxu0 %v1175
    %1893 = vmatmul.bf16.gmra.mxu0 %v327
    %v1894 = vpop.f32.mrf.mxu0
    %v1895 = vadd.f32 %v1882, %v1894
    %v1896 = vpop.f32.mrf.mxu0
    %1897 = vdwg.mxu0
    %1898 = vmatpush.bf16.msra.mxu0 %v1205
    %1899 = vmatpush.bf16.msra.mxu0 %v1203
    %1900 = vmatpush.bf16.msra.mxu0 %v1201
    %1901 = vmatpush.bf16.msra.mxu0 %v1199
    %1902 = vmatpush.bf16.msra.mxu0 %v1197
    %1903 = vmatpush.bf16.msra.mxu0 %v1195
    %1904 = vmatpush.bf16.msra.mxu0 %v1193
    %1905 = vmatpush.bf16.msra.mxu0 %v1191
    %1906 = vmatmul.bf16.gmra.mxu0 %v328
    %v1907 = vpop.f32.mrf.mxu0
    %v1908 = vadd.f32 %v1895, %v1907
    %v1909 = vpop.f32.mrf.mxu0
    %1910 = vdwg.mxu0
    %1911 = vmatpush.bf16.msra.mxu0 %v1221
    %1912 = vmatpush.bf16.msra.mxu0 %v1219
    %1913 = vmatpush.bf16.msra.mxu0 %v1217
    %1914 = vmatpush.bf16.msra.mxu0 %v1215
    %1915 = vmatpush.bf16.msra.mxu0 %v1213
    %1916 = vmatpush.bf16.msra.mxu0 %v1211
    %1917 = vmatpush.bf16.msra.mxu0 %v1209
    %1918 = vmatpush.bf16.msra.mxu0 %v1207
    %1919 = vmatmul.bf16.gmra.mxu0 %v329
    %v1920 = vpop.f32.mrf.mxu0
    %v1921 = vadd.f32 %v1908, %v1920
    %v1922 = vpop.f32.mrf.mxu0
    %1923 = vdwg.mxu0
    %1924 = vmatpush.bf16.msra.mxu0 %v1237
    %1925 = vmatpush.bf16.msra.mxu0 %v1235
    %1926 = vmatpush.bf16.msra.mxu0 %v1233
    %1927 = vmatpush.bf16.msra.mxu0 %v1231
    %1928 = vmatpush.bf16.msra.mxu0 %v1229
    %1929 = vmatpush.bf16.msra.mxu0 %v1227
    %1930 = vmatpush.bf16.msra.mxu0 %v1225
    %1931 = vmatpush.bf16.msra.mxu0 %v1223
    %1932 = vmatmul.bf16.gmra.mxu0 %v330
    %v1933 = vpop.f32.mrf.mxu0
    %v1934 = vadd.f32 %v1921, %v1933
    %v1935 = vpop.f32.mrf.mxu0
    %1936 = vdwg.mxu0
    %1937 = vmatpush.bf16.msra.mxu0 %v1253
    %1938 = vmatpush.bf16.msra.mxu0 %v1251
    %1939 = vmatpush.bf16.msra.mxu0 %v1249
    %1940 = vmatpush.bf16.msra.mxu0 %v1247
    %1941 = vmatpush.bf16.msra.mxu0 %v1245
    %1942 = vmatpush.bf16.msra.mxu0 %v1243
    %1943 = vmatpush.bf16.msra.mxu0 %v1241
    %1944 = vmatpush.bf16.msra.mxu0 %v1239
    %1945 = vmatmul.bf16.gmra.mxu0 %v331
    %v1946 = vpop.f32.mrf.mxu0
    %v1947 = vadd.f32 %v1934, %v1946
    %v1948 = vpop.f32.mrf.mxu0
    %1949 = vdwg.mxu0
    %1950 = vmatpush.bf16.msra.mxu0 %v1269
    %1951 = vmatpush.bf16.msra.mxu0 %v1267
    %1952 = vmatpush.bf16.msra.mxu0 %v1265
    %1953 = vmatpush.bf16.msra.mxu0 %v1263
    %1954 = vmatpush.bf16.msra.mxu0 %v1261
    %1955 = vmatpush.bf16.msra.mxu0 %v1259
    %1956 = vmatpush.bf16.msra.mxu0 %v1257
    %1957 = vmatpush.bf16.msra.mxu0 %v1255
    %1958 = vmatmul.bf16.gmra.mxu0 %v334
    %v1959 = vpop.f32.mrf.mxu0
    %v1960 = vadd.f32 %v1947, %v1959
    %v1961 = vpop.f32.mrf.mxu0
    %1962 = vdwg.mxu0
    %1963 = vmatpush.bf16.msra.mxu0 %v1285
    %1964 = vmatpush.bf16.msra.mxu0 %v1283
    %1965 = vmatpush.bf16.msra.mxu0 %v1281
    %1966 = vmatpush.bf16.msra.mxu0 %v1279
    %1967 = vmatpush.bf16.msra.mxu0 %v1277
    %1968 = vmatpush.bf16.msra.mxu0 %v1275
    %1969 = vmatpush.bf16.msra.mxu0 %v1273
    %1970 = vmatpush.bf16.msra.mxu0 %v1271
    %1971 = vmatmul.bf16.gmra.mxu0 %v335
    %v1972 = vpop.f32.mrf.mxu0
    %v1973 = vadd.f32 %v1960, %v1972
    %v1974 = vpop.f32.mrf.mxu0
    %1975 = vdwg.mxu0
    %1976 = vmatpush.bf16.msra.mxu0 %v1301
    %1977 = vmatpush.bf16.msra.mxu0 %v1299
    %1978 = vmatpush.bf16.msra.mxu0 %v1297
    %1979 = vmatpush.bf16.msra.mxu0 %v1295
    %1980 = vmatpush.bf16.msra.mxu0 %v1293
    %1981 = vmatpush.bf16.msra.mxu0 %v1291
    %1982 = vmatpush.bf16.msra.mxu0 %v1289
    %1983 = vmatpush.bf16.msra.mxu0 %v1287
    %1984 = vmatmul.bf16.gmra.mxu0 %v336
    %v1985 = vpop.f32.mrf.mxu0
    %v1986 = vadd.f32 %v1973, %v1985
    %v1987 = vpop.f32.mrf.mxu0
    %1988 = vdwg.mxu0
    %1989 = vmatpush.bf16.msra.mxu0 %v1317
    %1990 = vmatpush.bf16.msra.mxu0 %v1315
    %1991 = vmatpush.bf16.msra.mxu0 %v1313
    %1992 = vmatpush.bf16.msra.mxu0 %v1311
    %1993 = vmatpush.bf16.msra.mxu0 %v1309
    %1994 = vmatpush.bf16.msra.mxu0 %v1307
    %1995 = vmatpush.bf16.msra.mxu0 %v1305
    %1996 = vmatpush.bf16.msra.mxu0 %v1303
    %1997 = vmatmul.bf16.gmra.mxu0 %v337
    %v1998 = vpop.f32.mrf.mxu0
    %v1999 = vadd.f32 %v1986, %v1998
    %v2000 = vpop.f32.mrf.mxu0
    %2001 = vdwg.mxu0
    %2002 = vmatpush.bf16.msra.mxu0 %v1333
    %2003 = vmatpush.bf16.msra.mxu0 %v1331
    %2004 = vmatpush.bf16.msra.mxu0 %v1329
    %2005 = vmatpush.bf16.msra.mxu0 %v1327
    %2006 = vmatpush.bf16.msra.mxu0 %v1325
    %2007 = vmatpush.bf16.msra.mxu0 %v1323
    %2008 = vmatpush.bf16.msra.mxu0 %v1321
    %2009 = vmatpush.bf16.msra.mxu0 %v1319
    %2010 = vmatmul.bf16.gmra.mxu0 %v338
    %v2011 = vpop.f32.mrf.mxu0
    %v2012 = vadd.f32 %v1999, %v2011
    %v2013 = vpop.f32.mrf.mxu0
    %2014 = vdwg.mxu0
    %2015 = vmatpush.bf16.msra.mxu0 %v1349
    %2016 = vmatpush.bf16.msra.mxu0 %v1347
    %2017 = vmatpush.bf16.msra.mxu0 %v1345
    %2018 = vmatpush.bf16.msra.mxu0 %v1343
    %2019 = vmatpush.bf16.msra.mxu0 %v1341
    %2020 = vmatpush.bf16.msra.mxu0 %v1339
    %2021 = vmatpush.bf16.msra.mxu0 %v1337
    %2022 = vmatpush.bf16.msra.mxu0 %v1335
    %2023 = vmatmul.bf16.gmra.mxu0 %v339
    %v2024 = vpop.f32.mrf.mxu0
    %v2025 = vadd.f32 %v2012, %v2024
    %v2026 = vpop.f32.mrf.mxu0
    %2027 = vdwg.mxu0
    %2028 = vmatpush.bf16.msra.mxu0 %v1365
    %2029 = vmatpush.bf16.msra.mxu0 %v1363
    %2030 = vmatpush.bf16.msra.mxu0 %v1361
    %2031 = vmatpush.bf16.msra.mxu0 %v1359
    %2032 = vmatpush.bf16.msra.mxu0 %v1357
    %2033 = vmatpush.bf16.msra.mxu0 %v1355
    %2034 = vmatpush.bf16.msra.mxu0 %v1353
    %2035 = vmatpush.bf16.msra.mxu0 %v1351
    %2036 = vmatmul.bf16.gmra.mxu0 %v340
    %v2037 = vpop.f32.mrf.mxu0
    %v2038 = vadd.f32 %v2025, %v2037
    %v2039 = vpop.f32.mrf.mxu0
    %2040 = vdwg.mxu0
    %2041 = vmatpush.bf16.msra.mxu0 %v1381
    %2042 = vmatpush.bf16.msra.mxu0 %v1379
    %2043 = vmatpush.bf16.msra.mxu0 %v1377
    %2044 = vmatpush.bf16.msra.mxu0 %v1375
    %2045 = vmatpush.bf16.msra.mxu0 %v1373
    %2046 = vmatpush.bf16.msra.mxu0 %v1371
    %2047 = vmatpush.bf16.msra.mxu0 %v1369
    %2048 = vmatpush.bf16.msra.mxu0 %v1367
    %2049 = vmatmul.bf16.gmra.mxu0 %v341
    %v2050 = vpop.f32.mrf.mxu0
    %v2051 = vadd.f32 %v2038, %v2050
    %v2052 = vpop.f32.mrf.mxu0
    %2053 = vdwg.mxu0
    %v2054 = vmul.f32 %v1843, 0.5
    %v2055 = vmul.f32 %v2051, 0.5
    %v2056 = vmul.f32 %v1843, 0.044715
    %v2057 = vmul.f32 %v2051, 0.044715
    %v2058 = vmul.f32 %v2056, %v1843
    %v2059 = vmul.f32 %v2057, %v2051
    %v2060 = vmul.f32 %v2058, %v1843
    %v2061 = vmul.f32 %v2059, %v2051
    %v2062 = vadd.f32 %v1843, %v2060
    %v2063 = vadd.f32 %v2051, %v2061
    %v2064 = vmul.f32 %v2062, 0.7978846
    %v2065 = vmul.f32 %v2063, 0.7978846
    %v2066 = vtanh.pop %v2064
    %v2067 = vtanh.pop %v2065
    %v2068 = vadd.f32 %v2066, 1.0
    %v2069 = vadd.f32 %v2067, 1.0
    %v2070 = vmul.f32 %v2054, %v2068
    %v2071 = vmul.f32 %v2055, %v2069
    %v2072 = vpack.c.bf16 %v2070, %v2070
    %v2073 = vpack.c.bf16 %v2071, %v2071
    %v2074 = vld [vmem:[%s3] sm:$0xf]
    %v2075 = vld [vmem:[%s3 + $0x4] sm:$0xf]
    %v2076 = vld [vmem:[%s3 + $0x8] sm:$0xf]
    %v2077 = vld [vmem:[%s3 + $0xc] sm:$0xf]
    %v2078 = vld [vmem:[%s3 + $0x10] sm:$0xf]
    %v2079 = vld [vmem:[%s3 + $0x14] sm:$0xf]
    %v2080 = vld [vmem:[%s3 + $0x18] sm:$0xf]
    %v2081 = vld [vmem:[%s3 + $0x1c] sm:$0xf]
    %v2082 = vld [vmem:[%s3 + $0x20] sm:$0xf]
    %v2083 = vld [vmem:[%s3 + $0x24] sm:$0xf]
    %v2084 = vld [vmem:[%s3 + $0x28] sm:$0xf]
    %v2085 = vld [vmem:[%s3 + $0x2c] sm:$0xf]
    %v2086 = vld [vmem:[%s3 + $0x30] sm:$0xf]
    %v2087 = vld [vmem:[%s3 + $0x34] sm:$0xf]
    %v2088 = vld [vmem:[%s3 + $0x38] sm:$0xf]
    %v2089 = vld [vmem:[%s3 + $0x3c] sm:$0xf]
    %v2090 = vld [vmem:[%s3 + $0x40] sm:$0xf]
    %v2091 = vld [vmem:[%s3 + $0x44] sm:$0xf]
    %v2092 = vld [vmem:[%s3 + $0x48] sm:$0xf]
    %v2093 = vld [vmem:[%s3 + $0x4c] sm:$0xf]
    %v2094 = vld [vmem:[%s3 + $0x50] sm:$0xf]
    %v2095 = vld [vmem:[%s3 + $0x54] sm:$0xf]
    %v2096 = vld [vmem:[%s3 + $0x58] sm:$0xf]
    %v2097 = vld [vmem:[%s3 + $0x5c] sm:$0xf]
    %v2098 = vld [vmem:[%s3 + $0x60] sm:$0xf]
    %v2099 = vld [vmem:[%s3 + $0x64] sm:$0xf]
    %v2100 = vld [vmem:[%s3 + $0x68] sm:$0xf]
    %v2101 = vld [vmem:[%s3 + $0x6c] sm:$0xf]
    %v2102 = vld [vmem:[%s3 + $0x70] sm:$0xf]
    %v2103 = vld [vmem:[%s3 + $0x74] sm:$0xf]
    %v2104 = vld [vmem:[%s3 + $0x78] sm:$0xf]
    %v2105 = vld [vmem:[%s3 + $0x7c] sm:$0xf]
    %v2106 = vld [vmem:[%s4] sm:$0x1]
    %v2108 = vperm.slane %v2106, 0
    %v2142 = vunpack.c.l.b16 %v2074
    %v2143 = vunpack.c.l.b16 %v2075
    %v2144 = vunpack.c.l.b16 %v2076
    %v2145 = vunpack.c.l.b16 %v2077
    %v2146 = vunpack.c.l.b16 %v2078
    %v2147 = vunpack.c.l.b16 %v2079
    %v2148 = vunpack.c.l.b16 %v2080
    %v2149 = vunpack.c.l.b16 %v2081
    %v2150 = vunpack.c.l.b16 %v2082
    %v2151 = vunpack.c.l.b16 %v2083
    %v2152 = vunpack.c.l.b16 %v2084
    %v2153 = vunpack.c.l.b16 %v2085
    %v2154 = vunpack.c.l.b16 %v2086
    %v2155 = vunpack.c.l.b16 %v2087
    %v2156 = vunpack.c.l.b16 %v2088
    %v2157 = vunpack.c.l.b16 %v2089
    %v2158 = vunpack.c.l.b16 %v2090
    %v2159 = vunpack.c.l.b16 %v2091
    %v2160 = vunpack.c.l.b16 %v2092
    %v2161 = vunpack.c.l.b16 %v2093
    %v2162 = vunpack.c.l.b16 %v2094
    %v2163 = vunpack.c.l.b16 %v2095
    %v2164 = vunpack.c.l.b16 %v2096
    %v2165 = vunpack.c.l.b16 %v2097
    %v2166 = vunpack.c.l.b16 %v2098
    %v2167 = vunpack.c.l.b16 %v2099
    %v2168 = vunpack.c.l.b16 %v2100
    %v2169 = vunpack.c.l.b16 %v2101
    %v2170 = vunpack.c.l.b16 %v2102
    %v2171 = vunpack.c.l.b16 %v2103
    %v2172 = vunpack.c.l.b16 %v2104
    %v2173 = vunpack.c.l.b16 %v2105
    %v2174 = vpack.c.b16 %v2143, %v2142
    %v2175 = vpack.c.b16 %v2145, %v2144
    %v2176 = vpack.c.b16 %v2147, %v2146
    %v2177 = vpack.c.b16 %v2149, %v2148
    %v2178 = vpack.c.b16 %v2151, %v2150
    %v2179 = vpack.c.b16 %v2153, %v2152
    %v2180 = vpack.c.b16 %v2155, %v2154
    %v2181 = vpack.c.b16 %v2157, %v2156
    %v2182 = vpack.c.b16 %v2159, %v2158
    %v2183 = vpack.c.b16 %v2161, %v2160
    %v2184 = vpack.c.b16 %v2163, %v2162
    %v2185 = vpack.c.b16 %v2165, %v2164
    %v2186 = vpack.c.b16 %v2167, %v2166
    %v2187 = vpack.c.b16 %v2169, %v2168
    %v2188 = vpack.c.b16 %v2171, %v2170
    %v2189 = vpack.c.b16 %v2173, %v2172
    %2206 = vmatpush.bf16.msra.mxu0 %v2181
    %2207 = vmatpush.bf16.msra.mxu0 %v2180
    %2208 = vmatpush.bf16.msra.mxu0 %v2179
    %2209 = vmatpush.bf16.msra.mxu0 %v2178
    %2210 = vmatpush.bf16.msra.mxu0 %v2177
    %2211 = vmatpush.bf16.msra.mxu0 %v2176
    %2212 = vmatpush.bf16.msra.mxu0 %v2175
    %2213 = vmatpush.bf16.msra.mxu0 %v2174
    %2214 = vmatmul.bf16.gmra.mxu0 %v2072
    %v2215 = vpop.f32.mrf.mxu0
    %v2216 = vadd.f32 %v2108, %v2215
    %v2217 = vpop.f32.mrf.mxu0
    %2218 = vdwg.mxu0
    %2219 = vmatpush.bf16.msra.mxu0 %v2189
    %2220 = vmatpush.bf16.msra.mxu0 %v2188
    %2221 = vmatpush.bf16.msra.mxu0 %v2187
    %2222 = vmatpush.bf16.msra.mxu0 %v2186
    %2223 = vmatpush.bf16.msra.mxu0 %v2185
    %2224 = vmatpush.bf16.msra.mxu0 %v2184
    %2225 = vmatpush.bf16.msra.mxu0 %v2183
    %2226 = vmatpush.bf16.msra.mxu0 %v2182
    %2227 = vmatmul.bf16.gmra.mxu0 %v2073
    %v2228 = vpop.f32.mrf.mxu0
    %v2229 = vadd.f32 %v2216, %v2228
    %v2230 = vpop.f32.mrf.mxu0
    %2231 = vdwg.mxu0
    %v2232 = vmul.f32 %v2229, 0.5
    %v2233 = vmul.f32 %v2229, 0.044715
    %v2234 = vmul.f32 %v2233, %v2229
    %v2235 = vmul.f32 %v2234, %v2229
    %v2236 = vadd.f32 %v2229, %v2235
    %v2237 = vmul.f32 %v2236, 0.7978846
    %v2238 = vtanh.pop %v2237
    %v2239 = vadd.f32 %v2238, 1.0
    %v2240 = vmul.f32 %v2232, %v2239
    %v2241 = vpack.c.bf16 %v2240, %v2240
    %v2242 = vld [vmem:[#allocation4] sm:$0xf]
    %v2243 = vld [vmem:[#allocation4 + $0x4] sm:$0xf]
    %v2244 = vld [vmem:[#allocation4 + $0x8] sm:$0xf]
    %v2245 = vld [vmem:[#allocation4 + $0xc] sm:$0xf]
    %v2246 = vld [vmem:[#allocation4 + $0x10] sm:$0xf]
    %v2247 = vld [vmem:[#allocation4 + $0x14] sm:$0xf]
    %v2248 = vld [vmem:[#allocation4 + $0x18] sm:$0xf]
    %v2249 = vld [vmem:[#allocation4 + $0x1c] sm:$0xf]
    %v2250 = vld [vmem:[#allocation4 + $0x20] sm:$0xf]
    %v2251 = vld [vmem:[#allocation4 + $0x24] sm:$0xf]
    %v2252 = vld [vmem:[#allocation4 + $0x28] sm:$0xf]
    %v2253 = vld [vmem:[#allocation4 + $0x2c] sm:$0xf]
    %v2254 = vld [vmem:[#allocation4 + $0x30] sm:$0xf]
    %v2255 = vld [vmem:[#allocation4 + $0x34] sm:$0xf]
    %v2256 = vld [vmem:[#allocation4 + $0x38] sm:$0xf]
    %v2257 = vld [vmem:[#allocation4 + $0x3c] sm:$0xf]
    %v2258 = vld [vmem:[%s6] sm:$0x1]
    %v2260 = vperm.slane %v2258, 0
    %v2278 = vunpack.c.l.b16 %v2242
    %v2279 = vunpack.c.l.b16 %v2243
    %v2280 = vunpack.c.l.b16 %v2244
    %v2281 = vunpack.c.l.b16 %v2245
    %v2282 = vunpack.c.l.b16 %v2246
    %v2283 = vunpack.c.l.b16 %v2247
    %v2284 = vunpack.c.l.b16 %v2248
    %v2285 = vunpack.c.l.b16 %v2249
    %v2286 = vunpack.c.l.b16 %v2250
    %v2287 = vunpack.c.l.b16 %v2251
    %v2288 = vunpack.c.l.b16 %v2252
    %v2289 = vunpack.c.l.b16 %v2253
    %v2290 = vunpack.c.l.b16 %v2254
    %v2291 = vunpack.c.l.b16 %v2255
    %v2292 = vunpack.c.l.b16 %v2256
    %v2293 = vunpack.c.l.b16 %v2257
    %v2294 = vpack.c.b16 %v2279, %v2278
    %v2295 = vpack.c.b16 %v2281, %v2280
    %v2296 = vpack.c.b16 %v2283, %v2282
    %v2297 = vpack.c.b16 %v2285, %v2284
    %v2298 = vpack.c.b16 %v2287, %v2286
    %v2299 = vpack.c.b16 %v2289, %v2288
    %v2300 = vpack.c.b16 %v2291, %v2290
    %v2301 = vpack.c.b16 %v2293, %v2292
    %2310 = vmatpush.bf16.msra.mxu0 %v2301
    %2311 = vmatpush.bf16.msra.mxu0 %v2300
    %2312 = vmatpush.bf16.msra.mxu0 %v2299
    %2313 = vmatpush.bf16.msra.mxu0 %v2298
    %2314 = vmatpush.bf16.msra.mxu0 %v2297
    %2315 = vmatpush.bf16.msra.mxu0 %v2296
    %2316 = vmatpush.bf16.msra.mxu0 %v2295
    %2317 = vmatpush.bf16.msra.mxu0 %v2294
    %2318 = vmatmul.bf16.gmra.mxu0 %v2241
    %v2319 = vpop.f32.mrf.mxu0
    %v2320 = vadd.f32 %v2260, %v2319
    %v2321 = vpop.f32.mrf.mxu0
    %2322 = vdwg.mxu0
    %v2323 = vlaneseq
    %v2324 = vand.u32 %v2323, 127
    %v2325 = vsub.f32 0.0, %v2320
    %v2326 = vmul.f32 %v2325, 1.442695
    %v2327 = vpow.pop %v2326
    %v2328 = vadd.f32 %v2327, 1.0
    %v2329 = vrcp.pop %v2328
    %v2330 = vmul.f32 %v2328, %v2329
    %v2331 = vsub.f32 1.0, %v2330
    %v2332 = vmul.f32 %v2329, %v2331
    %v2333 = vadd.f32 %v2329, %v2332
    %vm2334 = vweird.f32 %v2328
    %vm2335 = vweird.f32 %v2329
    %vm2336 = vmor %vm2334, %vm2335
    %v2337 = vsel %vm2336, %v2329, %v2333
    %v2338 = vand.u32 2147483647, %v2328
    %vm2339 = vcmp.eq.f32.partialorder %v2338, 8.507059e+37
    %v2340 = vand.u32 %v2328, 2147483648
    %v2341 = vor.u32 1.1754944e-38, %v2340
    %v2342 = vsel %vm2339, %v2341, %v2337
    %v2343 = vmul.f32 1.0, %v2342
    %v2344 = vmax.f32 %v2320, 0.0
    %v2345 = vand.u32 2147483647, %v2320
    %v2346 = vsub.f32 0.0, %v2345
    %v2347 = vmul.f32 %v2346, 1.442695
    %v2348 = vpow.pop %v2347
    %v2349 = vadd.f32 %v2348, 1.0
    %v2350 = vlog2.pop %v2349
    %v2351 = vmul.f32 %v2350, 0.6931472
    %v2352 = vadd.f32 %v2344, %v2351
    %vm2353 = vcmp.eq.s32.totalorder %v2324, 0
    %vm2354 = vcmp.eq.s32.totalorder %v2324, 24
    %v2355 = vsel %vm2354, %v2352, %v2320
    %v2356 = vsel %vm2353, %v2343, %v2355
    %2357 = vst [vmem:[%s7] sm:$0x3] %v2356
    // Predicated region
    $region38: #{lite_cnn1d_forward.3} parent=1 // pred_check
      _
    $region39: #{lite_cnn1d_forward.3} parent=1 // pred_check_branch
      %2359 = sbr.rel (0) target = $region41
    $region40: #{lite_cnn1d_forward.3} parent=1 // pred_region
      _
    $region41: #{lite_cnn1d_forward.3} parent=1 // pred_fallthru
      _
    // Predicated region
    $region42: #{lite_cnn1d_forward.3} parent=1 // pred_check
      _
    $region43: #{lite_cnn1d_forward.3} parent=1 // pred_check_branch
      %2361 = sbr.rel (0) target = $region45
    $region44: #{lite_cnn1d_forward.3} parent=1 // pred_region
      _
    $region45: #{lite_cnn1d_forward.3} parent=1 // pred_fallthru
      _
    %2362 = vsyncpa [#allocation3], 1
    %2363 = vsyncpa [#allocation5], 1

</llo_original>
